<compile_context>
chip_gen: v6e
topology: v6e:2x2x1
jax: 0.10.0
libtpu: 0.0.40
codegen_flags: <defaults>
</compile_context>

<pallas_src>
import functools
import math

import jax
import jax.numpy as jnp
from jax.experimental import pallas as pl
from jax.experimental.pallas import tpu as pltpu

VMEM = pltpu.MemorySpace.VMEM
SMEM = pltpu.MemorySpace.SMEM


def _round_up(a, b):
    return (a + b - 1) // b * b


def _choose_tile(dim, cap, align):
    """Pick (tile, padded_dim): tile == padded_dim (full dim, always legal) or a
    multiple of `align` that divides padded_dim."""
    if dim <= cap:
        return dim, dim
    t = (cap // align) * align
    while t >= align:
        if dim % t == 0:
            return t, dim
        t -= align
    t = (cap // align) * align
    return t, _round_up(dim, t)


# ----------------------------- Pallas kernels -----------------------------

def _matmul_kernel(*refs, act, has_bias, has_res, has_ln, ln_eps, multi_k):
    it = iter(refs)
    x_ref = next(it)
    w_ref = next(it)
    g_ref = next(it) if has_ln else None
    gb_ref = next(it) if has_ln else None
    b_ref = next(it) if has_bias else None
    r_ref = next(it) if has_res else None
    o_ref = next(it)
    acc_ref = next(it) if multi_k else None

    x = x_ref[...]
    if has_ln:
        # Fused LayerNorm prologue (whole feature dim resides in this K block).
        xf = x.astype(jnp.float32)
        mu = jnp.mean(xf, axis=-1, keepdims=True)
        xc = xf - mu
        var = jnp.mean(xc * xc, axis=-1, keepdims=True)
        x = (xc * jax.lax.rsqrt(var + ln_eps) * g_ref[...]
             + gb_ref[...]).astype(jnp.bfloat16)

    part = jnp.dot(x, w_ref[...], preferred_element_type=jnp.float32)

    def epilogue(y):                       # f32 epilogue math (v5e-safe)
        if has_bias:
            y = y + b_ref[...]
        if act == "quickgelu":             # CLIP ViT MLP: x * sigmoid(1.702 x)
            y = y * jax.nn.sigmoid(1.702 * y)
        elif act == "gelu":
            # TODO(synk): HF BERT uses exact erf GELU; tanh approximation used here.
            y = 0.5 * y * (1.0 + jnp.tanh(0.7978845608028654 *
                                          (y + 0.044715 * y * y * y)))
        elif act == "tanh":                # BERT pooler activation
            y = jnp.tanh(y)
        if has_res:
            y = y + r_ref[...].astype(jnp.float32)   # bf16 residual, upcast here
        return y.astype(o_ref.dtype)

    if multi_k:
        @pl.when(pl.program_id(2) == 0)
        def _():
            acc_ref[...] = jnp.zeros_like(acc_ref)

        acc_ref[...] += part

        @pl.when(pl.program_id(2) == pl.num_programs(2) - 1)
        def _():
            o_ref[...] = epilogue(acc_ref[...])
    else:
        o_ref[...] = epilogue(part)


def matmul(x, w, b=None, act="none", residual=None, ln=None,
           out_dtype=jnp.bfloat16):
    """Tiled bf16-input / f32-accumulate matmul with fused LN / bias / act / residual."""
    m, k = x.shape
    k2, n = w.shape
    assert k == k2
    tm, m_pad = _choose_tile(m, 512, 8)
    tn, n_pad = _choose_tile(n, 512, 128)
    tk, k_pad = _choose_tile(k, 2048, 128)
    multi_k = tk != k_pad
    has_ln = ln is not None
    if has_ln:
        assert not multi_k and k_pad == k, "LN fusion needs whole-K in one block"

    xp = x.astype(jnp.bfloat16)
    wp = w.astype(jnp.bfloat16)
    if (m_pad, k_pad) != (m, k):
        xp = jnp.pad(xp, ((0, m_pad - m), (0, k_pad - k)))
    if (k_pad, n_pad) != (k, n):
        wp = jnp.pad(wp, ((0, k_pad - k), (0, n_pad - n)))

    args = [xp, wp]
    in_specs = [pl.BlockSpec((tm, tk), lambda i, j, kk: (i, kk)),
                pl.BlockSpec((tk, tn), lambda i, j, kk: (kk, j))]
    if has_ln:
        g, beta, _ = ln
        args += [g.astype(jnp.float32).reshape(1, k),
                 beta.astype(jnp.float32).reshape(1, k)]
        in_specs += [pl.BlockSpec((1, tk), lambda i, j, kk: (0, 0)),
                     pl.BlockSpec((1, tk), lambda i, j, kk: (0, 0))]
    has_bias = b is not None
    if has_bias:
        bp = b.astype(jnp.float32).reshape(1, n)
        if n_pad != n:
            bp = jnp.pad(bp, ((0, 0), (0, n_pad - n)))
        args.append(bp)
        in_specs.append(pl.BlockSpec((1, tn), lambda i, j, kk: (0, j)))
    has_res = residual is not None
    if has_res:
        rp = residual.astype(jnp.bfloat16)
        if (m_pad, n_pad) != (m, n):
            rp = jnp.pad(rp, ((0, m_pad - m), (0, n_pad - n)))
        args.append(rp)
        in_specs.append(pl.BlockSpec((tm, tn), lambda i, j, kk: (i, j)))

    grid = (m_pad // tm, n_pad // tn, k_pad // tk)
    scratch = [pltpu.VMEM((tm, tn), jnp.float32)] if multi_k else []
    flops = 2 * m_pad * n_pad * k_pad
    out_bytes = 2 if out_dtype == jnp.bfloat16 else 4
    bytes_accessed = (m_pad * k_pad * 2 * (n_pad // tn)
                      + k_pad * n_pad * 2 * (m_pad // tm)
                      + m_pad * n_pad * out_bytes)

    out = pl.pallas_call(
        functools.partial(_matmul_kernel, act=act, has_bias=has_bias,
                          has_res=has_res, has_ln=has_ln,
                          ln_eps=(ln[2] if has_ln else 0.0), multi_k=multi_k),
        out_shape=jax.ShapeDtypeStruct((m_pad, n_pad), out_dtype),
        grid_spec=pltpu.PrefetchScalarGridSpec(
            num_scalar_prefetch=0, grid=grid,
            in_specs=in_specs,
            out_specs=pl.BlockSpec((tm, tn), lambda i, j, kk: (i, j)),
            scratch_shapes=scratch),
        compiler_params=pltpu.CompilerParams(
            dimension_semantics=("parallel", "parallel", "arbitrary"),
            vmem_limit_bytes=64 * 1024 * 1024),
        cost_estimate=pl.CostEstimate(flops=flops, transcendentals=0,
                                      bytes_accessed=bytes_accessed),
    )(*args)
    if (m_pad, n_pad) != (m, n):
        out = out[:m, :n]
    return out


def _layernorm_kernel(x_ref, g_ref, b_ref, o_ref, *, eps):
    x = x_ref[...].astype(jnp.float32)
    mu = jnp.mean(x, axis=-1, keepdims=True)
    xc = x - mu
    var = jnp.mean(xc * xc, axis=-1, keepdims=True)
    y = xc * jax.lax.rsqrt(var + eps) * g_ref[...] + b_ref[...]
    o_ref[...] = y.astype(o_ref.dtype)


def layernorm(x, g, b, eps=1e-5, out_dtype=jnp.bfloat16):
    """Row-tiled LayerNorm: bf16 in/out, f32 math inside."""
    m, d = x.shape
    tl, m_pad = _choose_tile(m, 512, 8)
    xp = x.astype(jnp.bfloat16)
    if m_pad != m:
        xp = jnp.pad(xp, ((0, m_pad - m), (0, 0)))
    out = pl.pallas_call(
        functools.partial(_layernorm_kernel, eps=eps),
        out_shape=jax.ShapeDtypeStruct((m_pad, d), out_dtype),
        grid_spec=pltpu.PrefetchScalarGridSpec(
            num_scalar_prefetch=0, grid=(m_pad // tl,),
            in_specs=[pl.BlockSpec((tl, d), lambda i: (i, 0)),
                      pl.BlockSpec((1, d), lambda i: (0, 0)),
                      pl.BlockSpec((1, d), lambda i: (0, 0))],
            out_specs=pl.BlockSpec((tl, d), lambda i: (i, 0))),
        compiler_params=pltpu.CompilerParams(dimension_semantics=("parallel",)),
    )(xp, g.astype(jnp.float32).reshape(1, d), b.astype(jnp.float32).reshape(1, d))
    return out[:m] if m_pad != m else out


def _mhsa_kernel(qkv_ref, mask_ref, o_ref, *, heads, dh, scale):
    """Whole-KV multi-head self-attention for one batch element.

    qkv_ref: (S, 3*d) bf16 packed [Q | K | V], mask_ref: (1, S) additive f32,
    o_ref: (S, d) bf16.  The per-head "transpose" is a static VMEM column slice.
    """
    d = heads * dh
    mask = mask_ref[...]                                  # (1, S) broadcast over rows
    for hi in range(heads):
        q = (qkv_ref[:, hi * dh:(hi + 1) * dh].astype(jnp.float32)
             * scale).astype(jnp.bfloat16)                # scale Q once (dh wide)
        k = qkv_ref[:, d + hi * dh:d + (hi + 1) * dh]
        v = qkv_ref[:, 2 * d + hi * dh:2 * d + (hi + 1) * dh]
        s = jax.lax.dot_general(q, k, (((1,), (1,)), ((), ())),
                                preferred_element_type=jnp.float32)
        s = s + mask
        m = jnp.max(s, axis=-1, keepdims=True)
        p = jnp.exp(s - m)                                # single-pass softmax (nk == 1)
        l = jnp.sum(p, axis=-1, keepdims=True)            # >= 1, never zero
        o = jnp.dot(p.astype(jnp.bfloat16), v, preferred_element_type=jnp.float32)
        o_ref[:, hi * dh:(hi + 1) * dh] = (o / l).astype(o_ref.dtype)


def mhsa(qkv, mask_add, heads, scale):
    """qkv: (b, s_pad, 3*d) bf16; mask_add: (bm, 1, s_pad) additive f32, bm in {1, b}."""
    b, s_pad, d3 = qkv.shape
    d = d3 // 3
    dh = d // heads
    bm = mask_add.shape[0]
    return pl.pallas_call(
        functools.partial(_mhsa_kernel, heads=heads, dh=dh, scale=scale),
        out_shape=jax.ShapeDtypeStruct((b, s_pad, d), jnp.bfloat16),
        grid_spec=pltpu.PrefetchScalarGridSpec(
            num_scalar_prefetch=0, grid=(b,),
            in_specs=[pl.BlockSpec((None, s_pad, d3), lambda bi: (bi, 0, 0)),
                      pl.BlockSpec((None, 1, s_pad),
                                   lambda bi: (bi if bm > 1 else 0, 0, 0))],
            out_specs=pl.BlockSpec((None, s_pad, d), lambda bi: (bi, 0, 0))),
        compiler_params=pltpu.CompilerParams(dimension_semantics=("parallel",)),
    )(qkv, mask_add)


def _clip_logits_kernel(img_ref, txt_ref, ls_ref, li_ref):
    img = img_ref[...]
    txt = txt_ref[...]
    img = img * jax.lax.rsqrt(jnp.sum(img * img, axis=-1, keepdims=True))
    txt = txt * jax.lax.rsqrt(jnp.sum(txt * txt, axis=-1, keepdims=True))
    scale = jnp.exp(ls_ref[0, 0])
    li_ref[...] = scale * jax.lax.dot_general(
        img, txt, (((1,), (1,)), ((), ())), preferred_element_type=jnp.float32)


def clip_logits(img_feat, txt_feat, logit_scale):
    bi, bt = img_feat.shape[0], txt_feat.shape[0]
    return pl.pallas_call(
        _clip_logits_kernel,
        out_shape=jax.ShapeDtypeStruct((bi, bt), jnp.float32),
        in_specs=[pl.BlockSpec(memory_space=VMEM),
                  pl.BlockSpec(memory_space=VMEM),
                  pl.BlockSpec(memory_space=SMEM)],
        out_specs=pl.BlockSpec(memory_space=VMEM),
    )(img_feat.astype(jnp.float32), txt_feat.astype(jnp.float32),
      logit_scale.reshape(1, 1).astype(jnp.float32))


# ----------------------------- model glue ---------------------------------

def make_kv_mask(valid, s, s_pad):
    """valid: (bm, s) with 1=keep / 0=masked -> additive (bm, 1, s_pad) f32 mask."""
    valid = jnp.pad(valid.astype(jnp.float32), ((0, 0), (0, s_pad - s)))
    return ((1.0 - valid) * (-1e9)).reshape(valid.shape[0], 1, s_pad)


def attention_block(x2d, p_attn, b, s_pad, heads, mask_add, ln=None):
    """Fused-QKV projection (optional fused pre-LN), whole-KV attention,
    out-projection with fused residual.  No XLA transposes: reshapes are layout-only."""
    d = x2d.shape[1]
    dh = d // heads
    qkv = matmul(x2d, p_attn["w_qkv"], p_attn["b_qkv"], ln=ln)      # (b*s_pad, 3d) bf16
    o = mhsa(qkv.reshape(b, s_pad, 3 * d), mask_add, heads, 1.0 / math.sqrt(dh))
    return matmul(o.reshape(b * s_pad, d), p_attn["wo"], p_attn["bo"],
                  residual=x2d)


def encode_image(image, p, cfg):
    b, c, hw, _ = image.shape
    P = cfg["vision_patch_size"]
    W = cfg["vision_width"]
    g = hw // P
    # Conv2d(3, W, kernel=P, stride=P, bias=False) == patch extraction + matmul
    patches = image.reshape(b, c, g, P, g, P).transpose(0, 2, 4, 1, 3, 5)
    patches = patches.reshape(b * g * g, c * P * P)
    xp = matmul(patches, p["conv_w"], out_dtype=jnp.float32).reshape(b, g * g, W)
    cls = jnp.broadcast_to(p["class_emb"].reshape(1, 1, W), (b, 1, W))
    x = jnp.concatenate([cls, xp], axis=1) + p["pos_emb"][None]     # (b, s, W) f32
    s = g * g + 1
    s_pad = _round_up(s, 8)
    heads = max(1, W // 64)
    mask_add = make_kv_mask(jnp.ones((1, s), jnp.float32), s, s_pad)
    # pad the sequence dim ONCE per tower; everything downstream stays bf16.
    x = jnp.pad(x, ((0, 0), (0, s_pad - s), (0, 0))).astype(jnp.bfloat16)
    x2d = layernorm(x.reshape(b * s_pad, W), p["ln_pre_g"], p["ln_pre_b"])
    for blk in p["blocks"]:
        # x = x + attn(ln_1(x));  LN fused into the QKV matmul prologue.
        x2d = attention_block(x2d, blk["attn"], b, s_pad, heads, mask_add,
                              ln=(blk["ln1_g"], blk["ln1_b"], 1e-5))
        # x = x + mlp(ln_2(x));  LN fused into the MLP-up matmul prologue.
        hm = matmul(x2d, blk["mlp_w1"], blk["mlp_b1"], act="quickgelu",
                    ln=(blk["ln2_g"], blk["ln2_b"], 1e-5))
        x2d = matmul(hm, blk["mlp_w2"], blk["mlp_b2"], residual=x2d)
    cls_tok = x2d.reshape(b, s_pad, W)[:, 0, :]
    # ln_post fused into the output projection (no bias).
    return matmul(cls_tok, p["proj"], ln=(p["ln_post_g"], p["ln_post_b"], 1e-5),
                  out_dtype=jnp.float32)


def encode_text(input_ids, attention_mask, token_type_ids, p, cfg):
    # TODO(synk): BertTokenizer has no Pallas equivalent; inputs are pre-tokenized ids.
    b, s = input_ids.shape
    H = cfg["bert_hidden"]
    heads = cfg["bert_heads"]
    s_pad = _round_up(s, 8)
    emb = (jnp.take(p["word_emb"], input_ids, axis=0)
           + p["pos_emb"][:s][None]
           + jnp.take(p["type_emb"], token_type_ids, axis=0))       # (b, s, H) f32
    emb = jnp.pad(emb, ((0, 0), (0, s_pad - s), (0, 0))).astype(jnp.bfloat16)
    x2d = layernorm(emb.reshape(b * s_pad, H), p["emb_ln_g"], p["emb_ln_b"],
                    eps=1e-12)
    mask_add = make_kv_mask(attention_mask, s, s_pad)                # (b, 1, s_pad)
    for layer in p["layers"]:
        a2d = attention_block(x2d, layer["attn"], b, s_pad, heads, mask_add)
        x2d = layernorm(a2d, layer["ln1_g"], layer["ln1_b"], eps=1e-12)  # post-LN BERT
        i2d = matmul(x2d, layer["w_i"], layer["b_i"], act="gelu")
        o2d = matmul(i2d, layer["w_o"], layer["b_o"], residual=x2d)
        x2d = layernorm(o2d, layer["ln2_g"], layer["ln2_b"], eps=1e-12)
    cls_tok = x2d.reshape(b, s_pad, H)[:, 0, :]
    pooled = matmul(cls_tok, p["pooler_w"], p["pooler_b"], act="tanh")   # BERT pooler
    # CLIP ln_final fused into text_projection (no bias).
    return matmul(pooled, p["text_proj"],
                  ln=(p["ln_final_g"], p["ln_final_b"], 1e-5),
                  out_dtype=jnp.float32)


def clip_forward(image, input_ids, attention_mask, token_type_ids, params, cfg):
    image_features = encode_image(image, params["visual"], cfg)
    text_features = encode_text(input_ids, attention_mask, token_type_ids,
                                params["text"], cfg)
    logits_per_image = clip_logits(image_features, text_features,
                                   params["logit_scale"])
    logits_per_text = logits_per_image.T      # matches PyTorch: logits_per_image.t()
    return logits_per_image, logits_per_text


# ----------------------------- parameter init ------------------------------

class KeyGen:
    def __init__(self, key):
        self.key = key

    def __call__(self):
        self.key, sub = jax.random.split(self.key)
        return sub


def _normal(key, shape, std=0.02, dtype=jnp.bfloat16):
    return (std * jax.random.normal(key, shape, dtype=jnp.float32)).astype(dtype)


def init_params(kg, cfg):
    W = cfg["vision_width"]
    E = cfg["embed_dim"]
    P = cfg["vision_patch_size"]
    H = cfg["bert_hidden"]
    f32 = jnp.float32

    def attn_params(d):
        return dict(
            w_qkv=_normal(kg(), (d, 3 * d)), b_qkv=jnp.zeros((3 * d,), f32),
            wo=_normal(kg(), (d, d)), bo=jnp.zeros((d,), f32),
        )

    def ln(d):
        return jnp.ones((d,), f32), jnp.zeros((d,), f32)

    vit_blocks = []
    for _ in range(cfg["vision_layers"]):
        ln1_g, ln1_b = ln(W)
        ln2_g, ln2_b = ln(W)
        vit_blocks.append(dict(
            ln1_g=ln1_g, ln1_b=ln1_b, attn=attn_params(W),
            ln2_g=ln2_g, ln2_b=ln2_b,
            mlp_w1=_normal(kg(), (W, 4 * W)), mlp_b1=jnp.zeros((4 * W,), f32),
            mlp_w2=_normal(kg(), (4 * W, W)), mlp_b2=jnp.zeros((W,), f32),
        ))
    ln_pre_g, ln_pre_b = ln(W)
    ln_post_g, ln_post_b = ln(W)
    g = cfg["input_resolution"] // P
    visual = dict(
        conv_w=_normal(kg(), (3 * P * P, W)),   # flattened Conv2d weight (transposed)
        class_emb=_normal(kg(), (W,), dtype=f32),
        pos_emb=_normal(kg(), (g * g + 1, W), dtype=f32),
        ln_pre_g=ln_pre_g, ln_pre_b=ln_pre_b,
        blocks=vit_blocks,
        ln_post_g=ln_post_g, ln_post_b=ln_post_b,
        proj=_normal(kg(), (W, E), std=W ** -0.5),
    )

    bert_layers = []
    for _ in range(cfg["bert_layers"]):
        ln1_g, ln1_b = ln(H)
        ln2_g, ln2_b = ln(H)
        bert_layers.append(dict(
            attn=attn_params(H),
            ln1_g=ln1_g, ln1_b=ln1_b,
            w_i=_normal(kg(), (H, cfg["bert_intermediate"])),
            b_i=jnp.zeros((cfg["bert_intermediate"],), f32),
            w_o=_normal(kg(), (cfg["bert_intermediate"], H)),
            b_o=jnp.zeros((H,), f32),
            ln2_g=ln2_g, ln2_b=ln2_b,
        ))
    emb_ln_g, emb_ln_b = ln(H)
    ln_final_g, ln_final_b = ln(H)
    text = dict(
        word_emb=_normal(kg(), (cfg["vocab_size"], H), dtype=f32),
        pos_emb=_normal(kg(), (cfg["max_position"], H), dtype=f32),
        type_emb=_normal(kg(), (cfg["type_vocab"], H), dtype=f32),
        emb_ln_g=emb_ln_g, emb_ln_b=emb_ln_b,
        layers=bert_layers,
        pooler_w=_normal(kg(), (H, H)), pooler_b=jnp.zeros((H,), f32),
        ln_final_g=ln_final_g, ln_final_b=ln_final_b,
        text_proj=_normal(kg(), (H, E), std=H ** -0.5),
    )
    return dict(visual=visual, text=text,
                logit_scale=jnp.array(math.log(1.0 / 0.07), f32))


# ----------------------------- main ----------------------------------------

if __name__ == "__main__":
    cfg = dict(
        embed_dim=32, input_resolution=32, vision_layers=2, vision_width=64,
        vision_patch_size=16, bert_hidden=32, bert_layers=2, bert_heads=2,
        bert_intermediate=64, vocab_size=100, max_position=16, type_vocab=2,
    )
    kg = KeyGen(jax.random.PRNGKey(0))
    params = init_params(kg, cfg)

    batch, seq = 2, 8
    image = jax.random.normal(
        kg(), (batch, 3, cfg["input_resolution"], cfg["input_resolution"]), jnp.float32)
    input_ids = jax.random.randint(kg(), (batch, seq), 0, cfg["vocab_size"])
    token_type_ids = jnp.zeros((batch, seq), jnp.int32)
    attention_mask = jnp.ones((batch, seq), jnp.int32).at[1, -2:].set(0)

    fwd = jax.jit(lambda img, ids, am, tt, prm: clip_forward(img, ids, am, tt, prm, cfg))
    logits_per_image, logits_per_text = fwd(
        image, input_ids, attention_mask, token_type_ids, params)
    jax.block_until_ready((logits_per_image, logits_per_text))

    assert logits_per_image.shape == (batch, batch)
    assert logits_per_text.shape == (batch, batch)
    assert bool(jnp.all(jnp.isfinite(logits_per_image)))
    assert bool(jnp.all(jnp.isfinite(logits_per_text)))
    print("KERNEL_OK")
</pallas_src>

<mosaic_0001>
module attributes {stable_mosaic.version = 11 : i64} {
  func.func @_matmul_kernel(%arg0: i32, %arg1: i32, %arg2: i32, %arg3: memref<8x768xbf16, #tpu.memory_space<vmem>>, %arg4: memref<768x64xbf16, #tpu.memory_space<vmem>>, %arg5: memref<8x64xf32, #tpu.memory_space<vmem>>) attributes {dimension_semantics = [#tpu.dimension_semantics<parallel>, #tpu.dimension_semantics<parallel>, #tpu.dimension_semantics<arbitrary>], iteration_bounds = array<i64: 1, 1, 1>, scalar_prefetch = 0 : i64, scratch_operands = 0 : i64, tpu.core_type = #tpu.core_type<tc>, window_params = [{transform_indices = @transform_0, window_bounds = array<i64: 8, 768>}, {transform_indices = @transform_1, window_bounds = array<i64: 768, 64>}, {transform_indices = @transform_2, window_bounds = array<i64: 8, 64>}]} {
    %c0 = arith.constant 0 : index
    %c0_0 = arith.constant 0 : index
    %0 = vector.load %arg3[%c0, %c0_0] : memref<8x768xbf16, #tpu.memory_space<vmem>>, vector<8x768xbf16>
    %c0_1 = arith.constant 0 : index
    %c0_2 = arith.constant 0 : index
    %1 = vector.load %arg4[%c0_1, %c0_2] : memref<768x64xbf16, #tpu.memory_space<vmem>>, vector<768x64xbf16>
    %cst = arith.constant dense<0.000000e+00> : vector<8x64xf32>
    %2 = tpu.matmul %0, %1, %cst {dimension_numbers = #tpu.dot_dimension_numbers<[1], [0], [0], [1], [0, 0, 1, 1], [], []>} : vector<8x768xbf16>, vector<768x64xbf16>, vector<8x64xf32> -> vector<8x64xf32>
    %c0_3 = arith.constant 0 : index
    %c0_4 = arith.constant 0 : index
    %3 = vector.load %arg5[%c0_3, %c0_4] : memref<8x64xf32, #tpu.memory_space<vmem>>, vector<8x64xf32>
    tpu.vector_store %arg5[%c0_3, %c0_4], %2 {strides = array<i32>} : memref<8x64xf32, #tpu.memory_space<vmem>>, vector<8x64xf32>,
    return
  }
  func.func @transform_0(%arg0: i32, %arg1: i32, %arg2: i32) -> (i32, i32) {
    %c0_i32 = arith.constant 0 : i32
    return %arg0, %arg2 : i32, i32
  }
  func.func @transform_1(%arg0: i32, %arg1: i32, %arg2: i32) -> (i32, i32) {
    %c0_i32 = arith.constant 0 : i32
    return %arg2, %arg1 : i32, i32
  }
  func.func @transform_2(%arg0: i32, %arg1: i32, %arg2: i32) -> (i32, i32) {
    %c0_i32 = arith.constant 0 : i32
    return %arg0, %arg1 : i32, i32
  }
}

module attributes {stable_mosaic.version = 11 : i64} {
  func.func @_matmul_kernel(%arg0: i32, %arg1: i32, %arg2: i32, %arg3: memref<16x64xbf16, #tpu.memory_space<vmem>>, %arg4: memref<64x192xbf16, #tpu.memory_space<vmem>>, %arg5: memref<1x64xf32, #tpu.memory_space<vmem>>, %arg6: memref<1x64xf32, #tpu.memory_space<vmem>>, %arg7: memref<1x192xf32, #tpu.memory_space<vmem>>, %arg8: memref<16x192xbf16, #tpu.memory_space<vmem>>) attributes {dimension_semantics = [#tpu.dimension_semantics<parallel>, #tpu.dimension_semantics<parallel>, #tpu.dimension_semantics<arbitrary>], iteration_bounds = array<i64: 1, 1, 1>, scalar_prefetch = 0 : i64, scratch_operands = 0 : i64, tpu.core_type = #tpu.core_type<tc>, window_params = [{transform_indices = @transform_0, window_bounds = array<i64: 16, 64>}, {transform_indices = @transform_1, window_bounds = array<i64: 64, 192>}, {pipeline_mode = #tpu.pipeline_mode<synchronous>, transform_indices = @transform_2, window_bounds = array<i64: 1, 64>}, {pipeline_mode = #tpu.pipeline_mode<synchronous>, transform_indices = @transform_3, window_bounds = array<i64: 1, 64>}, {transform_indices = @transform_4, window_bounds = array<i64: 1, 192>}, {transform_indices = @transform_5, window_bounds = array<i64: 16, 192>}]} {
    %c0 = arith.constant 0 : index
    %c0_0 = arith.constant 0 : index
    %0 = vector.load %arg3[%c0, %c0_0] : memref<16x64xbf16, #tpu.memory_space<vmem>>, vector<16x64xbf16>
    %1 = arith.extf %0 : vector<16x64xbf16> to vector<16x64xf32>
    %cst = arith.constant dense<0.000000e+00> : vector<16xf32>
    %2 = vector.multi_reduction <add>, %1, %cst [1] : vector<16x64xf32> to vector<16xf32>
    %3 = vector.shape_cast %2 : vector<16xf32> to vector<16x1xf32>
    %cst_1 = arith.constant 6.400000e+01 : f32
    %4 = vector.broadcast %cst_1 : f32 to vector<16x1xf32>
    %5 = arith.divf %3, %4 : vector<16x1xf32>
    %6 = vector.broadcast %5 : vector<16x1xf32> to vector<16x64xf32>
    %7 = arith.subf %1, %6 : vector<16x64xf32>
    %8 = arith.mulf %7, %7 : vector<16x64xf32>
    %cst_2 = arith.constant dense<0.000000e+00> : vector<16xf32>
    %9 = vector.multi_reduction <add>, %8, %cst_2 [1] : vector<16x64xf32> to vector<16xf32>
    %10 = vector.shape_cast %9 : vector<16xf32> to vector<16x1xf32>
    %cst_3 = arith.constant 6.400000e+01 : f32
    %11 = vector.broadcast %cst_3 : f32 to vector<16x1xf32>
    %12 = arith.divf %10, %11 : vector<16x1xf32>
    %cst_4 = arith.constant 9.99999974E-6 : f32
    %13 = vector.broadcast %cst_4 : f32 to vector<16x1xf32>
    %14 = arith.addf %12, %13 : vector<16x1xf32>
    %15 = math.rsqrt %14 : vector<16x1xf32>
    %16 = vector.broadcast %15 : vector<16x1xf32> to vector<16x64xf32>
    %17 = arith.mulf %7, %16 : vector<16x64xf32>
    %c0_5 = arith.constant 0 : index
    %c0_6 = arith.constant 0 : index
    %18 = vector.load %arg5[%c0_5, %c0_6] : memref<1x64xf32, #tpu.memory_space<vmem>>, vector<1x64xf32>
    %19 = vector.broadcast %18 : vector<1x64xf32> to vector<16x64xf32>
    %20 = arith.mulf %17, %19 : vector<16x64xf32>
    %c0_7 = arith.constant 0 : index
    %c0_8 = arith.constant 0 : index
    %21 = vector.load %arg6[%c0_7, %c0_8] : memref<1x64xf32, #tpu.memory_space<vmem>>, vector<1x64xf32>
    %22 = vector.broadcast %21 : vector<1x64xf32> to vector<16x64xf32>
    %23 = arith.addf %20, %22 : vector<16x64xf32>
    %24 = arith.truncf %23 : vector<16x64xf32> to vector<16x64xbf16>
    %c0_9 = arith.constant 0 : index
    %c0_10 = arith.constant 0 : index
    %25 = vector.load %arg4[%c0_9, %c0_10] : memref<64x192xbf16, #tpu.memory_space<vmem>>, vector<64x192xbf16>
    %cst_11 = arith.constant dense<0.000000e+00> : vector<16x192xf32>
    %26 = tpu.matmul %24, %25, %cst_11 {dimension_numbers = #tpu.dot_dimension_numbers<[1], [0], [0], [1], [0, 0, 1, 1], [], []>} : vector<16x64xbf16>, vector<64x192xbf16>, vector<16x192xf32> -> vector<16x192xf32>
    %c0_12 = arith.constant 0 : index
    %c0_13 = arith.constant 0 : index
    %27 = vector.load %arg7[%c0_12, %c0_13] : memref<1x192xf32, #tpu.memory_space<vmem>>, vector<1x192xf32>
    %28 = vector.broadcast %27 : vector<1x192xf32> to vector<16x192xf32>
    %29 = arith.addf %26, %28 : vector<16x192xf32>
    %30 = arith.truncf %29 : vector<16x192xf32> to vector<16x192xbf16>
    %c0_14 = arith.constant 0 : index
    %c0_15 = arith.constant 0 : index
    %31 = vector.load %arg8[%c0_14, %c0_15] : memref<16x192xbf16, #tpu.memory_space<vmem>>, vector<16x192xbf16>
    tpu.vector_store %arg8[%c0_14, %c0_15], %30 {strides = array<i32>} : memref<16x192xbf16, #tpu.memory_space<vmem>>, vector<16x192xbf16>,
    return
  }
  func.func @transform_0(%arg0: i32, %arg1: i32, %arg2: i32) -> (i32, i32) {
    %c0_i32 = arith.constant 0 : i32
    return %arg0, %arg2 : i32, i32
  }
  func.func @transform_1(%arg0: i32, %arg1: i32, %arg2: i32) -> (i32, i32) {
    %c0_i32 = arith.constant 0 : i32
    return %arg2, %arg1 : i32, i32
  }
  func.func @transform_2(%arg0: i32, %arg1: i32, %arg2: i32) -> (i32, i32) {
    %c0_i32 = arith.constant 0 : i32
    %c0_i32_0 = arith.constant 0 : i32
    %c0_i32_1 = arith.constant 0 : i32
    return %c0_i32, %c0_i32_0 : i32, i32
  }
  func.func @transform_3(%arg0: i32, %arg1: i32, %arg2: i32) -> (i32, i32) {
    %c0_i32 = arith.constant 0 : i32
    %c0_i32_0 = arith.constant 0 : i32
    %c0_i32_1 = arith.constant 0 : i32
    return %c0_i32, %c0_i32_0 : i32, i32
  }
  func.func @transform_4(%arg0: i32, %arg1: i32, %arg2: i32) -> (i32, i32) {
    %c0_i32 = arith.constant 0 : i32
    %c0_i32_0 = arith.constant 0 : i32
    return %c0_i32, %arg1 : i32, i32
  }
  func.func @transform_5(%arg0: i32, %arg1: i32, %arg2: i32) -> (i32, i32) {
    %c0_i32 = arith.constant 0 : i32
    return %arg0, %arg1 : i32, i32
  }
}

module attributes {stable_mosaic.version = 11 : i64} {
  func.func @_layernorm_kernel(%arg0: i32, %arg1: memref<16x64xbf16, #tpu.memory_space<vmem>>, %arg2: memref<1x64xf32, #tpu.memory_space<vmem>>, %arg3: memref<1x64xf32, #tpu.memory_space<vmem>>, %arg4: memref<16x64xbf16, #tpu.memory_space<vmem>>) attributes {dimension_semantics = [#tpu.dimension_semantics<parallel>], iteration_bounds = array<i64: 1>, scalar_prefetch = 0 : i64, scratch_operands = 0 : i64, tpu.core_type = #tpu.core_type<tc>, window_params = [{transform_indices = @transform_0, window_bounds = array<i64: 16, 64>}, {pipeline_mode = #tpu.pipeline_mode<synchronous>, transform_indices = @transform_1, window_bounds = array<i64: 1, 64>}, {pipeline_mode = #tpu.pipeline_mode<synchronous>, transform_indices = @transform_2, window_bounds = array<i64: 1, 64>}, {transform_indices = @transform_3, window_bounds = array<i64: 16, 64>}]} {
    %c0 = arith.constant 0 : index
    %c0_0 = arith.constant 0 : index
    %0 = vector.load %arg1[%c0, %c0_0] : memref<16x64xbf16, #tpu.memory_space<vmem>>, vector<16x64xbf16>
    %1 = arith.extf %0 : vector<16x64xbf16> to vector<16x64xf32>
    %cst = arith.constant dense<0.000000e+00> : vector<16xf32>
    %2 = vector.multi_reduction <add>, %1, %cst [1] : vector<16x64xf32> to vector<16xf32>
    %3 = vector.shape_cast %2 : vector<16xf32> to vector<16x1xf32>
    %cst_1 = arith.constant 6.400000e+01 : f32
    %4 = vector.broadcast %cst_1 : f32 to vector<16x1xf32>
    %5 = arith.divf %3, %4 : vector<16x1xf32>
    %6 = vector.broadcast %5 : vector<16x1xf32> to vector<16x64xf32>
    %7 = arith.subf %1, %6 : vector<16x64xf32>
    %8 = arith.mulf %7, %7 : vector<16x64xf32>
    %cst_2 = arith.constant dense<0.000000e+00> : vector<16xf32>
    %9 = vector.multi_reduction <add>, %8, %cst_2 [1] : vector<16x64xf32> to vector<16xf32>
    %10 = vector.shape_cast %9 : vector<16xf32> to vector<16x1xf32>
    %cst_3 = arith.constant 6.400000e+01 : f32
    %11 = vector.broadcast %cst_3 : f32 to vector<16x1xf32>
    %12 = arith.divf %10, %11 : vector<16x1xf32>
    %cst_4 = arith.constant 9.99999974E-6 : f32
    %13 = vector.broadcast %cst_4 : f32 to vector<16x1xf32>
    %14 = arith.addf %12, %13 : vector<16x1xf32>
    %15 = math.rsqrt %14 : vector<16x1xf32>
    %16 = vector.broadcast %15 : vector<16x1xf32> to vector<16x64xf32>
    %17 = arith.mulf %7, %16 : vector<16x64xf32>
    %c0_5 = arith.constant 0 : index
    %c0_6 = arith.constant 0 : index
    %18 = vector.load %arg2[%c0_5, %c0_6] : memref<1x64xf32, #tpu.memory_space<vmem>>, vector<1x64xf32>
    %19 = vector.broadcast %18 : vector<1x64xf32> to vector<16x64xf32>
    %20 = arith.mulf %17, %19 : vector<16x64xf32>
    %c0_7 = arith.constant 0 : index
    %c0_8 = arith.constant 0 : index
    %21 = vector.load %arg3[%c0_7, %c0_8] : memref<1x64xf32, #tpu.memory_space<vmem>>, vector<1x64xf32>
    %22 = vector.broadcast %21 : vector<1x64xf32> to vector<16x64xf32>
    %23 = arith.addf %20, %22 : vector<16x64xf32>
    %24 = arith.truncf %23 : vector<16x64xf32> to vector<16x64xbf16>
    %c0_9 = arith.constant 0 : index
    %c0_10 = arith.constant 0 : index
    %25 = vector.load %arg4[%c0_9, %c0_10] : memref<16x64xbf16, #tpu.memory_space<vmem>>, vector<16x64xbf16>
    tpu.vector_store %arg4[%c0_9, %c0_10], %24 {strides = array<i32>} : memref<16x64xbf16, #tpu.memory_space<vmem>>, vector<16x64xbf16>,
    return
  }
  func.func @transform_0(%arg0: i32) -> (i32, i32) {
    %c0_i32 = arith.constant 0 : i32
    %c0_i32_0 = arith.constant 0 : i32
    return %arg0, %c0_i32 : i32, i32
  }
  func.func @transform_1(%arg0: i32) -> (i32, i32) {
    %c0_i32 = arith.constant 0 : i32
    %c0_i32_0 = arith.constant 0 : i32
    %c0_i32_1 = arith.constant 0 : i32
    return %c0_i32, %c0_i32_0 : i32, i32
  }
  func.func @transform_2(%arg0: i32) -> (i32, i32) {
    %c0_i32 = arith.constant 0 : i32
    %c0_i32_0 = arith.constant 0 : i32
    %c0_i32_1 = arith.constant 0 : i32
    return %c0_i32, %c0_i32_0 : i32, i32
  }
  func.func @transform_3(%arg0: i32) -> (i32, i32) {
    %c0_i32 = arith.constant 0 : i32
    %c0_i32_0 = arith.constant 0 : i32
    return %arg0, %c0_i32 : i32, i32
  }
}

module attributes {stable_mosaic.version = 11 : i64} {
  func.func @_mhsa_kernel(%arg0: i32, %arg1: memref<1x8x192xbf16, #tpu.memory_space<vmem>>, %arg2: memref<1x1x8xf32, #tpu.memory_space<vmem>>, %arg3: memref<1x8x64xbf16, #tpu.memory_space<vmem>>) attributes {dimension_semantics = [#tpu.dimension_semantics<parallel>], iteration_bounds = array<i64: 2>, scalar_prefetch = 0 : i64, scratch_operands = 0 : i64, tpu.core_type = #tpu.core_type<tc>, window_params = [{transform_indices = @transform_0, window_bounds = array<i64: 1, 8, 192>}, {pipeline_mode = #tpu.pipeline_mode<synchronous>, transform_indices = @transform_1, window_bounds = array<i64: 1, 1, 8>}, {transform_indices = @transform_2, window_bounds = array<i64: 1, 8, 64>}]} {
    %c0 = arith.constant 0 : index
    %c0_0 = arith.constant 0 : index
    %c0_1 = arith.constant 0 : index
    %0 = vector.load %arg2[%c0, %c0_0, %c0_1] : memref<1x1x8xf32, #tpu.memory_space<vmem>>, vector<1x1x8xf32>
    %1 = vector.shape_cast %0 : vector<1x1x8xf32> to vector<1x8xf32>
    %c0_2 = arith.constant 0 : index
    %c0_3 = arith.constant 0 : index
    %c0_4 = arith.constant 0 : index
    %2 = vector.load %arg1[%c0_2, %c0_3, %c0_4] : memref<1x8x192xbf16, #tpu.memory_space<vmem>>, vector<1x8x64xbf16>
    %3 = vector.shape_cast %2 : vector<1x8x64xbf16> to vector<8x64xbf16>
    %4 = arith.extf %3 : vector<8x64xbf16> to vector<8x64xf32>
    %cst = arith.constant 1.250000e-01 : f32
    %5 = vector.broadcast %cst : f32 to vector<8x64xf32>
    %6 = arith.mulf %4, %5 : vector<8x64xf32>
    %7 = arith.truncf %6 : vector<8x64xf32> to vector<8x64xbf16>
    %c0_5 = arith.constant 0 : index
    %c0_6 = arith.constant 0 : index
    %c64 = arith.constant 64 : index
    %8 = vector.load %arg1[%c0_5, %c0_6, %c64] : memref<1x8x192xbf16, #tpu.memory_space<vmem>>, vector<1x8x64xbf16>
    %9 = vector.shape_cast %8 : vector<1x8x64xbf16> to vector<8x64xbf16>
    %c0_7 = arith.constant 0 : index
    %c0_8 = arith.constant 0 : index
    %c128 = arith.constant 128 : index
    %10 = vector.load %arg1[%c0_7, %c0_8, %c128] : memref<1x8x192xbf16, #tpu.memory_space<vmem>>, vector<1x8x64xbf16>
    %11 = vector.shape_cast %10 : vector<1x8x64xbf16> to vector<8x64xbf16>
    %cst_9 = arith.constant dense<0.000000e+00> : vector<8x8xf32>
    %12 = tpu.matmul %7, %9, %cst_9 {dimension_numbers = #tpu.dot_dimension_numbers<[1], [1], [0], [0], [0, 0, 1, 0], [], []>} : vector<8x64xbf16>, vector<8x64xbf16>, vector<8x8xf32> -> vector<8x8xf32>
    %13 = vector.broadcast %1 : vector<1x8xf32> to vector<8x8xf32>
    %14 = arith.addf %12, %13 : vector<8x8xf32>
    %cst_10 = arith.constant dense<0xFF800000> : vector<8xf32>
    %15 = vector.multi_reduction <maximumf>, %14, %cst_10 [1] : vector<8x8xf32> to vector<8xf32>
    %16 = vector.shape_cast %15 : vector<8xf32> to vector<8x1xf32>
    %17 = vector.broadcast %16 : vector<8x1xf32> to vector<8x8xf32>
    %18 = arith.subf %14, %17 : vector<8x8xf32>
    %19 = math.exp %18 : vector<8x8xf32>
    %cst_11 = arith.constant dense<0.000000e+00> : vector<8xf32>
    %20 = vector.multi_reduction <add>, %19, %cst_11 [1] : vector<8x8xf32> to vector<8xf32>
    %21 = vector.shape_cast %20 : vector<8xf32> to vector<8x1xf32>
    %22 = arith.truncf %19 : vector<8x8xf32> to vector<8x8xbf16>
    %cst_12 = arith.constant dense<0.000000e+00> : vector<8x64xf32>
    %23 = tpu.matmul %22, %11, %cst_12 {dimension_numbers = #tpu.dot_dimension_numbers<[1], [0], [0], [1], [0, 0, 1, 1], [], []>} : vector<8x8xbf16>, vector<8x64xbf16>, vector<8x64xf32> -> vector<8x64xf32>
    %24 = vector.broadcast %21 : vector<8x1xf32> to vector<8x64xf32>
    %25 = arith.divf %23, %24 : vector<8x64xf32>
    %26 = arith.truncf %25 : vector<8x64xf32> to vector<8x64xbf16>
    %c0_13 = arith.constant 0 : index
    %c0_14 = arith.constant 0 : index
    %c0_15 = arith.constant 0 : index
    %27 = vector.load %arg3[%c0_13, %c0_14, %c0_15] : memref<1x8x64xbf16, #tpu.memory_space<vmem>>, vector<1x8x64xbf16>
    %28 = vector.shape_cast %27 : vector<1x8x64xbf16> to vector<8x64xbf16>
    %29 = vector.shape_cast %26 : vector<8x64xbf16> to vector<1x8x64xbf16>
    tpu.vector_store %arg3[%c0_13, %c0_14, %c0_15], %29 {strides = array<i32>} : memref<1x8x64xbf16, #tpu.memory_space<vmem>>, vector<1x8x64xbf16>,
    return
  }
  func.func @transform_0(%arg0: i32) -> (i32, i32, i32) {
    %c0_i32 = arith.constant 0 : i32
    %c0_i32_0 = arith.constant 0 : i32
    %c0_i32_1 = arith.constant 0 : i32
    return %arg0, %c0_i32, %c0_i32_0 : i32, i32, i32
  }
  func.func @transform_1(%arg0: i32) -> (i32, i32, i32) {
    %c0_i32 = arith.constant 0 : i32
    %c0_i32_0 = arith.constant 0 : i32
    %c0_i32_1 = arith.constant 0 : i32
    %c0_i32_2 = arith.constant 0 : i32
    return %c0_i32, %c0_i32_0, %c0_i32_1 : i32, i32, i32
  }
  func.func @transform_2(%arg0: i32) -> (i32, i32, i32) {
    %c0_i32 = arith.constant 0 : i32
    %c0_i32_0 = arith.constant 0 : i32
    %c0_i32_1 = arith.constant 0 : i32
    return %arg0, %c0_i32, %c0_i32_0 : i32, i32, i32
  }
}

module attributes {stable_mosaic.version = 11 : i64} {
  func.func @_matmul_kernel(%arg0: i32, %arg1: i32, %arg2: i32, %arg3: memref<16x64xbf16, #tpu.memory_space<vmem>>, %arg4: memref<64x64xbf16, #tpu.memory_space<vmem>>, %arg5: memref<1x64xf32, #tpu.memory_space<vmem>>, %arg6: memref<16x64xbf16, #tpu.memory_space<vmem>>, %arg7: memref<16x64xbf16, #tpu.memory_space<vmem>>) attributes {dimension_semantics = [#tpu.dimension_semantics<parallel>, #tpu.dimension_semantics<parallel>, #tpu.dimension_semantics<arbitrary>], iteration_bounds = array<i64: 1, 1, 1>, scalar_prefetch = 0 : i64, scratch_operands = 0 : i64, tpu.core_type = #tpu.core_type<tc>, window_params = [{transform_indices = @transform_0, window_bounds = array<i64: 16, 64>}, {transform_indices = @transform_1, window_bounds = array<i64: 64, 64>}, {transform_indices = @transform_2, window_bounds = array<i64: 1, 64>}, {transform_indices = @transform_3, window_bounds = array<i64: 16, 64>}, {transform_indices = @transform_4, window_bounds = array<i64: 16, 64>}]} {
    %c0 = arith.constant 0 : index
    %c0_0 = arith.constant 0 : index
    %0 = vector.load %arg3[%c0, %c0_0] : memref<16x64xbf16, #tpu.memory_space<vmem>>, vector<16x64xbf16>
    %c0_1 = arith.constant 0 : index
    %c0_2 = arith.constant 0 : index
    %1 = vector.load %arg4[%c0_1, %c0_2] : memref<64x64xbf16, #tpu.memory_space<vmem>>, vector<64x64xbf16>
    %cst = arith.constant dense<0.000000e+00> : vector<16x64xf32>
    %2 = tpu.matmul %0, %1, %cst {dimension_numbers = #tpu.dot_dimension_numbers<[1], [0], [0], [1], [0, 0, 1, 1], [], []>} : vector<16x64xbf16>, vector<64x64xbf16>, vector<16x64xf32> -> vector<16x64xf32>
    %c0_3 = arith.constant 0 : index
    %c0_4 = arith.constant 0 : index
    %3 = vector.load %arg5[%c0_3, %c0_4] : memref<1x64xf32, #tpu.memory_space<vmem>>, vector<1x64xf32>
    %4 = vector.broadcast %3 : vector<1x64xf32> to vector<16x64xf32>
    %5 = arith.addf %2, %4 : vector<16x64xf32>
    %c0_5 = arith.constant 0 : index
    %c0_6 = arith.constant 0 : index
    %6 = vector.load %arg6[%c0_5, %c0_6] : memref<16x64xbf16, #tpu.memory_space<vmem>>, vector<16x64xbf16>
    %7 = arith.extf %6 : vector<16x64xbf16> to vector<16x64xf32>
    %8 = arith.addf %5, %7 : vector<16x64xf32>
    %9 = arith.truncf %8 : vector<16x64xf32> to vector<16x64xbf16>
    %c0_7 = arith.constant 0 : index
    %c0_8 = arith.constant 0 : index
    %10 = vector.load %arg7[%c0_7, %c0_8] : memref<16x64xbf16, #tpu.memory_space<vmem>>, vector<16x64xbf16>
    tpu.vector_store %arg7[%c0_7, %c0_8], %9 {strides = array<i32>} : memref<16x64xbf16, #tpu.memory_space<vmem>>, vector<16x64xbf16>,
    return
  }
  func.func @transform_0(%arg0: i32, %arg1: i32, %arg2: i32) -> (i32, i32) {
    %c0_i32 = arith.constant 0 : i32
    return %arg0, %arg2 : i32, i32
  }
  func.func @transform_1(%arg0: i32, %arg1: i32, %arg2: i32) -> (i32, i32) {
    %c0_i32 = arith.constant 0 : i32
    return %arg2, %arg1 : i32, i32
  }
  func.func @transform_2(%arg0: i32, %arg1: i32, %arg2: i32) -> (i32, i32) {
    %c0_i32 = arith.constant 0 : i32
    %c0_i32_0 = arith.constant 0 : i32
    return %c0_i32, %arg1 : i32, i32
  }
  func.func @transform_3(%arg0: i32, %arg1: i32, %arg2: i32) -> (i32, i32) {
    %c0_i32 = arith.constant 0 : i32
    return %arg0, %arg1 : i32, i32
  }
  func.func @transform_4(%arg0: i32, %arg1: i32, %arg2: i32) -> (i32, i32) {
    %c0_i32 = arith.constant 0 : i32
    return %arg0, %arg1 : i32, i32
  }
}

module attributes {stable_mosaic.version = 11 : i64} {
  func.func @_matmul_kernel(%arg0: i32, %arg1: i32, %arg2: i32, %arg3: memref<16x256xbf16, #tpu.memory_space<vmem>>, %arg4: memref<256x64xbf16, #tpu.memory_space<vmem>>, %arg5: memref<1x64xf32, #tpu.memory_space<vmem>>, %arg6: memref<16x64xbf16, #tpu.memory_space<vmem>>, %arg7: memref<16x64xbf16, #tpu.memory_space<vmem>>) attributes {dimension_semantics = [#tpu.dimension_semantics<parallel>, #tpu.dimension_semantics<parallel>, #tpu.dimension_semantics<arbitrary>], iteration_bounds = array<i64: 1, 1, 1>, scalar_prefetch = 0 : i64, scratch_operands = 0 : i64, tpu.core_type = #tpu.core_type<tc>, window_params = [{transform_indices = @transform_0, window_bounds = array<i64: 16, 256>}, {transform_indices = @transform_1, window_bounds = array<i64: 256, 64>}, {transform_indices = @transform_2, window_bounds = array<i64: 1, 64>}, {transform_indices = @transform_3, window_bounds = array<i64: 16, 64>}, {transform_indices = @transform_4, window_bounds = array<i64: 16, 64>}]} {
    %c0 = arith.constant 0 : index
    %c0_0 = arith.constant 0 : index
    %0 = vector.load %arg3[%c0, %c0_0] : memref<16x256xbf16, #tpu.memory_space<vmem>>, vector<16x256xbf16>
    %c0_1 = arith.constant 0 : index
    %c0_2 = arith.constant 0 : index
    %1 = vector.load %arg4[%c0_1, %c0_2] : memref<256x64xbf16, #tpu.memory_space<vmem>>, vector<256x64xbf16>
    %cst = arith.constant dense<0.000000e+00> : vector<16x64xf32>
    %2 = tpu.matmul %0, %1, %cst {dimension_numbers = #tpu.dot_dimension_numbers<[1], [0], [0], [1], [0, 0, 1, 1], [], []>} : vector<16x256xbf16>, vector<256x64xbf16>, vector<16x64xf32> -> vector<16x64xf32>
    %c0_3 = arith.constant 0 : index
    %c0_4 = arith.constant 0 : index
    %3 = vector.load %arg5[%c0_3, %c0_4] : memref<1x64xf32, #tpu.memory_space<vmem>>, vector<1x64xf32>
    %4 = vector.broadcast %3 : vector<1x64xf32> to vector<16x64xf32>
    %5 = arith.addf %2, %4 : vector<16x64xf32>
    %c0_5 = arith.constant 0 : index
    %c0_6 = arith.constant 0 : index
    %6 = vector.load %arg6[%c0_5, %c0_6] : memref<16x64xbf16, #tpu.memory_space<vmem>>, vector<16x64xbf16>
    %7 = arith.extf %6 : vector<16x64xbf16> to vector<16x64xf32>
    %8 = arith.addf %5, %7 : vector<16x64xf32>
    %9 = arith.truncf %8 : vector<16x64xf32> to vector<16x64xbf16>
    %c0_7 = arith.constant 0 : index
    %c0_8 = arith.constant 0 : index
    %10 = vector.load %arg7[%c0_7, %c0_8] : memref<16x64xbf16, #tpu.memory_space<vmem>>, vector<16x64xbf16>
    tpu.vector_store %arg7[%c0_7, %c0_8], %9 {strides = array<i32>} : memref<16x64xbf16, #tpu.memory_space<vmem>>, vector<16x64xbf16>,
    return
  }
  func.func @transform_0(%arg0: i32, %arg1: i32, %arg2: i32) -> (i32, i32) {
    %c0_i32 = arith.constant 0 : i32
    return %arg0, %arg2 : i32, i32
  }
  func.func @transform_1(%arg0: i32, %arg1: i32, %arg2: i32) -> (i32, i32) {
    %c0_i32 = arith.constant 0 : i32
    return %arg2, %arg1 : i32, i32
  }
  func.func @transform_2(%arg0: i32, %arg1: i32, %arg2: i32) -> (i32, i32) {
    %c0_i32 = arith.constant 0 : i32
    %c0_i32_0 = arith.constant 0 : i32
    return %c0_i32, %arg1 : i32, i32
  }
  func.func @transform_3(%arg0: i32, %arg1: i32, %arg2: i32) -> (i32, i32) {
    %c0_i32 = arith.constant 0 : i32
    return %arg0, %arg1 : i32, i32
  }
  func.func @transform_4(%arg0: i32, %arg1: i32, %arg2: i32) -> (i32, i32) {
    %c0_i32 = arith.constant 0 : i32
    return %arg0, %arg1 : i32, i32
  }
}

module attributes {stable_mosaic.version = 11 : i64} {
  func.func @_matmul_kernel(%arg0: i32, %arg1: i32, %arg2: i32, %arg3: memref<16x64xbf16, #tpu.memory_space<vmem>>, %arg4: memref<64x256xbf16, #tpu.memory_space<vmem>>, %arg5: memref<1x64xf32, #tpu.memory_space<vmem>>, %arg6: memref<1x64xf32, #tpu.memory_space<vmem>>, %arg7: memref<1x256xf32, #tpu.memory_space<vmem>>, %arg8: memref<16x256xbf16, #tpu.memory_space<vmem>>) attributes {dimension_semantics = [#tpu.dimension_semantics<parallel>, #tpu.dimension_semantics<parallel>, #tpu.dimension_semantics<arbitrary>], iteration_bounds = array<i64: 1, 1, 1>, scalar_prefetch = 0 : i64, scratch_operands = 0 : i64, tpu.core_type = #tpu.core_type<tc>, window_params = [{transform_indices = @transform_0, window_bounds = array<i64: 16, 64>}, {transform_indices = @transform_1, window_bounds = array<i64: 64, 256>}, {pipeline_mode = #tpu.pipeline_mode<synchronous>, transform_indices = @transform_2, window_bounds = array<i64: 1, 64>}, {pipeline_mode = #tpu.pipeline_mode<synchronous>, transform_indices = @transform_3, window_bounds = array<i64: 1, 64>}, {transform_indices = @transform_4, window_bounds = array<i64: 1, 256>}, {transform_indices = @transform_5, window_bounds = array<i64: 16, 256>}]} {
    %c0 = arith.constant 0 : index
    %c0_0 = arith.constant 0 : index
    %0 = vector.load %arg3[%c0, %c0_0] : memref<16x64xbf16, #tpu.memory_space<vmem>>, vector<16x64xbf16>
    %1 = arith.extf %0 : vector<16x64xbf16> to vector<16x64xf32>
    %cst = arith.constant dense<0.000000e+00> : vector<16xf32>
    %2 = vector.multi_reduction <add>, %1, %cst [1] : vector<16x64xf32> to vector<16xf32>
    %3 = vector.shape_cast %2 : vector<16xf32> to vector<16x1xf32>
    %cst_1 = arith.constant 6.400000e+01 : f32
    %4 = vector.broadcast %cst_1 : f32 to vector<16x1xf32>
    %5 = arith.divf %3, %4 : vector<16x1xf32>
    %6 = vector.broadcast %5 : vector<16x1xf32> to vector<16x64xf32>
    %7 = arith.subf %1, %6 : vector<16x64xf32>
    %8 = arith.mulf %7, %7 : vector<16x64xf32>
    %cst_2 = arith.constant dense<0.000000e+00> : vector<16xf32>
    %9 = vector.multi_reduction <add>, %8, %cst_2 [1] : vector<16x64xf32> to vector<16xf32>
    %10 = vector.shape_cast %9 : vector<16xf32> to vector<16x1xf32>
    %cst_3 = arith.constant 6.400000e+01 : f32
    %11 = vector.broadcast %cst_3 : f32 to vector<16x1xf32>
    %12 = arith.divf %10, %11 : vector<16x1xf32>
    %cst_4 = arith.constant 9.99999974E-6 : f32
    %13 = vector.broadcast %cst_4 : f32 to vector<16x1xf32>
    %14 = arith.addf %12, %13 : vector<16x1xf32>
    %15 = math.rsqrt %14 : vector<16x1xf32>
    %16 = vector.broadcast %15 : vector<16x1xf32> to vector<16x64xf32>
    %17 = arith.mulf %7, %16 : vector<16x64xf32>
    %c0_5 = arith.constant 0 : index
    %c0_6 = arith.constant 0 : index
    %18 = vector.load %arg5[%c0_5, %c0_6] : memref<1x64xf32, #tpu.memory_space<vmem>>, vector<1x64xf32>
    %19 = vector.broadcast %18 : vector<1x64xf32> to vector<16x64xf32>
    %20 = arith.mulf %17, %19 : vector<16x64xf32>
    %c0_7 = arith.constant 0 : index
    %c0_8 = arith.constant 0 : index
    %21 = vector.load %arg6[%c0_7, %c0_8] : memref<1x64xf32, #tpu.memory_space<vmem>>, vector<1x64xf32>
    %22 = vector.broadcast %21 : vector<1x64xf32> to vector<16x64xf32>
    %23 = arith.addf %20, %22 : vector<16x64xf32>
    %24 = arith.truncf %23 : vector<16x64xf32> to vector<16x64xbf16>
    %c0_9 = arith.constant 0 : index
    %c0_10 = arith.constant 0 : index
    %25 = vector.load %arg4[%c0_9, %c0_10] : memref<64x256xbf16, #tpu.memory_space<vmem>>, vector<64x256xbf16>
    %cst_11 = arith.constant dense<0.000000e+00> : vector<16x256xf32>
    %26 = tpu.matmul %24, %25, %cst_11 {dimension_numbers = #tpu.dot_dimension_numbers<[1], [0], [0], [1], [0, 0, 1, 1], [], []>} : vector<16x64xbf16>, vector<64x256xbf16>, vector<16x256xf32> -> vector<16x256xf32>
    %c0_12 = arith.constant 0 : index
    %c0_13 = arith.constant 0 : index
    %27 = vector.load %arg7[%c0_12, %c0_13] : memref<1x256xf32, #tpu.memory_space<vmem>>, vector<1x256xf32>
    %28 = vector.broadcast %27 : vector<1x256xf32> to vector<16x256xf32>
    %29 = arith.addf %26, %28 : vector<16x256xf32>
    %cst_14 = arith.constant 1.702000e+00 : f32
    %30 = vector.broadcast %cst_14 : f32 to vector<16x256xf32>
    %31 = arith.mulf %30, %29 : vector<16x256xf32>
    %32 = arith.negf %31 : vector<16x256xf32>
    %33 = math.exp %32 : vector<16x256xf32>
    %cst_15 = arith.constant 1.000000e+00 : f32
    %34 = vector.broadcast %cst_15 : f32 to vector<16x256xf32>
    %35 = arith.addf %34, %33 : vector<16x256xf32>
    %36 = arith.divf %34, %35 : vector<16x256xf32>
    %37 = arith.mulf %29, %36 : vector<16x256xf32>
    %38 = arith.truncf %37 : vector<16x256xf32> to vector<16x256xbf16>
    %c0_16 = arith.constant 0 : index
    %c0_17 = arith.constant 0 : index
    %39 = vector.load %arg8[%c0_16, %c0_17] : memref<16x256xbf16, #tpu.memory_space<vmem>>, vector<16x256xbf16>
    tpu.vector_store %arg8[%c0_16, %c0_17], %38 {strides = array<i32>} : memref<16x256xbf16, #tpu.memory_space<vmem>>, vector<16x256xbf16>,
    return
  }
  func.func @transform_0(%arg0: i32, %arg1: i32, %arg2: i32) -> (i32, i32) {
    %c0_i32 = arith.constant 0 : i32
    return %arg0, %arg2 : i32, i32
  }
  func.func @transform_1(%arg0: i32, %arg1: i32, %arg2: i32) -> (i32, i32) {
    %c0_i32 = arith.constant 0 : i32
    return %arg2, %arg1 : i32, i32
  }
  func.func @transform_2(%arg0: i32, %arg1: i32, %arg2: i32) -> (i32, i32) {
    %c0_i32 = arith.constant 0 : i32
    %c0_i32_0 = arith.constant 0 : i32
    %c0_i32_1 = arith.constant 0 : i32
    return %c0_i32, %c0_i32_0 : i32, i32
  }
  func.func @transform_3(%arg0: i32, %arg1: i32, %arg2: i32) -> (i32, i32) {
    %c0_i32 = arith.constant 0 : i32
    %c0_i32_0 = arith.constant 0 : i32
    %c0_i32_1 = arith.constant 0 : i32
    return %c0_i32, %c0_i32_0 : i32, i32
  }
  func.func @transform_4(%arg0: i32, %arg1: i32, %arg2: i32) -> (i32, i32) {
    %c0_i32 = arith.constant 0 : i32
    %c0_i32_0 = arith.constant 0 : i32
    return %c0_i32, %arg1 : i32, i32
  }
  func.func @transform_5(%arg0: i32, %arg1: i32, %arg2: i32) -> (i32, i32) {
    %c0_i32 = arith.constant 0 : i32
    return %arg0, %arg1 : i32, i32
  }
}

module attributes {stable_mosaic.version = 11 : i64} {
  func.func @_matmul_kernel(%arg0: i32, %arg1: i32, %arg2: i32, %arg3: memref<2x64xbf16, #tpu.memory_space<vmem>>, %arg4: memref<64x32xbf16, #tpu.memory_space<vmem>>, %arg5: memref<1x64xf32, #tpu.memory_space<vmem>>, %arg6: memref<1x64xf32, #tpu.memory_space<vmem>>, %arg7: memref<2x32xf32, #tpu.memory_space<vmem>>) attributes {dimension_semantics = [#tpu.dimension_semantics<parallel>, #tpu.dimension_semantics<parallel>, #tpu.dimension_semantics<arbitrary>], iteration_bounds = array<i64: 1, 1, 1>, scalar_prefetch = 0 : i64, scratch_operands = 0 : i64, tpu.core_type = #tpu.core_type<tc>, window_params = [{transform_indices = @transform_0, window_bounds = array<i64: 2, 64>}, {transform_indices = @transform_1, window_bounds = array<i64: 64, 32>}, {pipeline_mode = #tpu.pipeline_mode<synchronous>, transform_indices = @transform_2, window_bounds = array<i64: 1, 64>}, {pipeline_mode = #tpu.pipeline_mode<synchronous>, transform_indices = @transform_3, window_bounds = array<i64: 1, 64>}, {transform_indices = @transform_4, window_bounds = array<i64: 2, 32>}]} {
    %c0 = arith.constant 0 : index
    %c0_0 = arith.constant 0 : index
    %0 = vector.load %arg3[%c0, %c0_0] : memref<2x64xbf16, #tpu.memory_space<vmem>>, vector<2x64xbf16>
    %1 = arith.extf %0 : vector<2x64xbf16> to vector<2x64xf32>
    %cst = arith.constant dense<0.000000e+00> : vector<2xf32>
    %2 = vector.multi_reduction <add>, %1, %cst [1] : vector<2x64xf32> to vector<2xf32>
    %3 = vector.shape_cast %2 : vector<2xf32> to vector<2x1xf32>
    %cst_1 = arith.constant 6.400000e+01 : f32
    %4 = vector.broadcast %cst_1 : f32 to vector<2x1xf32>
    %5 = arith.divf %3, %4 : vector<2x1xf32>
    %6 = vector.broadcast %5 : vector<2x1xf32> to vector<2x64xf32>
    %7 = arith.subf %1, %6 : vector<2x64xf32>
    %8 = arith.mulf %7, %7 : vector<2x64xf32>
    %cst_2 = arith.constant dense<0.000000e+00> : vector<2xf32>
    %9 = vector.multi_reduction <add>, %8, %cst_2 [1] : vector<2x64xf32> to vector<2xf32>
    %10 = vector.shape_cast %9 : vector<2xf32> to vector<2x1xf32>
    %cst_3 = arith.constant 6.400000e+01 : f32
    %11 = vector.broadcast %cst_3 : f32 to vector<2x1xf32>
    %12 = arith.divf %10, %11 : vector<2x1xf32>
    %cst_4 = arith.constant 9.99999974E-6 : f32
    %13 = vector.broadcast %cst_4 : f32 to vector<2x1xf32>
    %14 = arith.addf %12, %13 : vector<2x1xf32>
    %15 = math.rsqrt %14 : vector<2x1xf32>
    %16 = vector.broadcast %15 : vector<2x1xf32> to vector<2x64xf32>
    %17 = arith.mulf %7, %16 : vector<2x64xf32>
    %c0_5 = arith.constant 0 : index
    %c0_6 = arith.constant 0 : index
    %18 = vector.load %arg5[%c0_5, %c0_6] : memref<1x64xf32, #tpu.memory_space<vmem>>, vector<1x64xf32>
    %19 = vector.broadcast %18 : vector<1x64xf32> to vector<2x64xf32>
    %20 = arith.mulf %17, %19 : vector<2x64xf32>
    %c0_7 = arith.constant 0 : index
    %c0_8 = arith.constant 0 : index
    %21 = vector.load %arg6[%c0_7, %c0_8] : memref<1x64xf32, #tpu.memory_space<vmem>>, vector<1x64xf32>
    %22 = vector.broadcast %21 : vector<1x64xf32> to vector<2x64xf32>
    %23 = arith.addf %20, %22 : vector<2x64xf32>
    %24 = arith.truncf %23 : vector<2x64xf32> to vector<2x64xbf16>
    %c0_9 = arith.constant 0 : index
    %c0_10 = arith.constant 0 : index
    %25 = vector.load %arg4[%c0_9, %c0_10] : memref<64x32xbf16, #tpu.memory_space<vmem>>, vector<64x32xbf16>
    %cst_11 = arith.constant dense<0.000000e+00> : vector<2x32xf32>
    %26 = tpu.matmul %24, %25, %cst_11 {dimension_numbers = #tpu.dot_dimension_numbers<[1], [0], [0], [1], [0, 0, 1, 1], [], []>} : vector<2x64xbf16>, vector<64x32xbf16>, vector<2x32xf32> -> vector<2x32xf32>
    %c0_12 = arith.constant 0 : index
    %c0_13 = arith.constant 0 : index
    %27 = vector.load %arg7[%c0_12, %c0_13] : memref<2x32xf32, #tpu.memory_space<vmem>>, vector<2x32xf32>
    tpu.vector_store %arg7[%c0_12, %c0_13], %26 {strides = array<i32>} : memref<2x32xf32, #tpu.memory_space<vmem>>, vector<2x32xf32>,
    return
  }
  func.func @transform_0(%arg0: i32, %arg1: i32, %arg2: i32) -> (i32, i32) {
    %c0_i32 = arith.constant 0 : i32
    return %arg0, %arg2 : i32, i32
  }
  func.func @transform_1(%arg0: i32, %arg1: i32, %arg2: i32) -> (i32, i32) {
    %c0_i32 = arith.constant 0 : i32
    return %arg2, %arg1 : i32, i32
  }
  func.func @transform_2(%arg0: i32, %arg1: i32, %arg2: i32) -> (i32, i32) {
    %c0_i32 = arith.constant 0 : i32
    %c0_i32_0 = arith.constant 0 : i32
    %c0_i32_1 = arith.constant 0 : i32
    return %c0_i32, %c0_i32_0 : i32, i32
  }
  func.func @transform_3(%arg0: i32, %arg1: i32, %arg2: i32) -> (i32, i32) {
    %c0_i32 = arith.constant 0 : i32
    %c0_i32_0 = arith.constant 0 : i32
    %c0_i32_1 = arith.constant 0 : i32
    return %c0_i32, %c0_i32_0 : i32, i32
  }
  func.func @transform_4(%arg0: i32, %arg1: i32, %arg2: i32) -> (i32, i32) {
    %c0_i32 = arith.constant 0 : i32
    return %arg0, %arg1 : i32, i32
  }
}

module attributes {stable_mosaic.version = 11 : i64} {
  func.func @_layernorm_kernel(%arg0: i32, %arg1: memref<16x32xbf16, #tpu.memory_space<vmem>>, %arg2: memref<1x32xf32, #tpu.memory_space<vmem>>, %arg3: memref<1x32xf32, #tpu.memory_space<vmem>>, %arg4: memref<16x32xbf16, #tpu.memory_space<vmem>>) attributes {dimension_semantics = [#tpu.dimension_semantics<parallel>], iteration_bounds = array<i64: 1>, scalar_prefetch = 0 : i64, scratch_operands = 0 : i64, tpu.core_type = #tpu.core_type<tc>, window_params = [{transform_indices = @transform_0, window_bounds = array<i64: 16, 32>}, {pipeline_mode = #tpu.pipeline_mode<synchronous>, transform_indices = @transform_1, window_bounds = array<i64: 1, 32>}, {pipeline_mode = #tpu.pipeline_mode<synchronous>, transform_indices = @transform_2, window_bounds = array<i64: 1, 32>}, {transform_indices = @transform_3, window_bounds = array<i64: 16, 32>}]} {
    %c0 = arith.constant 0 : index
    %c0_0 = arith.constant 0 : index
    %0 = vector.load %arg1[%c0, %c0_0] : memref<16x32xbf16, #tpu.memory_space<vmem>>, vector<16x32xbf16>
    %1 = arith.extf %0 : vector<16x32xbf16> to vector<16x32xf32>
    %cst = arith.constant dense<0.000000e+00> : vector<16xf32>
    %2 = vector.multi_reduction <add>, %1, %cst [1] : vector<16x32xf32> to vector<16xf32>
    %3 = vector.shape_cast %2 : vector<16xf32> to vector<16x1xf32>
    %cst_1 = arith.constant 3.200000e+01 : f32
    %4 = vector.broadcast %cst_1 : f32 to vector<16x1xf32>
    %5 = arith.divf %3, %4 : vector<16x1xf32>
    %6 = vector.broadcast %5 : vector<16x1xf32> to vector<16x32xf32>
    %7 = arith.subf %1, %6 : vector<16x32xf32>
    %8 = arith.mulf %7, %7 : vector<16x32xf32>
    %cst_2 = arith.constant dense<0.000000e+00> : vector<16xf32>
    %9 = vector.multi_reduction <add>, %8, %cst_2 [1] : vector<16x32xf32> to vector<16xf32>
    %10 = vector.shape_cast %9 : vector<16xf32> to vector<16x1xf32>
    %cst_3 = arith.constant 3.200000e+01 : f32
    %11 = vector.broadcast %cst_3 : f32 to vector<16x1xf32>
    %12 = arith.divf %10, %11 : vector<16x1xf32>
    %cst_4 = arith.constant 9.99999996E-13 : f32
    %13 = vector.broadcast %cst_4 : f32 to vector<16x1xf32>
    %14 = arith.addf %12, %13 : vector<16x1xf32>
    %15 = math.rsqrt %14 : vector<16x1xf32>
    %16 = vector.broadcast %15 : vector<16x1xf32> to vector<16x32xf32>
    %17 = arith.mulf %7, %16 : vector<16x32xf32>
    %c0_5 = arith.constant 0 : index
    %c0_6 = arith.constant 0 : index
    %18 = vector.load %arg2[%c0_5, %c0_6] : memref<1x32xf32, #tpu.memory_space<vmem>>, vector<1x32xf32>
    %19 = vector.broadcast %18 : vector<1x32xf32> to vector<16x32xf32>
    %20 = arith.mulf %17, %19 : vector<16x32xf32>
    %c0_7 = arith.constant 0 : index
    %c0_8 = arith.constant 0 : index
    %21 = vector.load %arg3[%c0_7, %c0_8] : memref<1x32xf32, #tpu.memory_space<vmem>>, vector<1x32xf32>
    %22 = vector.broadcast %21 : vector<1x32xf32> to vector<16x32xf32>
    %23 = arith.addf %20, %22 : vector<16x32xf32>
    %24 = arith.truncf %23 : vector<16x32xf32> to vector<16x32xbf16>
    %c0_9 = arith.constant 0 : index
    %c0_10 = arith.constant 0 : index
    %25 = vector.load %arg4[%c0_9, %c0_10] : memref<16x32xbf16, #tpu.memory_space<vmem>>, vector<16x32xbf16>
    tpu.vector_store %arg4[%c0_9, %c0_10], %24 {strides = array<i32>} : memref<16x32xbf16, #tpu.memory_space<vmem>>, vector<16x32xbf16>,
    return
  }
  func.func @transform_0(%arg0: i32) -> (i32, i32) {
    %c0_i32 = arith.constant 0 : i32
    %c0_i32_0 = arith.constant 0 : i32
    return %arg0, %c0_i32 : i32, i32
  }
  func.func @transform_1(%arg0: i32) -> (i32, i32) {
    %c0_i32 = arith.constant 0 : i32
    %c0_i32_0 = arith.constant 0 : i32
    %c0_i32_1 = arith.constant 0 : i32
    return %c0_i32, %c0_i32_0 : i32, i32
  }
  func.func @transform_2(%arg0: i32) -> (i32, i32) {
    %c0_i32 = arith.constant 0 : i32
    %c0_i32_0 = arith.constant 0 : i32
    %c0_i32_1 = arith.constant 0 : i32
    return %c0_i32, %c0_i32_0 : i32, i32
  }
  func.func @transform_3(%arg0: i32) -> (i32, i32) {
    %c0_i32 = arith.constant 0 : i32
    %c0_i32_0 = arith.constant 0 : i32
    return %arg0, %c0_i32 : i32, i32
  }
}

module attributes {stable_mosaic.version = 11 : i64} {
  func.func @_matmul_kernel(%arg0: i32, %arg1: i32, %arg2: i32, %arg3: memref<16x32xbf16, #tpu.memory_space<vmem>>, %arg4: memref<32x96xbf16, #tpu.memory_space<vmem>>, %arg5: memref<1x96xf32, #tpu.memory_space<vmem>>, %arg6: memref<16x96xbf16, #tpu.memory_space<vmem>>) attributes {dimension_semantics = [#tpu.dimension_semantics<parallel>, #tpu.dimension_semantics<parallel>, #tpu.dimension_semantics<arbitrary>], iteration_bounds = array<i64: 1, 1, 1>, scalar_prefetch = 0 : i64, scratch_operands = 0 : i64, tpu.core_type = #tpu.core_type<tc>, window_params = [{transform_indices = @transform_0, window_bounds = array<i64: 16, 32>}, {transform_indices = @transform_1, window_bounds = array<i64: 32, 96>}, {transform_indices = @transform_2, window_bounds = array<i64: 1, 96>}, {transform_indices = @transform_3, window_bounds = array<i64: 16, 96>}]} {
    %c0 = arith.constant 0 : index
    %c0_0 = arith.constant 0 : index
    %0 = vector.load %arg3[%c0, %c0_0] : memref<16x32xbf16, #tpu.memory_space<vmem>>, vector<16x32xbf16>
    %c0_1 = arith.constant 0 : index
    %c0_2 = arith.constant 0 : index
    %1 = vector.load %arg4[%c0_1, %c0_2] : memref<32x96xbf16, #tpu.memory_space<vmem>>, vector<32x96xbf16>
    %cst = arith.constant dense<0.000000e+00> : vector<16x96xf32>
    %2 = tpu.matmul %0, %1, %cst {dimension_numbers = #tpu.dot_dimension_numbers<[1], [0], [0], [1], [0, 0, 1, 1], [], []>} : vector<16x32xbf16>, vector<32x96xbf16>, vector<16x96xf32> -> vector<16x96xf32>
    %c0_3 = arith.constant 0 : index
    %c0_4 = arith.constant 0 : index
    %3 = vector.load %arg5[%c0_3, %c0_4] : memref<1x96xf32, #tpu.memory_space<vmem>>, vector<1x96xf32>
    %4 = vector.broadcast %3 : vector<1x96xf32> to vector<16x96xf32>
    %5 = arith.addf %2, %4 : vector<16x96xf32>
    %6 = arith.truncf %5 : vector<16x96xf32> to vector<16x96xbf16>
    %c0_5 = arith.constant 0 : index
    %c0_6 = arith.constant 0 : index
    %7 = vector.load %arg6[%c0_5, %c0_6] : memref<16x96xbf16, #tpu.memory_space<vmem>>, vector<16x96xbf16>
    tpu.vector_store %arg6[%c0_5, %c0_6], %6 {strides = array<i32>} : memref<16x96xbf16, #tpu.memory_space<vmem>>, vector<16x96xbf16>,
    return
  }
  func.func @transform_0(%arg0: i32, %arg1: i32, %arg2: i32) -> (i32, i32) {
    %c0_i32 = arith.constant 0 : i32
    return %arg0, %arg2 : i32, i32
  }
  func.func @transform_1(%arg0: i32, %arg1: i32, %arg2: i32) -> (i32, i32) {
    %c0_i32 = arith.constant 0 : i32
    return %arg2, %arg1 : i32, i32
  }
  func.func @transform_2(%arg0: i32, %arg1: i32, %arg2: i32) -> (i32, i32) {
    %c0_i32 = arith.constant 0 : i32
    %c0_i32_0 = arith.constant 0 : i32
    return %c0_i32, %arg1 : i32, i32
  }
  func.func @transform_3(%arg0: i32, %arg1: i32, %arg2: i32) -> (i32, i32) {
    %c0_i32 = arith.constant 0 : i32
    return %arg0, %arg1 : i32, i32
  }
}

module attributes {stable_mosaic.version = 11 : i64} {
  func.func @_mhsa_kernel(%arg0: i32, %arg1: memref<1x8x96xbf16, #tpu.memory_space<vmem>>, %arg2: memref<1x1x8xf32, #tpu.memory_space<vmem>>, %arg3: memref<1x8x32xbf16, #tpu.memory_space<vmem>>) attributes {dimension_semantics = [#tpu.dimension_semantics<parallel>], iteration_bounds = array<i64: 2>, scalar_prefetch = 0 : i64, scratch_operands = 0 : i64, tpu.core_type = #tpu.core_type<tc>, window_params = [{transform_indices = @transform_0, window_bounds = array<i64: 1, 8, 96>}, {transform_indices = @transform_1, window_bounds = array<i64: 1, 1, 8>}, {transform_indices = @transform_2, window_bounds = array<i64: 1, 8, 32>}]} {
    %c0 = arith.constant 0 : index
    %c0_0 = arith.constant 0 : index
    %c0_1 = arith.constant 0 : index
    %0 = vector.load %arg2[%c0, %c0_0, %c0_1] : memref<1x1x8xf32, #tpu.memory_space<vmem>>, vector<1x1x8xf32>
    %1 = vector.shape_cast %0 : vector<1x1x8xf32> to vector<1x8xf32>
    %c0_2 = arith.constant 0 : index
    %c0_3 = arith.constant 0 : index
    %c0_4 = arith.constant 0 : index
    %2 = vector.load %arg1[%c0_2, %c0_3, %c0_4] : memref<1x8x96xbf16, #tpu.memory_space<vmem>>, vector<1x8x16xbf16>
    %3 = vector.shape_cast %2 : vector<1x8x16xbf16> to vector<8x16xbf16>
    %4 = arith.extf %3 : vector<8x16xbf16> to vector<8x16xf32>
    %cst = arith.constant 2.500000e-01 : f32
    %5 = vector.broadcast %cst : f32 to vector<8x16xf32>
    %6 = arith.mulf %4, %5 : vector<8x16xf32>
    %7 = arith.truncf %6 : vector<8x16xf32> to vector<8x16xbf16>
    %c0_5 = arith.constant 0 : index
    %c0_6 = arith.constant 0 : index
    %c32 = arith.constant 32 : index
    %8 = vector.load %arg1[%c0_5, %c0_6, %c32] : memref<1x8x96xbf16, #tpu.memory_space<vmem>>, vector<1x8x16xbf16>
    %9 = vector.shape_cast %8 : vector<1x8x16xbf16> to vector<8x16xbf16>
    %c0_7 = arith.constant 0 : index
    %c0_8 = arith.constant 0 : index
    %c64 = arith.constant 64 : index
    %10 = vector.load %arg1[%c0_7, %c0_8, %c64] : memref<1x8x96xbf16, #tpu.memory_space<vmem>>, vector<1x8x16xbf16>
    %11 = vector.shape_cast %10 : vector<1x8x16xbf16> to vector<8x16xbf16>
    %cst_9 = arith.constant dense<0.000000e+00> : vector<8x8xf32>
    %12 = tpu.matmul %7, %9, %cst_9 {dimension_numbers = #tpu.dot_dimension_numbers<[1], [1], [0], [0], [0, 0, 1, 0], [], []>} : vector<8x16xbf16>, vector<8x16xbf16>, vector<8x8xf32> -> vector<8x8xf32>
    %13 = vector.broadcast %1 : vector<1x8xf32> to vector<8x8xf32>
    %14 = arith.addf %12, %13 : vector<8x8xf32>
    %cst_10 = arith.constant dense<0xFF800000> : vector<8xf32>
    %15 = vector.multi_reduction <maximumf>, %14, %cst_10 [1] : vector<8x8xf32> to vector<8xf32>
    %16 = vector.shape_cast %15 : vector<8xf32> to vector<8x1xf32>
    %17 = vector.broadcast %16 : vector<8x1xf32> to vector<8x8xf32>
    %18 = arith.subf %14, %17 : vector<8x8xf32>
    %19 = math.exp %18 : vector<8x8xf32>
    %cst_11 = arith.constant dense<0.000000e+00> : vector<8xf32>
    %20 = vector.multi_reduction <add>, %19, %cst_11 [1] : vector<8x8xf32> to vector<8xf32>
    %21 = vector.shape_cast %20 : vector<8xf32> to vector<8x1xf32>
    %22 = arith.truncf %19 : vector<8x8xf32> to vector<8x8xbf16>
    %cst_12 = arith.constant dense<0.000000e+00> : vector<8x16xf32>
    %23 = tpu.matmul %22, %11, %cst_12 {dimension_numbers = #tpu.dot_dimension_numbers<[1], [0], [0], [1], [0, 0, 1, 1], [], []>} : vector<8x8xbf16>, vector<8x16xbf16>, vector<8x16xf32> -> vector<8x16xf32>
    %24 = vector.broadcast %21 : vector<8x1xf32> to vector<8x16xf32>
    %25 = arith.divf %23, %24 : vector<8x16xf32>
    %26 = arith.truncf %25 : vector<8x16xf32> to vector<8x16xbf16>
    %c0_13 = arith.constant 0 : index
    %c0_14 = arith.constant 0 : index
    %c0_15 = arith.constant 0 : index
    %27 = vector.load %arg3[%c0_13, %c0_14, %c0_15] : memref<1x8x32xbf16, #tpu.memory_space<vmem>>, vector<1x8x16xbf16>
    %28 = vector.shape_cast %27 : vector<1x8x16xbf16> to vector<8x16xbf16>
    %29 = vector.shape_cast %26 : vector<8x16xbf16> to vector<1x8x16xbf16>
    tpu.vector_store %arg3[%c0_13, %c0_14, %c0_15], %29 {strides = array<i32>} : memref<1x8x32xbf16, #tpu.memory_space<vmem>>, vector<1x8x16xbf16>,
    %c0_16 = arith.constant 0 : index
    %c0_17 = arith.constant 0 : index
    %c16 = arith.constant 16 : index
    %30 = vector.load %arg1[%c0_16, %c0_17, %c16] : memref<1x8x96xbf16, #tpu.memory_space<vmem>>, vector<1x8x16xbf16>
    %31 = vector.shape_cast %30 : vector<1x8x16xbf16> to vector<8x16xbf16>
    %32 = arith.extf %31 : vector<8x16xbf16> to vector<8x16xf32>
    %cst_18 = arith.constant 2.500000e-01 : f32
    %33 = vector.broadcast %cst_18 : f32 to vector<8x16xf32>
    %34 = arith.mulf %32, %33 : vector<8x16xf32>
    %35 = arith.truncf %34 : vector<8x16xf32> to vector<8x16xbf16>
    %c0_19 = arith.constant 0 : index
    %c0_20 = arith.constant 0 : index
    %c48 = arith.constant 48 : index
    %36 = vector.load %arg1[%c0_19, %c0_20, %c48] : memref<1x8x96xbf16, #tpu.memory_space<vmem>>, vector<1x8x16xbf16>
    %37 = vector.shape_cast %36 : vector<1x8x16xbf16> to vector<8x16xbf16>
    %c0_21 = arith.constant 0 : index
    %c0_22 = arith.constant 0 : index
    %c80 = arith.constant 80 : index
    %38 = vector.load %arg1[%c0_21, %c0_22, %c80] : memref<1x8x96xbf16, #tpu.memory_space<vmem>>, vector<1x8x16xbf16>
    %39 = vector.shape_cast %38 : vector<1x8x16xbf16> to vector<8x16xbf16>
    %cst_23 = arith.constant dense<0.000000e+00> : vector<8x8xf32>
    %40 = tpu.matmul %35, %37, %cst_23 {dimension_numbers = #tpu.dot_dimension_numbers<[1], [1], [0], [0], [0, 0, 1, 0], [], []>} : vector<8x16xbf16>, vector<8x16xbf16>, vector<8x8xf32> -> vector<8x8xf32>
    %41 = vector.broadcast %1 : vector<1x8xf32> to vector<8x8xf32>
    %42 = arith.addf %40, %41 : vector<8x8xf32>
    %cst_24 = arith.constant dense<0xFF800000> : vector<8xf32>
    %43 = vector.multi_reduction <maximumf>, %42, %cst_24 [1] : vector<8x8xf32> to vector<8xf32>
    %44 = vector.shape_cast %43 : vector<8xf32> to vector<8x1xf32>
    %45 = vector.broadcast %44 : vector<8x1xf32> to vector<8x8xf32>
    %46 = arith.subf %42, %45 : vector<8x8xf32>
    %47 = math.exp %46 : vector<8x8xf32>
    %cst_25 = arith.constant dense<0.000000e+00> : vector<8xf32>
    %48 = vector.multi_reduction <add>, %47, %cst_25 [1] : vector<8x8xf32> to vector<8xf32>
    %49 = vector.shape_cast %48 : vector<8xf32> to vector<8x1xf32>
    %50 = arith.truncf %47 : vector<8x8xf32> to vector<8x8xbf16>
    %cst_26 = arith.constant dense<0.000000e+00> : vector<8x16xf32>
    %51 = tpu.matmul %50, %39, %cst_26 {dimension_numbers = #tpu.dot_dimension_numbers<[1], [0], [0], [1], [0, 0, 1, 1], [], []>} : vector<8x8xbf16>, vector<8x16xbf16>, vector<8x16xf32> -> vector<8x16xf32>
    %52 = vector.broadcast %49 : vector<8x1xf32> to vector<8x16xf32>
    %53 = arith.divf %51, %52 : vector<8x16xf32>
    %54 = arith.truncf %53 : vector<8x16xf32> to vector<8x16xbf16>
    %c0_27 = arith.constant 0 : index
    %c0_28 = arith.constant 0 : index
    %c16_29 = arith.constant 16 : index
    %55 = vector.load %arg3[%c0_27, %c0_28, %c16_29] : memref<1x8x32xbf16, #tpu.memory_space<vmem>>, vector<1x8x16xbf16>
    %56 = vector.shape_cast %55 : vector<1x8x16xbf16> to vector<8x16xbf16>
    %57 = vector.shape_cast %54 : vector<8x16xbf16> to vector<1x8x16xbf16>
    tpu.vector_store %arg3[%c0_27, %c0_28, %c16_29], %57 {strides = array<i32>} : memref<1x8x32xbf16, #tpu.memory_space<vmem>>, vector<1x8x16xbf16>,
    return
  }
  func.func @transform_0(%arg0: i32) -> (i32, i32, i32) {
    %c0_i32 = arith.constant 0 : i32
    %c0_i32_0 = arith.constant 0 : i32
    %c0_i32_1 = arith.constant 0 : i32
    return %arg0, %c0_i32, %c0_i32_0 : i32, i32, i32
  }
  func.func @transform_1(%arg0: i32) -> (i32, i32, i32) {
    %c0_i32 = arith.constant 0 : i32
    %c0_i32_0 = arith.constant 0 : i32
    %c0_i32_1 = arith.constant 0 : i32
    return %arg0, %c0_i32, %c0_i32_0 : i32, i32, i32
  }
  func.func @transform_2(%arg0: i32) -> (i32, i32, i32) {
    %c0_i32 = arith.constant 0 : i32
    %c0_i32_0 = arith.constant 0 : i32
    %c0_i32_1 = arith.constant 0 : i32
    return %arg0, %c0_i32, %c0_i32_0 : i32, i32, i32
  }
}

module attributes {stable_mosaic.version = 11 : i64} {
  func.func @_matmul_kernel(%arg0: i32, %arg1: i32, %arg2: i32, %arg3: memref<16x32xbf16, #tpu.memory_space<vmem>>, %arg4: memref<32x32xbf16, #tpu.memory_space<vmem>>, %arg5: memref<1x32xf32, #tpu.memory_space<vmem>>, %arg6: memref<16x32xbf16, #tpu.memory_space<vmem>>, %arg7: memref<16x32xbf16, #tpu.memory_space<vmem>>) attributes {dimension_semantics = [#tpu.dimension_semantics<parallel>, #tpu.dimension_semantics<parallel>, #tpu.dimension_semantics<arbitrary>], iteration_bounds = array<i64: 1, 1, 1>, scalar_prefetch = 0 : i64, scratch_operands = 0 : i64, tpu.core_type = #tpu.core_type<tc>, window_params = [{transform_indices = @transform_0, window_bounds = array<i64: 16, 32>}, {transform_indices = @transform_1, window_bounds = array<i64: 32, 32>}, {transform_indices = @transform_2, window_bounds = array<i64: 1, 32>}, {transform_indices = @transform_3, window_bounds = array<i64: 16, 32>}, {transform_indices = @transform_4, window_bounds = array<i64: 16, 32>}]} {
    %c0 = arith.constant 0 : index
    %c0_0 = arith.constant 0 : index
    %0 = vector.load %arg3[%c0, %c0_0] : memref<16x32xbf16, #tpu.memory_space<vmem>>, vector<16x32xbf16>
    %c0_1 = arith.constant 0 : index
    %c0_2 = arith.constant 0 : index
    %1 = vector.load %arg4[%c0_1, %c0_2] : memref<32x32xbf16, #tpu.memory_space<vmem>>, vector<32x32xbf16>
    %cst = arith.constant dense<0.000000e+00> : vector<16x32xf32>
    %2 = tpu.matmul %0, %1, %cst {dimension_numbers = #tpu.dot_dimension_numbers<[1], [0], [0], [1], [0, 0, 1, 1], [], []>} : vector<16x32xbf16>, vector<32x32xbf16>, vector<16x32xf32> -> vector<16x32xf32>
    %c0_3 = arith.constant 0 : index
    %c0_4 = arith.constant 0 : index
    %3 = vector.load %arg5[%c0_3, %c0_4] : memref<1x32xf32, #tpu.memory_space<vmem>>, vector<1x32xf32>
    %4 = vector.broadcast %3 : vector<1x32xf32> to vector<16x32xf32>
    %5 = arith.addf %2, %4 : vector<16x32xf32>
    %c0_5 = arith.constant 0 : index
    %c0_6 = arith.constant 0 : index
    %6 = vector.load %arg6[%c0_5, %c0_6] : memref<16x32xbf16, #tpu.memory_space<vmem>>, vector<16x32xbf16>
    %7 = arith.extf %6 : vector<16x32xbf16> to vector<16x32xf32>
    %8 = arith.addf %5, %7 : vector<16x32xf32>
    %9 = arith.truncf %8 : vector<16x32xf32> to vector<16x32xbf16>
    %c0_7 = arith.constant 0 : index
    %c0_8 = arith.constant 0 : index
    %10 = vector.load %arg7[%c0_7, %c0_8] : memref<16x32xbf16, #tpu.memory_space<vmem>>, vector<16x32xbf16>
    tpu.vector_store %arg7[%c0_7, %c0_8], %9 {strides = array<i32>} : memref<16x32xbf16, #tpu.memory_space<vmem>>, vector<16x32xbf16>,
    return
  }
  func.func @transform_0(%arg0: i32, %arg1: i32, %arg2: i32) -> (i32, i32) {
    %c0_i32 = arith.constant 0 : i32
    return %arg0, %arg2 : i32, i32
  }
  func.func @transform_1(%arg0: i32, %arg1: i32, %arg2: i32) -> (i32, i32) {
    %c0_i32 = arith.constant 0 : i32
    return %arg2, %arg1 : i32, i32
  }
  func.func @transform_2(%arg0: i32, %arg1: i32, %arg2: i32) -> (i32, i32) {
    %c0_i32 = arith.constant 0 : i32
    %c0_i32_0 = arith.constant 0 : i32
    return %c0_i32, %arg1 : i32, i32
  }
  func.func @transform_3(%arg0: i32, %arg1: i32, %arg2: i32) -> (i32, i32) {
    %c0_i32 = arith.constant 0 : i32
    return %arg0, %arg1 : i32, i32
  }
  func.func @transform_4(%arg0: i32, %arg1: i32, %arg2: i32) -> (i32, i32) {
    %c0_i32 = arith.constant 0 : i32
    return %arg0, %arg1 : i32, i32
  }
}

module attributes {stable_mosaic.version = 11 : i64} {
  func.func @_matmul_kernel(%arg0: i32, %arg1: i32, %arg2: i32, %arg3: memref<16x64xbf16, #tpu.memory_space<vmem>>, %arg4: memref<64x32xbf16, #tpu.memory_space<vmem>>, %arg5: memref<1x32xf32, #tpu.memory_space<vmem>>, %arg6: memref<16x32xbf16, #tpu.memory_space<vmem>>, %arg7: memref<16x32xbf16, #tpu.memory_space<vmem>>) attributes {dimension_semantics = [#tpu.dimension_semantics<parallel>, #tpu.dimension_semantics<parallel>, #tpu.dimension_semantics<arbitrary>], iteration_bounds = array<i64: 1, 1, 1>, scalar_prefetch = 0 : i64, scratch_operands = 0 : i64, tpu.core_type = #tpu.core_type<tc>, window_params = [{transform_indices = @transform_0, window_bounds = array<i64: 16, 64>}, {transform_indices = @transform_1, window_bounds = array<i64: 64, 32>}, {transform_indices = @transform_2, window_bounds = array<i64: 1, 32>}, {transform_indices = @transform_3, window_bounds = array<i64: 16, 32>}, {transform_indices = @transform_4, window_bounds = array<i64: 16, 32>}]} {
    %c0 = arith.constant 0 : index
    %c0_0 = arith.constant 0 : index
    %0 = vector.load %arg3[%c0, %c0_0] : memref<16x64xbf16, #tpu.memory_space<vmem>>, vector<16x64xbf16>
    %c0_1 = arith.constant 0 : index
    %c0_2 = arith.constant 0 : index
    %1 = vector.load %arg4[%c0_1, %c0_2] : memref<64x32xbf16, #tpu.memory_space<vmem>>, vector<64x32xbf16>
    %cst = arith.constant dense<0.000000e+00> : vector<16x32xf32>
    %2 = tpu.matmul %0, %1, %cst {dimension_numbers = #tpu.dot_dimension_numbers<[1], [0], [0], [1], [0, 0, 1, 1], [], []>} : vector<16x64xbf16>, vector<64x32xbf16>, vector<16x32xf32> -> vector<16x32xf32>
    %c0_3 = arith.constant 0 : index
    %c0_4 = arith.constant 0 : index
    %3 = vector.load %arg5[%c0_3, %c0_4] : memref<1x32xf32, #tpu.memory_space<vmem>>, vector<1x32xf32>
    %4 = vector.broadcast %3 : vector<1x32xf32> to vector<16x32xf32>
    %5 = arith.addf %2, %4 : vector<16x32xf32>
    %c0_5 = arith.constant 0 : index
    %c0_6 = arith.constant 0 : index
    %6 = vector.load %arg6[%c0_5, %c0_6] : memref<16x32xbf16, #tpu.memory_space<vmem>>, vector<16x32xbf16>
    %7 = arith.extf %6 : vector<16x32xbf16> to vector<16x32xf32>
    %8 = arith.addf %5, %7 : vector<16x32xf32>
    %9 = arith.truncf %8 : vector<16x32xf32> to vector<16x32xbf16>
    %c0_7 = arith.constant 0 : index
    %c0_8 = arith.constant 0 : index
    %10 = vector.load %arg7[%c0_7, %c0_8] : memref<16x32xbf16, #tpu.memory_space<vmem>>, vector<16x32xbf16>
    tpu.vector_store %arg7[%c0_7, %c0_8], %9 {strides = array<i32>} : memref<16x32xbf16, #tpu.memory_space<vmem>>, vector<16x32xbf16>,
    return
  }
  func.func @transform_0(%arg0: i32, %arg1: i32, %arg2: i32) -> (i32, i32) {
    %c0_i32 = arith.constant 0 : i32
    return %arg0, %arg2 : i32, i32
  }
  func.func @transform_1(%arg0: i32, %arg1: i32, %arg2: i32) -> (i32, i32) {
    %c0_i32 = arith.constant 0 : i32
    return %arg2, %arg1 : i32, i32
  }
  func.func @transform_2(%arg0: i32, %arg1: i32, %arg2: i32) -> (i32, i32) {
    %c0_i32 = arith.constant 0 : i32
    %c0_i32_0 = arith.constant 0 : i32
    return %c0_i32, %arg1 : i32, i32
  }
  func.func @transform_3(%arg0: i32, %arg1: i32, %arg2: i32) -> (i32, i32) {
    %c0_i32 = arith.constant 0 : i32
    return %arg0, %arg1 : i32, i32
  }
  func.func @transform_4(%arg0: i32, %arg1: i32, %arg2: i32) -> (i32, i32) {
    %c0_i32 = arith.constant 0 : i32
    return %arg0, %arg1 : i32, i32
  }
}

module attributes {stable_mosaic.version = 11 : i64} {
  func.func @_matmul_kernel(%arg0: i32, %arg1: i32, %arg2: i32, %arg3: memref<16x32xbf16, #tpu.memory_space<vmem>>, %arg4: memref<32x64xbf16, #tpu.memory_space<vmem>>, %arg5: memref<1x64xf32, #tpu.memory_space<vmem>>, %arg6: memref<16x64xbf16, #tpu.memory_space<vmem>>) attributes {dimension_semantics = [#tpu.dimension_semantics<parallel>, #tpu.dimension_semantics<parallel>, #tpu.dimension_semantics<arbitrary>], iteration_bounds = array<i64: 1, 1, 1>, scalar_prefetch = 0 : i64, scratch_operands = 0 : i64, tpu.core_type = #tpu.core_type<tc>, window_params = [{transform_indices = @transform_0, window_bounds = array<i64: 16, 32>}, {transform_indices = @transform_1, window_bounds = array<i64: 32, 64>}, {transform_indices = @transform_2, window_bounds = array<i64: 1, 64>}, {transform_indices = @transform_3, window_bounds = array<i64: 16, 64>}]} {
    %c0 = arith.constant 0 : index
    %c0_0 = arith.constant 0 : index
    %0 = vector.load %arg3[%c0, %c0_0] : memref<16x32xbf16, #tpu.memory_space<vmem>>, vector<16x32xbf16>
    %c0_1 = arith.constant 0 : index
    %c0_2 = arith.constant 0 : index
    %1 = vector.load %arg4[%c0_1, %c0_2] : memref<32x64xbf16, #tpu.memory_space<vmem>>, vector<32x64xbf16>
    %cst = arith.constant dense<0.000000e+00> : vector<16x64xf32>
    %2 = tpu.matmul %0, %1, %cst {dimension_numbers = #tpu.dot_dimension_numbers<[1], [0], [0], [1], [0, 0, 1, 1], [], []>} : vector<16x32xbf16>, vector<32x64xbf16>, vector<16x64xf32> -> vector<16x64xf32>
    %c0_3 = arith.constant 0 : index
    %c0_4 = arith.constant 0 : index
    %3 = vector.load %arg5[%c0_3, %c0_4] : memref<1x64xf32, #tpu.memory_space<vmem>>, vector<1x64xf32>
    %4 = vector.broadcast %3 : vector<1x64xf32> to vector<16x64xf32>
    %5 = arith.addf %2, %4 : vector<16x64xf32>
    %cst_5 = arith.constant 5.000000e-01 : f32
    %6 = vector.broadcast %cst_5 : f32 to vector<16x64xf32>
    %7 = arith.mulf %6, %5 : vector<16x64xf32>
    %cst_6 = arith.constant 4.471500e-02 : f32
    %8 = vector.broadcast %cst_6 : f32 to vector<16x64xf32>
    %9 = arith.mulf %8, %5 : vector<16x64xf32>
    %10 = arith.mulf %9, %5 : vector<16x64xf32>
    %11 = arith.mulf %10, %5 : vector<16x64xf32>
    %12 = arith.addf %5, %11 : vector<16x64xf32>
    %cst_7 = arith.constant 0.797884583 : f32
    %13 = vector.broadcast %cst_7 : f32 to vector<16x64xf32>
    %14 = arith.mulf %13, %12 : vector<16x64xf32>
    %15 = math.tanh %14 : vector<16x64xf32>
    %cst_8 = arith.constant 1.000000e+00 : f32
    %16 = vector.broadcast %cst_8 : f32 to vector<16x64xf32>
    %17 = arith.addf %16, %15 : vector<16x64xf32>
    %18 = arith.mulf %7, %17 : vector<16x64xf32>
    %19 = arith.truncf %18 : vector<16x64xf32> to vector<16x64xbf16>
    %c0_9 = arith.constant 0 : index
    %c0_10 = arith.constant 0 : index
    %20 = vector.load %arg6[%c0_9, %c0_10] : memref<16x64xbf16, #tpu.memory_space<vmem>>, vector<16x64xbf16>
    tpu.vector_store %arg6[%c0_9, %c0_10], %19 {strides = array<i32>} : memref<16x64xbf16, #tpu.memory_space<vmem>>, vector<16x64xbf16>,
    return
  }
  func.func @transform_0(%arg0: i32, %arg1: i32, %arg2: i32) -> (i32, i32) {
    %c0_i32 = arith.constant 0 : i32
    return %arg0, %arg2 : i32, i32
  }
  func.func @transform_1(%arg0: i32, %arg1: i32, %arg2: i32) -> (i32, i32) {
    %c0_i32 = arith.constant 0 : i32
    return %arg2, %arg1 : i32, i32
  }
  func.func @transform_2(%arg0: i32, %arg1: i32, %arg2: i32) -> (i32, i32) {
    %c0_i32 = arith.constant 0 : i32
    %c0_i32_0 = arith.constant 0 : i32
    return %c0_i32, %arg1 : i32, i32
  }
  func.func @transform_3(%arg0: i32, %arg1: i32, %arg2: i32) -> (i32, i32) {
    %c0_i32 = arith.constant 0 : i32
    return %arg0, %arg1 : i32, i32
  }
}

module attributes {stable_mosaic.version = 11 : i64} {
  func.func @_matmul_kernel(%arg0: i32, %arg1: i32, %arg2: i32, %arg3: memref<2x32xbf16, #tpu.memory_space<vmem>>, %arg4: memref<32x32xbf16, #tpu.memory_space<vmem>>, %arg5: memref<1x32xf32, #tpu.memory_space<vmem>>, %arg6: memref<2x32xbf16, #tpu.memory_space<vmem>>) attributes {dimension_semantics = [#tpu.dimension_semantics<parallel>, #tpu.dimension_semantics<parallel>, #tpu.dimension_semantics<arbitrary>], iteration_bounds = array<i64: 1, 1, 1>, scalar_prefetch = 0 : i64, scratch_operands = 0 : i64, tpu.core_type = #tpu.core_type<tc>, window_params = [{transform_indices = @transform_0, window_bounds = array<i64: 2, 32>}, {transform_indices = @transform_1, window_bounds = array<i64: 32, 32>}, {transform_indices = @transform_2, window_bounds = array<i64: 1, 32>}, {transform_indices = @transform_3, window_bounds = array<i64: 2, 32>}]} {
    %c0 = arith.constant 0 : index
    %c0_0 = arith.constant 0 : index
    %0 = vector.load %arg3[%c0, %c0_0] : memref<2x32xbf16, #tpu.memory_space<vmem>>, vector<2x32xbf16>
    %c0_1 = arith.constant 0 : index
    %c0_2 = arith.constant 0 : index
    %1 = vector.load %arg4[%c0_1, %c0_2] : memref<32x32xbf16, #tpu.memory_space<vmem>>, vector<32x32xbf16>
    %cst = arith.constant dense<0.000000e+00> : vector<2x32xf32>
    %2 = tpu.matmul %0, %1, %cst {dimension_numbers = #tpu.dot_dimension_numbers<[1], [0], [0], [1], [0, 0, 1, 1], [], []>} : vector<2x32xbf16>, vector<32x32xbf16>, vector<2x32xf32> -> vector<2x32xf32>
    %c0_3 = arith.constant 0 : index
    %c0_4 = arith.constant 0 : index
    %3 = vector.load %arg5[%c0_3, %c0_4] : memref<1x32xf32, #tpu.memory_space<vmem>>, vector<1x32xf32>
    %4 = vector.broadcast %3 : vector<1x32xf32> to vector<2x32xf32>
    %5 = arith.addf %2, %4 : vector<2x32xf32>
    %6 = math.tanh %5 : vector<2x32xf32>
    %7 = arith.truncf %6 : vector<2x32xf32> to vector<2x32xbf16>
    %c0_5 = arith.constant 0 : index
    %c0_6 = arith.constant 0 : index
    %8 = vector.load %arg6[%c0_5, %c0_6] : memref<2x32xbf16, #tpu.memory_space<vmem>>, vector<2x32xbf16>
    tpu.vector_store %arg6[%c0_5, %c0_6], %7 {strides = array<i32>} : memref<2x32xbf16, #tpu.memory_space<vmem>>, vector<2x32xbf16>,
    return
  }
  func.func @transform_0(%arg0: i32, %arg1: i32, %arg2: i32) -> (i32, i32) {
    %c0_i32 = arith.constant 0 : i32
    return %arg0, %arg2 : i32, i32
  }
  func.func @transform_1(%arg0: i32, %arg1: i32, %arg2: i32) -> (i32, i32) {
    %c0_i32 = arith.constant 0 : i32
    return %arg2, %arg1 : i32, i32
  }
  func.func @transform_2(%arg0: i32, %arg1: i32, %arg2: i32) -> (i32, i32) {
    %c0_i32 = arith.constant 0 : i32
    %c0_i32_0 = arith.constant 0 : i32
    return %c0_i32, %arg1 : i32, i32
  }
  func.func @transform_3(%arg0: i32, %arg1: i32, %arg2: i32) -> (i32, i32) {
    %c0_i32 = arith.constant 0 : i32
    return %arg0, %arg1 : i32, i32
  }
}

module attributes {stable_mosaic.version = 11 : i64} {
  func.func @_matmul_kernel(%arg0: i32, %arg1: i32, %arg2: i32, %arg3: memref<2x32xbf16, #tpu.memory_space<vmem>>, %arg4: memref<32x32xbf16, #tpu.memory_space<vmem>>, %arg5: memref<1x32xf32, #tpu.memory_space<vmem>>, %arg6: memref<1x32xf32, #tpu.memory_space<vmem>>, %arg7: memref<2x32xf32, #tpu.memory_space<vmem>>) attributes {dimension_semantics = [#tpu.dimension_semantics<parallel>, #tpu.dimension_semantics<parallel>, #tpu.dimension_semantics<arbitrary>], iteration_bounds = array<i64: 1, 1, 1>, scalar_prefetch = 0 : i64, scratch_operands = 0 : i64, tpu.core_type = #tpu.core_type<tc>, window_params = [{transform_indices = @transform_0, window_bounds = array<i64: 2, 32>}, {transform_indices = @transform_1, window_bounds = array<i64: 32, 32>}, {pipeline_mode = #tpu.pipeline_mode<synchronous>, transform_indices = @transform_2, window_bounds = array<i64: 1, 32>}, {pipeline_mode = #tpu.pipeline_mode<synchronous>, transform_indices = @transform_3, window_bounds = array<i64: 1, 32>}, {transform_indices = @transform_4, window_bounds = array<i64: 2, 32>}]} {
    %c0 = arith.constant 0 : index
    %c0_0 = arith.constant 0 : index
    %0 = vector.load %arg3[%c0, %c0_0] : memref<2x32xbf16, #tpu.memory_space<vmem>>, vector<2x32xbf16>
    %1 = arith.extf %0 : vector<2x32xbf16> to vector<2x32xf32>
    %cst = arith.constant dense<0.000000e+00> : vector<2xf32>
    %2 = vector.multi_reduction <add>, %1, %cst [1] : vector<2x32xf32> to vector<2xf32>
    %3 = vector.shape_cast %2 : vector<2xf32> to vector<2x1xf32>
    %cst_1 = arith.constant 3.200000e+01 : f32
    %4 = vector.broadcast %cst_1 : f32 to vector<2x1xf32>
    %5 = arith.divf %3, %4 : vector<2x1xf32>
    %6 = vector.broadcast %5 : vector<2x1xf32> to vector<2x32xf32>
    %7 = arith.subf %1, %6 : vector<2x32xf32>
    %8 = arith.mulf %7, %7 : vector<2x32xf32>
    %cst_2 = arith.constant dense<0.000000e+00> : vector<2xf32>
    %9 = vector.multi_reduction <add>, %8, %cst_2 [1] : vector<2x32xf32> to vector<2xf32>
    %10 = vector.shape_cast %9 : vector<2xf32> to vector<2x1xf32>
    %cst_3 = arith.constant 3.200000e+01 : f32
    %11 = vector.broadcast %cst_3 : f32 to vector<2x1xf32>
    %12 = arith.divf %10, %11 : vector<2x1xf32>
    %cst_4 = arith.constant 9.99999974E-6 : f32
    %13 = vector.broadcast %cst_4 : f32 to vector<2x1xf32>
    %14 = arith.addf %12, %13 : vector<2x1xf32>
    %15 = math.rsqrt %14 : vector<2x1xf32>
    %16 = vector.broadcast %15 : vector<2x1xf32> to vector<2x32xf32>
    %17 = arith.mulf %7, %16 : vector<2x32xf32>
    %c0_5 = arith.constant 0 : index
    %c0_6 = arith.constant 0 : index
    %18 = vector.load %arg5[%c0_5, %c0_6] : memref<1x32xf32, #tpu.memory_space<vmem>>, vector<1x32xf32>
    %19 = vector.broadcast %18 : vector<1x32xf32> to vector<2x32xf32>
    %20 = arith.mulf %17, %19 : vector<2x32xf32>
    %c0_7 = arith.constant 0 : index
    %c0_8 = arith.constant 0 : index
    %21 = vector.load %arg6[%c0_7, %c0_8] : memref<1x32xf32, #tpu.memory_space<vmem>>, vector<1x32xf32>
    %22 = vector.broadcast %21 : vector<1x32xf32> to vector<2x32xf32>
    %23 = arith.addf %20, %22 : vector<2x32xf32>
    %24 = arith.truncf %23 : vector<2x32xf32> to vector<2x32xbf16>
    %c0_9 = arith.constant 0 : index
    %c0_10 = arith.constant 0 : index
    %25 = vector.load %arg4[%c0_9, %c0_10] : memref<32x32xbf16, #tpu.memory_space<vmem>>, vector<32x32xbf16>
    %cst_11 = arith.constant dense<0.000000e+00> : vector<2x32xf32>
    %26 = tpu.matmul %24, %25, %cst_11 {dimension_numbers = #tpu.dot_dimension_numbers<[1], [0], [0], [1], [0, 0, 1, 1], [], []>} : vector<2x32xbf16>, vector<32x32xbf16>, vector<2x32xf32> -> vector<2x32xf32>
    %c0_12 = arith.constant 0 : index
    %c0_13 = arith.constant 0 : index
    %27 = vector.load %arg7[%c0_12, %c0_13] : memref<2x32xf32, #tpu.memory_space<vmem>>, vector<2x32xf32>
    tpu.vector_store %arg7[%c0_12, %c0_13], %26 {strides = array<i32>} : memref<2x32xf32, #tpu.memory_space<vmem>>, vector<2x32xf32>,
    return
  }
  func.func @transform_0(%arg0: i32, %arg1: i32, %arg2: i32) -> (i32, i32) {
    %c0_i32 = arith.constant 0 : i32
    return %arg0, %arg2 : i32, i32
  }
  func.func @transform_1(%arg0: i32, %arg1: i32, %arg2: i32) -> (i32, i32) {
    %c0_i32 = arith.constant 0 : i32
    return %arg2, %arg1 : i32, i32
  }
  func.func @transform_2(%arg0: i32, %arg1: i32, %arg2: i32) -> (i32, i32) {
    %c0_i32 = arith.constant 0 : i32
    %c0_i32_0 = arith.constant 0 : i32
    %c0_i32_1 = arith.constant 0 : i32
    return %c0_i32, %c0_i32_0 : i32, i32
  }
  func.func @transform_3(%arg0: i32, %arg1: i32, %arg2: i32) -> (i32, i32) {
    %c0_i32 = arith.constant 0 : i32
    %c0_i32_0 = arith.constant 0 : i32
    %c0_i32_1 = arith.constant 0 : i32
    return %c0_i32, %c0_i32_0 : i32, i32
  }
  func.func @transform_4(%arg0: i32, %arg1: i32, %arg2: i32) -> (i32, i32) {
    %c0_i32 = arith.constant 0 : i32
    return %arg0, %arg1 : i32, i32
  }
}

module attributes {stable_mosaic.version = 11 : i64} {
  func.func @_clip_logits_kernel(%arg0: memref<2x32xf32, #tpu.memory_space<vmem>>, %arg1: memref<2x32xf32, #tpu.memory_space<vmem>>, %arg2: memref<1x1xf32, #tpu.memory_space<smem>>, %arg3: memref<2x2xf32, #tpu.memory_space<vmem>>) attributes {dimension_semantics = [], scalar_prefetch = 0 : i64, scratch_operands = 0 : i64, tpu.core_type = #tpu.core_type<tc>} {
    %c0 = arith.constant 0 : index
    %c0_0 = arith.constant 0 : index
    %0 = vector.load %arg0[%c0, %c0_0] : memref<2x32xf32, #tpu.memory_space<vmem>>, vector<2x32xf32>
    %c0_1 = arith.constant 0 : index
    %c0_2 = arith.constant 0 : index
    %1 = vector.load %arg1[%c0_1, %c0_2] : memref<2x32xf32, #tpu.memory_space<vmem>>, vector<2x32xf32>
    %2 = arith.mulf %0, %0 : vector<2x32xf32>
    %cst = arith.constant dense<0.000000e+00> : vector<2xf32>
    %3 = vector.multi_reduction <add>, %2, %cst [1] : vector<2x32xf32> to vector<2xf32>
    %4 = vector.shape_cast %3 : vector<2xf32> to vector<2x1xf32>
    %5 = math.rsqrt %4 : vector<2x1xf32>
    %6 = vector.broadcast %5 : vector<2x1xf32> to vector<2x32xf32>
    %7 = arith.mulf %0, %6 : vector<2x32xf32>
    %8 = arith.mulf %1, %1 : vector<2x32xf32>
    %cst_3 = arith.constant dense<0.000000e+00> : vector<2xf32>
    %9 = vector.multi_reduction <add>, %8, %cst_3 [1] : vector<2x32xf32> to vector<2xf32>
    %10 = vector.shape_cast %9 : vector<2xf32> to vector<2x1xf32>
    %11 = math.rsqrt %10 : vector<2x1xf32>
    %12 = vector.broadcast %11 : vector<2x1xf32> to vector<2x32xf32>
    %13 = arith.mulf %1, %12 : vector<2x32xf32>
    %c0_4 = arith.constant 0 : index
    %c0_5 = arith.constant 0 : index
    %14 = memref.load %arg2[%c0_4, %c0_5] : memref<1x1xf32, #tpu.memory_space<smem>>
    %15 = math.exp %14 : f32
    %cst_6 = arith.constant dense<0.000000e+00> : vector<2x2xf32>
    %16 = tpu.matmul %7, %13, %cst_6 {dimension_numbers = #tpu.dot_dimension_numbers<[1], [1], [0], [0], [0, 0, 1, 0], [], []>} : vector<2x32xf32>, vector<2x32xf32>, vector<2x2xf32> -> vector<2x2xf32>
    %17 = vector.broadcast %15 : f32 to vector<2x2xf32>
    %18 = arith.mulf %17, %16 : vector<2x2xf32>
    %c0_7 = arith.constant 0 : index
    %c0_8 = arith.constant 0 : index
    %19 = vector.load %arg3[%c0_7, %c0_8] : memref<2x2xf32, #tpu.memory_space<vmem>>, vector<2x2xf32>
    tpu.vector_store %arg3[%c0_7, %c0_8], %18 {strides = array<i32>} : memref<2x2xf32, #tpu.memory_space<vmem>>, vector<2x2xf32>,
    return
  }
}

</mosaic_0001>

<llo_original>
// kernel: _lambda_.33
$region0: #{_lambda_.33}
  #allocation0 [shape = 'u32[]', space=smem, size = 0x4, offset = 0x4, fixed_abs, tag = 'smem constant byte address 0x4 - core index']
  #allocation1 [shape = 'u32[144,128]{1,0:T(1,128)}', space=vmem, size = 0x12000, scoped, tag = 'internal scratch']
  %s0 = inlined_call_operand.vmem [shape: bf16[16,64], index: 0, kind: input, shape index: {}]
  %s1 = inlined_call_operand.vmem [shape: bf16[64,192], index: 1, kind: input, shape index: {}]
  %s2 = inlined_call_operand.vmem [shape: f32[1,64], index: 2, kind: input, shape index: {}]
  %s3 = inlined_call_operand.vmem [shape: f32[1,64], index: 3, kind: input, shape index: {}]
  %s4 = inlined_call_operand.vmem [shape: f32[1,192], index: 4, kind: input, shape index: {}]
  %s5 = inlined_call_operand.vmem [shape: bf16[16,192], index: 5, kind: output, shape index: {}]
  %s6 = sld [smem:[#allocation0]]
  $region30: #{_lambda_.33} parent=0
    _
  %s8 = ssub.s32 1, %s6
  %s9 = scalar_select 0, %s8, %s6
  // Predicated region
  $region2: #{_lambda_.33} parent=0 // pred_check
    _
  $region3: #{_lambda_.33} parent=0 // pred_check_branch
    %11 = sbr.rel (0) target = $region5
  $region4: #{_lambda_.33} parent=0 // pred_region
    _
  $region5: #{_lambda_.33} parent=0 // pred_fallthru
    _
  // Predicated region
  $region6: #{_lambda_.33} parent=0 // pred_check
    _
  $region7: #{_lambda_.33} parent=0 // pred_check_branch
    %13 = sbr.rel (0) target = $region9
  $region8: #{_lambda_.33} parent=0 // pred_region
    _
  $region9: #{_lambda_.33} parent=0 // pred_fallthru
    _
  // Predicated region
  $region10: #{_lambda_.33} parent=0 // pred_check
    _
  $region11: #{_lambda_.33} parent=0 // pred_check_branch
    %15 = sbr.rel (0) target = $region13
  $region12: #{_lambda_.33} parent=0 // pred_region
    _
  $region13: #{_lambda_.33} parent=0 // pred_fallthru
    _
  // Predicated region
  $region14: #{_lambda_.33} parent=0 // pred_check
    _
  $region15: #{_lambda_.33} parent=0 // pred_check_branch
    %17 = sbr.rel (0) target = $region17
  $region16: #{_lambda_.33} parent=0 // pred_region
    _
  $region17: #{_lambda_.33} parent=0 // pred_fallthru
    _
  // Predicated region
  $region18: #{_lambda_.33} parent=0 // pred_check
    _
  $region19: #{_lambda_.33} parent=0 // pred_check_branch
    %19 = sbr.rel (0) target = $region21
  $region20: #{_lambda_.33} parent=0 // pred_region
    _
  $region21: #{_lambda_.33} parent=0 // pred_fallthru
    _
  %v21 = vld [vmem:[%s0] sm:$0xf]
  %v22 = vld [vmem:[%s0 + $0x4] sm:$0xf]
  %v23 = vunpack.c.l.bf16 %v21
  %v24 = vunpack.c.l.bf16 %v22
  %vm25 = vcmask 523264
  %v26 = vsel %vm25, %v23, 0.0
  %27 = vadd.xlane.f32.xlu0 %v26
  %v28 = vpop.xlane.xlu0 %27
  %v29 = vsel %vm25, %v24, 0.0
  %30 = vadd.xlane.f32.xlu0 %v29
  %v31 = vpop.xlane.xlu0 %30
  %v32 = vrcp.pop 64.0
  %v33 = vmul.f32 %v28, %v32
  %v34 = vmul.f32 %v31, %v32
  %v35 = vsub.f32 %v23, %v33
  %v36 = vsub.f32 %v24, %v34
  %v37 = vmul.f32 %v35, %v35
  %v38 = vmul.f32 %v36, %v36
  %v39 = vsel %vm25, %v37, 0.0
  %40 = vadd.xlane.f32.xlu0 %v39
  %v41 = vpop.xlane.xlu0 %40
  %v42 = vsel %vm25, %v38, 0.0
  %43 = vadd.xlane.f32.xlu0 %v42
  %v44 = vpop.xlane.xlu0 %43
  %v45 = vmul.f32 %v41, %v32
  %v46 = vmul.f32 %v44, %v32
  %v47 = vadd.f32 %v45, 1e-05
  %v48 = vadd.f32 %v46, 1e-05
  %v49 = vrsqrt.pop %v47
  %v50 = vrsqrt.pop %v48
  %v51 = vmul.f32 %v35, %v49
  %v52 = vmul.f32 %v36, %v50
  %v53 = vld [vmem:[%s2] sm:$0x1]
  %v55 = vlaneseq
  %v56 = vshrl.u32 %v55, 7
  %v57 = vsub.s32 0, %v56
  %v58 = vrot.slane %v53, %v57
  %v60 = vmul.f32 %v51, %v58
  %v61 = vmul.f32 %v52, %v58
  %v62 = vld [vmem:[%s3] sm:$0x1]
  %v64 = vlaneseq
  %v65 = vshrl.u32 %v64, 7
  %v66 = vsub.s32 0, %v65
  %v67 = vrot.slane %v62, %v66
  %v69 = vadd.f32 %v60, %v67
  %v70 = vadd.f32 %v61, %v67
  %v71 = vpack.c.bf16 %v70, %v69
  %v72 = vld [vmem:[%s1] sm:$0xff]
  %v73 = vld [vmem:[%s1 + $0x8] sm:$0xff]
  %v74 = vld [vmem:[%s1 + $0x10] sm:$0xff]
  %v75 = vld [vmem:[%s1 + $0x18] sm:$0xff]
  %v76 = vld [vmem:[%s1 + $0x20] sm:$0xff]
  %v77 = vld [vmem:[%s1 + $0x28] sm:$0xff]
  %v78 = vld [vmem:[%s1 + $0x30] sm:$0xff]
  %v79 = vld [vmem:[%s1 + $0x38] sm:$0xff]
  %v80 = vld [vmem:[%s4] sm:$0x3]
  %v82 = vlaneseq
  %v83 = vshrl.u32 %v82, 7
  %v84 = vsub.s32 0, %v83
  %v85 = vrot.slane %v80, %v84
  %v86 = vlaneseq
  %v87 = vshrl.u32 %v86, 7
  %v88 = vsub.s32 1, %v87
  %v89 = vrot.slane %v80, %v88
  %v100 = vunpack.c.l.b16 %v72
  %v101 = vunpack.c.h.b16 %v72
  %v102 = vunpack.c.l.b16 %v73
  %v103 = vunpack.c.h.b16 %v73
  %v104 = vunpack.c.l.b16 %v74
  %v105 = vunpack.c.h.b16 %v74
  %v106 = vunpack.c.l.b16 %v75
  %v107 = vunpack.c.h.b16 %v75
  %v108 = vunpack.c.l.b16 %v76
  %v109 = vunpack.c.h.b16 %v76
  %v110 = vunpack.c.l.b16 %v77
  %v111 = vunpack.c.h.b16 %v77
  %v112 = vunpack.c.l.b16 %v78
  %v113 = vunpack.c.h.b16 %v78
  %v114 = vunpack.c.l.b16 %v79
  %v115 = vunpack.c.h.b16 %v79
  %v116 = vpack.c.b16 %v102, %v100
  %v117 = vpack.c.b16 %v103, %v101
  %v118 = vpack.c.b16 %v106, %v104
  %v119 = vpack.c.b16 %v107, %v105
  %v120 = vpack.c.b16 %v110, %v108
  %v121 = vpack.c.b16 %v111, %v109
  %v122 = vpack.c.b16 %v114, %v112
  %v123 = vpack.c.b16 %v115, %v113
  %v133 = vsel %vm25, %v71, 0
  %135 = vmatprep.subr.bf16.mxu0 0
  %136 = vmatpush1.bf16.msra.mxu0 0
  %137 = vmatprep.subr.bf16.mxu0 0
  %138 = vmatpush1.bf16.msra.mxu0 0
  %139 = vmatprep.subr.bf16.mxu0 0
  %140 = vmatpush1.bf16.msra.mxu0 0
  %141 = vmatprep.subr.bf16.mxu0 0
  %142 = vmatpush1.bf16.msra.mxu0 0
  %143 = vmatprep.subr.bf16.mxu0 %v123
  %144 = vmatpush1.bf16.msra.mxu0 %v122
  %145 = vmatprep.subr.bf16.mxu0 %v121
  %146 = vmatpush1.bf16.msra.mxu0 %v120
  %147 = vmatprep.subr.bf16.mxu0 %v119
  %148 = vmatpush1.bf16.msra.mxu0 %v118
  %149 = vmatprep.subr.bf16.mxu0 %v117
  %150 = vmatpush1.bf16.msra.mxu0 %v116
  %151 = vmatprep.subr.bf16.mxu0 0
  %152 = vmatpush2.bf16.msra.mxu0 0
  %153 = vmatprep.subr.bf16.mxu0 0
  %154 = vmatpush2.bf16.msra.mxu0 0
  %155 = vmatprep.subr.bf16.mxu0 0
  %156 = vmatpush2.bf16.msra.mxu0 0
  %157 = vmatprep.subr.bf16.mxu0 0
  %158 = vmatpush2.bf16.msra.mxu0 0
  %159 = vmatprep.subr.bf16.mxu0 0
  %160 = vmatpush2.bf16.msra.mxu0 0
  %161 = vmatprep.subr.bf16.mxu0 0
  %162 = vmatpush2.bf16.msra.mxu0 0
  %163 = vmatprep.subr.bf16.mxu0 0
  %164 = vmatpush2.bf16.msra.mxu0 0
  %165 = vmatprep.subr.bf16.mxu0 0
  %166 = vmatpush2.bf16.msra.mxu0 0
  %167 = vmatprep.mubr.bf16.mxu0 0
  %168 = vmatmul.mubr.bf16.gmra.mxu0 %v133
  %v169 = vpop.f32.mrf.mxu0
  %v170 = vadd.f32 %v85, %v169
  %v171 = vpop.f32.mrf.mxu0
  %v172 = vadd.f32 %v89, %v171
  %v173 = vpop.f32.mrf.mxu0
  %v174 = vadd.f32 %v85, %v173
  %v175 = vpop.f32.mrf.mxu0
  %v176 = vadd.f32 %v89, %v175
  %177 = vdwg.mxu0
  %v178 = vpack.c.bf16 %v174, %v170
  %v179 = vpack.c.bf16 %v176, %v172
  %v182 = vunpack.c.l.b16 %v178
  %v183 = vunpack.c.l.b16 %v179
  %v184 = vunpack.c.h.b16 %v178
  %v185 = vunpack.c.h.b16 %v179
  %v186 = vpack.c.b16 %v183, %v182
  %v187 = vpack.c.b16 %v185, %v184
  %vm190 = vcmask 1043456
  %vm191 = vcmask 523268
  %vm192 = vmor %vm191, %vm190
  %193 = vst.msk [vmem:[%s5] sm:$0xff] %vm192, %v186
  %194 = vst.msk [vmem:[%s5 + $0x8] sm:$0xff] %vm192, %v187
  // Predicated region
  $region22: #{_lambda_.33} parent=0 // pred_check
    _
  $region23: #{_lambda_.33} parent=0 // pred_check_branch
    %196 = sbr.rel (0) target = $region25
  $region24: #{_lambda_.33} parent=0 // pred_region
    _
  $region25: #{_lambda_.33} parent=0 // pred_fallthru
    _
  // Predicated region
  $region26: #{_lambda_.33} parent=0 // pred_check
    _
  $region27: #{_lambda_.33} parent=0 // pred_check_branch
    %198 = sbr.rel (0) target = $region29
  $region28: #{_lambda_.33} parent=0 // pred_region
    _
  $region29: #{_lambda_.33} parent=0 // pred_fallthru
    _

// kernel: _lambda_.32
$region0: #{_lambda_.32}
  #allocation0 [shape = 'u32[]', space=smem, size = 0x4, offset = 0x4, fixed_abs, tag = 'smem constant byte address 0x4 - core index']
  #allocation1 [shape = 'u32[144,128]{1,0:T(1,128)}', space=vmem, size = 0x12000, scoped, tag = 'internal scratch']
  %s0 = inlined_call_operand.vmem [shape: bf16[16,64], index: 0, kind: input, shape index: {}]
  %s1 = inlined_call_operand.vmem [shape: f32[1,64], index: 1, kind: input, shape index: {}]
  %s2 = inlined_call_operand.vmem [shape: f32[1,64], index: 2, kind: input, shape index: {}]
  %s3 = inlined_call_operand.vmem [shape: bf16[16,64], index: 3, kind: output, shape index: {}]
  %s4 = sld [smem:[#allocation0]]
  $region22: #{_lambda_.32} parent=0
    _
  %s6 = ssub.s32 1, %s4
  %s7 = scalar_select 0, %s6, %s4
  // Predicated region
  $region2: #{_lambda_.32} parent=0 // pred_check
    _
  $region3: #{_lambda_.32} parent=0 // pred_check_branch
    %9 = sbr.rel (0) target = $region5
  $region4: #{_lambda_.32} parent=0 // pred_region
    _
  $region5: #{_lambda_.32} parent=0 // pred_fallthru
    _
  // Predicated region
  $region6: #{_lambda_.32} parent=0 // pred_check
    _
  $region7: #{_lambda_.32} parent=0 // pred_check_branch
    %11 = sbr.rel (0) target = $region9
  $region8: #{_lambda_.32} parent=0 // pred_region
    _
  $region9: #{_lambda_.32} parent=0 // pred_fallthru
    _
  // Predicated region
  $region10: #{_lambda_.32} parent=0 // pred_check
    _
  $region11: #{_lambda_.32} parent=0 // pred_check_branch
    %13 = sbr.rel (0) target = $region13
  $region12: #{_lambda_.32} parent=0 // pred_region
    _
  $region13: #{_lambda_.32} parent=0 // pred_fallthru
    _
  %v14 = vld [vmem:[%s0] sm:$0xf]
  %v15 = vld [vmem:[%s0 + $0x4] sm:$0xf]
  %v16 = vunpack.c.l.bf16 %v14
  %v17 = vunpack.c.l.bf16 %v15
  %vm18 = vcmask 523264
  %v19 = vsel %vm18, %v16, 0.0
  %20 = vadd.xlane.f32.xlu0 %v19
  %v21 = vpop.xlane.xlu0 %20
  %v22 = vsel %vm18, %v17, 0.0
  %23 = vadd.xlane.f32.xlu0 %v22
  %v24 = vpop.xlane.xlu0 %23
  %v25 = vrcp.pop 64.0
  %v26 = vmul.f32 %v21, %v25
  %v27 = vmul.f32 %v24, %v25
  %v28 = vsub.f32 %v16, %v26
  %v29 = vsub.f32 %v17, %v27
  %v30 = vmul.f32 %v28, %v28
  %v31 = vmul.f32 %v29, %v29
  %v32 = vsel %vm18, %v30, 0.0
  %33 = vadd.xlane.f32.xlu0 %v32
  %v34 = vpop.xlane.xlu0 %33
  %v35 = vsel %vm18, %v31, 0.0
  %36 = vadd.xlane.f32.xlu0 %v35
  %v37 = vpop.xlane.xlu0 %36
  %v38 = vmul.f32 %v34, %v25
  %v39 = vmul.f32 %v37, %v25
  %v40 = vadd.f32 %v38, 1e-05
  %v41 = vadd.f32 %v39, 1e-05
  %v42 = vrsqrt.pop %v40
  %v43 = vrsqrt.pop %v41
  %v44 = vmul.f32 %v28, %v42
  %v45 = vmul.f32 %v29, %v43
  %v46 = vld [vmem:[%s1] sm:$0x1]
  %v48 = vlaneseq
  %v49 = vshrl.u32 %v48, 7
  %v50 = vsub.s32 0, %v49
  %v51 = vrot.slane %v46, %v50
  %v53 = vmul.f32 %v44, %v51
  %v54 = vmul.f32 %v45, %v51
  %v55 = vld [vmem:[%s2] sm:$0x1]
  %v57 = vlaneseq
  %v58 = vshrl.u32 %v57, 7
  %v59 = vsub.s32 0, %v58
  %v60 = vrot.slane %v55, %v59
  %v62 = vadd.f32 %v53, %v60
  %v63 = vadd.f32 %v54, %v60
  %v64 = vpack.c.bf16 %v63, %v62
  %v66 = vunpack.c.l.b16 %v64
  %v67 = vunpack.c.h.b16 %v64
  %v68 = vpack.c.b16 %v66, %v66
  %v69 = vpack.c.b16 %v67, %v67
  %vm72 = vcmask 519168
  %73 = vst.msk [vmem:[%s3] sm:$0xf] %vm72, %v68
  %74 = vst.msk [vmem:[%s3 + $0x4] sm:$0xf] %vm72, %v69
  // Predicated region
  $region14: #{_lambda_.32} parent=0 // pred_check
    _
  $region15: #{_lambda_.32} parent=0 // pred_check_branch
    %76 = sbr.rel (0) target = $region17
  $region16: #{_lambda_.32} parent=0 // pred_region
    _
  $region17: #{_lambda_.32} parent=0 // pred_fallthru
    _
  // Predicated region
  $region18: #{_lambda_.32} parent=0 // pred_check
    _
  $region19: #{_lambda_.32} parent=0 // pred_check_branch
    %78 = sbr.rel (0) target = $region21
  $region20: #{_lambda_.32} parent=0 // pred_region
    _
  $region21: #{_lambda_.32} parent=0 // pred_fallthru
    _

// kernel: _lambda_.31
$region0: #{_lambda_.31}
  #allocation0 [shape = 'u32[]', space=smem, size = 0x4, offset = 0x4, fixed_abs, tag = 'smem constant byte address 0x4 - core index']
  #allocation1 [shape = 'u32[144,128]{1,0:T(1,128)}', space=vmem, size = 0x12000, scoped, tag = 'internal scratch']
  %s0 = inlined_call_operand.vmem [shape: bf16[8,768], index: 0, kind: input, shape index: {}]
  %s1 = inlined_call_operand.vmem [shape: bf16[768,64], index: 1, kind: input, shape index: {}]
  %s2 = inlined_call_operand.vmem [shape: f32[8,64], index: 2, kind: output, shape index: {}]
  %s3 = sld [smem:[#allocation0]]
  $region18: #{_lambda_.31} parent=0
    _
  %s5 = ssub.s32 1, %s3
  %s6 = scalar_select 0, %s5, %s3
  // Predicated region
  $region2: #{_lambda_.31} parent=0 // pred_check
    _
  $region3: #{_lambda_.31} parent=0 // pred_check_branch
    %8 = sbr.rel (0) target = $region5
  $region4: #{_lambda_.31} parent=0 // pred_region
    _
  $region5: #{_lambda_.31} parent=0 // pred_fallthru
    _
  // Predicated region
  $region6: #{_lambda_.31} parent=0 // pred_check
    _
  $region7: #{_lambda_.31} parent=0 // pred_check_branch
    %10 = sbr.rel (0) target = $region9
  $region8: #{_lambda_.31} parent=0 // pred_region
    _
  $region9: #{_lambda_.31} parent=0 // pred_fallthru
    _
  %v12 = vld [vmem:[%s0] sm:$0xff]
  %v13 = vld [vmem:[%s0 + $0x8] sm:$0xff]
  %v14 = vld [vmem:[%s0 + $0x10] sm:$0xff]
  %v15 = vld [vmem:[%s1] sm:$0xf]
  %v16 = vld [vmem:[%s1 + $0x4] sm:$0xf]
  %v17 = vld [vmem:[%s1 + $0x8] sm:$0xf]
  %v18 = vld [vmem:[%s1 + $0xc] sm:$0xf]
  %v19 = vld [vmem:[%s1 + $0x10] sm:$0xf]
  %v20 = vld [vmem:[%s1 + $0x14] sm:$0xf]
  %v21 = vld [vmem:[%s1 + $0x18] sm:$0xf]
  %v22 = vld [vmem:[%s1 + $0x1c] sm:$0xf]
  %v23 = vld [vmem:[%s1 + $0x20] sm:$0xf]
  %v24 = vld [vmem:[%s1 + $0x24] sm:$0xf]
  %v25 = vld [vmem:[%s1 + $0x28] sm:$0xf]
  %v26 = vld [vmem:[%s1 + $0x2c] sm:$0xf]
  %v27 = vld [vmem:[%s1 + $0x30] sm:$0xf]
  %v28 = vld [vmem:[%s1 + $0x34] sm:$0xf]
  %v29 = vld [vmem:[%s1 + $0x38] sm:$0xf]
  %v30 = vld [vmem:[%s1 + $0x3c] sm:$0xf]
  %v31 = vld [vmem:[%s1 + $0x40] sm:$0xf]
  %v32 = vld [vmem:[%s1 + $0x44] sm:$0xf]
  %v33 = vld [vmem:[%s1 + $0x48] sm:$0xf]
  %v34 = vld [vmem:[%s1 + $0x4c] sm:$0xf]
  %v35 = vld [vmem:[%s1 + $0x50] sm:$0xf]
  %v36 = vld [vmem:[%s1 + $0x54] sm:$0xf]
  %v37 = vld [vmem:[%s1 + $0x58] sm:$0xf]
  %v38 = vld [vmem:[%s1 + $0x5c] sm:$0xf]
  %v39 = vld [vmem:[%s1 + $0x60] sm:$0xf]
  %v40 = vld [vmem:[%s1 + $0x64] sm:$0xf]
  %v41 = vld [vmem:[%s1 + $0x68] sm:$0xf]
  %v42 = vld [vmem:[%s1 + $0x6c] sm:$0xf]
  %v43 = vld [vmem:[%s1 + $0x70] sm:$0xf]
  %v44 = vld [vmem:[%s1 + $0x74] sm:$0xf]
  %v45 = vld [vmem:[%s1 + $0x78] sm:$0xf]
  %v46 = vld [vmem:[%s1 + $0x7c] sm:$0xf]
  %v47 = vld [vmem:[%s1 + $0x80] sm:$0xf]
  %v48 = vld [vmem:[%s1 + $0x84] sm:$0xf]
  %v49 = vld [vmem:[%s1 + $0x88] sm:$0xf]
  %v50 = vld [vmem:[%s1 + $0x8c] sm:$0xf]
  %v51 = vld [vmem:[%s1 + $0x90] sm:$0xf]
  %v52 = vld [vmem:[%s1 + $0x94] sm:$0xf]
  %v53 = vld [vmem:[%s1 + $0x98] sm:$0xf]
  %v54 = vld [vmem:[%s1 + $0x9c] sm:$0xf]
  %v55 = vld [vmem:[%s1 + $0xa0] sm:$0xf]
  %v56 = vld [vmem:[%s1 + $0xa4] sm:$0xf]
  %v57 = vld [vmem:[%s1 + $0xa8] sm:$0xf]
  %v58 = vld [vmem:[%s1 + $0xac] sm:$0xf]
  %v59 = vld [vmem:[%s1 + $0xb0] sm:$0xf]
  %v60 = vld [vmem:[%s1 + $0xb4] sm:$0xf]
  %v61 = vld [vmem:[%s1 + $0xb8] sm:$0xf]
  %v62 = vld [vmem:[%s1 + $0xbc] sm:$0xf]
  %v63 = vld [vmem:[%s1 + $0xc0] sm:$0xf]
  %v64 = vld [vmem:[%s1 + $0xc4] sm:$0xf]
  %v65 = vld [vmem:[%s1 + $0xc8] sm:$0xf]
  %v66 = vld [vmem:[%s1 + $0xcc] sm:$0xf]
  %v67 = vld [vmem:[%s1 + $0xd0] sm:$0xf]
  %v68 = vld [vmem:[%s1 + $0xd4] sm:$0xf]
  %v69 = vld [vmem:[%s1 + $0xd8] sm:$0xf]
  %v70 = vld [vmem:[%s1 + $0xdc] sm:$0xf]
  %v71 = vld [vmem:[%s1 + $0xe0] sm:$0xf]
  %v72 = vld [vmem:[%s1 + $0xe4] sm:$0xf]
  %v73 = vld [vmem:[%s1 + $0xe8] sm:$0xf]
  %v74 = vld [vmem:[%s1 + $0xec] sm:$0xf]
  %v75 = vld [vmem:[%s1 + $0xf0] sm:$0xf]
  %v76 = vld [vmem:[%s1 + $0xf4] sm:$0xf]
  %v77 = vld [vmem:[%s1 + $0xf8] sm:$0xf]
  %v78 = vld [vmem:[%s1 + $0xfc] sm:$0xf]
  %v79 = vld [vmem:[%s1 + $0x100] sm:$0xf]
  %v80 = vld [vmem:[%s1 + $0x104] sm:$0xf]
  %v81 = vld [vmem:[%s1 + $0x108] sm:$0xf]
  %v82 = vld [vmem:[%s1 + $0x10c] sm:$0xf]
  %v83 = vld [vmem:[%s1 + $0x110] sm:$0xf]
  %v84 = vld [vmem:[%s1 + $0x114] sm:$0xf]
  %v85 = vld [vmem:[%s1 + $0x118] sm:$0xf]
  %v86 = vld [vmem:[%s1 + $0x11c] sm:$0xf]
  %v87 = vld [vmem:[%s1 + $0x120] sm:$0xf]
  %v88 = vld [vmem:[%s1 + $0x124] sm:$0xf]
  %v89 = vld [vmem:[%s1 + $0x128] sm:$0xf]
  %v90 = vld [vmem:[%s1 + $0x12c] sm:$0xf]
  %v91 = vld [vmem:[%s1 + $0x130] sm:$0xf]
  %v92 = vld [vmem:[%s1 + $0x134] sm:$0xf]
  %v93 = vld [vmem:[%s1 + $0x138] sm:$0xf]
  %v94 = vld [vmem:[%s1 + $0x13c] sm:$0xf]
  %v95 = vld [vmem:[%s1 + $0x140] sm:$0xf]
  %v96 = vld [vmem:[%s1 + $0x144] sm:$0xf]
  %v97 = vld [vmem:[%s1 + $0x148] sm:$0xf]
  %v98 = vld [vmem:[%s1 + $0x14c] sm:$0xf]
  %v99 = vld [vmem:[%s1 + $0x150] sm:$0xf]
  %v100 = vld [vmem:[%s1 + $0x154] sm:$0xf]
  %v101 = vld [vmem:[%s1 + $0x158] sm:$0xf]
  %v102 = vld [vmem:[%s1 + $0x15c] sm:$0xf]
  %v103 = vld [vmem:[%s1 + $0x160] sm:$0xf]
  %v104 = vld [vmem:[%s1 + $0x164] sm:$0xf]
  %v105 = vld [vmem:[%s1 + $0x168] sm:$0xf]
  %v106 = vld [vmem:[%s1 + $0x16c] sm:$0xf]
  %v107 = vld [vmem:[%s1 + $0x170] sm:$0xf]
  %v108 = vld [vmem:[%s1 + $0x174] sm:$0xf]
  %v109 = vld [vmem:[%s1 + $0x178] sm:$0xf]
  %v110 = vld [vmem:[%s1 + $0x17c] sm:$0xf]
  %v114 = vunpack.c.l.b16 %v12
  %v115 = vunpack.c.h.b16 %v12
  %v116 = vunpack.c.l.b16 %v13
  %v117 = vunpack.c.h.b16 %v13
  %v118 = vunpack.c.l.b16 %v14
  %v119 = vunpack.c.h.b16 %v14
  %v120 = vpack.c.b16 %v114, %v114
  %v121 = vpack.c.b16 %v115, %v115
  %v122 = vpack.c.b16 %v116, %v116
  %v123 = vpack.c.b16 %v117, %v117
  %v124 = vpack.c.b16 %v118, %v118
  %v125 = vpack.c.b16 %v119, %v119
  %v228 = vunpack.c.l.b16 %v15
  %v229 = vunpack.c.l.b16 %v16
  %v230 = vunpack.c.l.b16 %v17
  %v231 = vunpack.c.l.b16 %v18
  %v232 = vunpack.c.l.b16 %v19
  %v233 = vunpack.c.l.b16 %v20
  %v234 = vunpack.c.l.b16 %v21
  %v235 = vunpack.c.l.b16 %v22
  %v236 = vunpack.c.l.b16 %v23
  %v237 = vunpack.c.l.b16 %v24
  %v238 = vunpack.c.l.b16 %v25
  %v239 = vunpack.c.l.b16 %v26
  %v240 = vunpack.c.l.b16 %v27
  %v241 = vunpack.c.l.b16 %v28
  %v242 = vunpack.c.l.b16 %v29
  %v243 = vunpack.c.l.b16 %v30
  %v244 = vunpack.c.l.b16 %v31
  %v245 = vunpack.c.l.b16 %v32
  %v246 = vunpack.c.l.b16 %v33
  %v247 = vunpack.c.l.b16 %v34
  %v248 = vunpack.c.l.b16 %v35
  %v249 = vunpack.c.l.b16 %v36
  %v250 = vunpack.c.l.b16 %v37
  %v251 = vunpack.c.l.b16 %v38
  %v252 = vunpack.c.l.b16 %v39
  %v253 = vunpack.c.l.b16 %v40
  %v254 = vunpack.c.l.b16 %v41
  %v255 = vunpack.c.l.b16 %v42
  %v256 = vunpack.c.l.b16 %v43
  %v257 = vunpack.c.l.b16 %v44
  %v258 = vunpack.c.l.b16 %v45
  %v259 = vunpack.c.l.b16 %v46
  %v260 = vunpack.c.l.b16 %v47
  %v261 = vunpack.c.l.b16 %v48
  %v262 = vunpack.c.l.b16 %v49
  %v263 = vunpack.c.l.b16 %v50
  %v264 = vunpack.c.l.b16 %v51
  %v265 = vunpack.c.l.b16 %v52
  %v266 = vunpack.c.l.b16 %v53
  %v267 = vunpack.c.l.b16 %v54
  %v268 = vunpack.c.l.b16 %v55
  %v269 = vunpack.c.l.b16 %v56
  %v270 = vunpack.c.l.b16 %v57
  %v271 = vunpack.c.l.b16 %v58
  %v272 = vunpack.c.l.b16 %v59
  %v273 = vunpack.c.l.b16 %v60
  %v274 = vunpack.c.l.b16 %v61
  %v275 = vunpack.c.l.b16 %v62
  %v276 = vunpack.c.l.b16 %v63
  %v277 = vunpack.c.l.b16 %v64
  %v278 = vunpack.c.l.b16 %v65
  %v279 = vunpack.c.l.b16 %v66
  %v280 = vunpack.c.l.b16 %v67
  %v281 = vunpack.c.l.b16 %v68
  %v282 = vunpack.c.l.b16 %v69
  %v283 = vunpack.c.l.b16 %v70
  %v284 = vunpack.c.l.b16 %v71
  %v285 = vunpack.c.l.b16 %v72
  %v286 = vunpack.c.l.b16 %v73
  %v287 = vunpack.c.l.b16 %v74
  %v288 = vunpack.c.l.b16 %v75
  %v289 = vunpack.c.l.b16 %v76
  %v290 = vunpack.c.l.b16 %v77
  %v291 = vunpack.c.l.b16 %v78
  %v292 = vunpack.c.l.b16 %v79
  %v293 = vunpack.c.l.b16 %v80
  %v294 = vunpack.c.l.b16 %v81
  %v295 = vunpack.c.l.b16 %v82
  %v296 = vunpack.c.l.b16 %v83
  %v297 = vunpack.c.l.b16 %v84
  %v298 = vunpack.c.l.b16 %v85
  %v299 = vunpack.c.l.b16 %v86
  %v300 = vunpack.c.l.b16 %v87
  %v301 = vunpack.c.l.b16 %v88
  %v302 = vunpack.c.l.b16 %v89
  %v303 = vunpack.c.l.b16 %v90
  %v304 = vunpack.c.l.b16 %v91
  %v305 = vunpack.c.l.b16 %v92
  %v306 = vunpack.c.l.b16 %v93
  %v307 = vunpack.c.l.b16 %v94
  %v308 = vunpack.c.l.b16 %v95
  %v309 = vunpack.c.l.b16 %v96
  %v310 = vunpack.c.l.b16 %v97
  %v311 = vunpack.c.l.b16 %v98
  %v312 = vunpack.c.l.b16 %v99
  %v313 = vunpack.c.l.b16 %v100
  %v314 = vunpack.c.l.b16 %v101
  %v315 = vunpack.c.l.b16 %v102
  %v316 = vunpack.c.l.b16 %v103
  %v317 = vunpack.c.l.b16 %v104
  %v318 = vunpack.c.l.b16 %v105
  %v319 = vunpack.c.l.b16 %v106
  %v320 = vunpack.c.l.b16 %v107
  %v321 = vunpack.c.l.b16 %v108
  %v322 = vunpack.c.l.b16 %v109
  %v323 = vunpack.c.l.b16 %v110
  %v324 = vpack.c.b16 %v229, %v228
  %v325 = vpack.c.b16 %v231, %v230
  %v326 = vpack.c.b16 %v233, %v232
  %v327 = vpack.c.b16 %v235, %v234
  %v328 = vpack.c.b16 %v237, %v236
  %v329 = vpack.c.b16 %v239, %v238
  %v330 = vpack.c.b16 %v241, %v240
  %v331 = vpack.c.b16 %v243, %v242
  %v332 = vpack.c.b16 %v245, %v244
  %v333 = vpack.c.b16 %v247, %v246
  %v334 = vpack.c.b16 %v249, %v248
  %v335 = vpack.c.b16 %v251, %v250
  %v336 = vpack.c.b16 %v253, %v252
  %v337 = vpack.c.b16 %v255, %v254
  %v338 = vpack.c.b16 %v257, %v256
  %v339 = vpack.c.b16 %v259, %v258
  %v340 = vpack.c.b16 %v261, %v260
  %v341 = vpack.c.b16 %v263, %v262
  %v342 = vpack.c.b16 %v265, %v264
  %v343 = vpack.c.b16 %v267, %v266
  %v344 = vpack.c.b16 %v269, %v268
  %v345 = vpack.c.b16 %v271, %v270
  %v346 = vpack.c.b16 %v273, %v272
  %v347 = vpack.c.b16 %v275, %v274
  %v348 = vpack.c.b16 %v277, %v276
  %v349 = vpack.c.b16 %v279, %v278
  %v350 = vpack.c.b16 %v281, %v280
  %v351 = vpack.c.b16 %v283, %v282
  %v352 = vpack.c.b16 %v285, %v284
  %v353 = vpack.c.b16 %v287, %v286
  %v354 = vpack.c.b16 %v289, %v288
  %v355 = vpack.c.b16 %v291, %v290
  %v356 = vpack.c.b16 %v293, %v292
  %v357 = vpack.c.b16 %v295, %v294
  %v358 = vpack.c.b16 %v297, %v296
  %v359 = vpack.c.b16 %v299, %v298
  %v360 = vpack.c.b16 %v301, %v300
  %v361 = vpack.c.b16 %v303, %v302
  %v362 = vpack.c.b16 %v305, %v304
  %v363 = vpack.c.b16 %v307, %v306
  %v364 = vpack.c.b16 %v309, %v308
  %v365 = vpack.c.b16 %v311, %v310
  %v366 = vpack.c.b16 %v313, %v312
  %v367 = vpack.c.b16 %v315, %v314
  %v368 = vpack.c.b16 %v317, %v316
  %v369 = vpack.c.b16 %v319, %v318
  %v370 = vpack.c.b16 %v321, %v320
  %v371 = vpack.c.b16 %v323, %v322
  %420 = vmatprep.subr.bf16.mxu0 0
  %421 = vmatpush1.bf16.msra.mxu0 %v331
  %422 = vmatprep.subr.bf16.mxu0 0
  %423 = vmatpush1.bf16.msra.mxu0 %v330
  %424 = vmatprep.subr.bf16.mxu0 0
  %425 = vmatpush1.bf16.msra.mxu0 %v329
  %426 = vmatprep.subr.bf16.mxu0 0
  %427 = vmatpush1.bf16.msra.mxu0 %v328
  %428 = vmatprep.subr.bf16.mxu0 0
  %429 = vmatpush1.bf16.msra.mxu0 %v327
  %430 = vmatprep.subr.bf16.mxu0 0
  %431 = vmatpush1.bf16.msra.mxu0 %v326
  %432 = vmatprep.subr.bf16.mxu0 0
  %433 = vmatpush1.bf16.msra.mxu0 %v325
  %434 = vmatprep.subr.bf16.mxu0 0
  %435 = vmatpush1.bf16.msra.mxu0 %v324
  %436 = vmatprep.subr.bf16.mxu0 0
  %437 = vmatpush2.bf16.msra.mxu0 %v339
  %438 = vmatprep.subr.bf16.mxu0 0
  %439 = vmatpush2.bf16.msra.mxu0 %v338
  %440 = vmatprep.subr.bf16.mxu0 0
  %441 = vmatpush2.bf16.msra.mxu0 %v337
  %442 = vmatprep.subr.bf16.mxu0 0
  %443 = vmatpush2.bf16.msra.mxu0 %v336
  %444 = vmatprep.subr.bf16.mxu0 0
  %445 = vmatpush2.bf16.msra.mxu0 %v335
  %446 = vmatprep.subr.bf16.mxu0 0
  %447 = vmatpush2.bf16.msra.mxu0 %v334
  %448 = vmatprep.subr.bf16.mxu0 0
  %449 = vmatpush2.bf16.msra.mxu0 %v333
  %450 = vmatprep.subr.bf16.mxu0 0
  %451 = vmatpush2.bf16.msra.mxu0 %v332
  %452 = vmatprep.mubr.bf16.mxu0 %v121
  %453 = vmatmul.mubr.bf16.gmra.mxu0 %v120
  %v454 = vpop.f32.mrf.mxu0
  %v455 = vadd.f32 0.0, %v454
  %v456 = vpop.f32.mrf.mxu0
  %v457 = vpop.f32.mrf.mxu0
  %v458 = vpop.f32.mrf.mxu0
  %459 = vdwg.mxu0
  %460 = vmatprep.subr.bf16.mxu0 0
  %461 = vmatpush1.bf16.msra.mxu0 %v347
  %462 = vmatprep.subr.bf16.mxu0 0
  %463 = vmatpush1.bf16.msra.mxu0 %v346
  %464 = vmatprep.subr.bf16.mxu0 0
  %465 = vmatpush1.bf16.msra.mxu0 %v345
  %466 = vmatprep.subr.bf16.mxu0 0
  %467 = vmatpush1.bf16.msra.mxu0 %v344
  %468 = vmatprep.subr.bf16.mxu0 0
  %469 = vmatpush1.bf16.msra.mxu0 %v343
  %470 = vmatprep.subr.bf16.mxu0 0
  %471 = vmatpush1.bf16.msra.mxu0 %v342
  %472 = vmatprep.subr.bf16.mxu0 0
  %473 = vmatpush1.bf16.msra.mxu0 %v341
  %474 = vmatprep.subr.bf16.mxu0 0
  %475 = vmatpush1.bf16.msra.mxu0 %v340
  %476 = vmatprep.subr.bf16.mxu0 0
  %477 = vmatpush2.bf16.msra.mxu0 %v355
  %478 = vmatprep.subr.bf16.mxu0 0
  %479 = vmatpush2.bf16.msra.mxu0 %v354
  %480 = vmatprep.subr.bf16.mxu0 0
  %481 = vmatpush2.bf16.msra.mxu0 %v353
  %482 = vmatprep.subr.bf16.mxu0 0
  %483 = vmatpush2.bf16.msra.mxu0 %v352
  %484 = vmatprep.subr.bf16.mxu0 0
  %485 = vmatpush2.bf16.msra.mxu0 %v351
  %486 = vmatprep.subr.bf16.mxu0 0
  %487 = vmatpush2.bf16.msra.mxu0 %v350
  %488 = vmatprep.subr.bf16.mxu0 0
  %489 = vmatpush2.bf16.msra.mxu0 %v349
  %490 = vmatprep.subr.bf16.mxu0 0
  %491 = vmatpush2.bf16.msra.mxu0 %v348
  %492 = vmatprep.mubr.bf16.mxu0 %v123
  %493 = vmatmul.mubr.bf16.gmra.mxu0 %v122
  %v494 = vpop.f32.mrf.mxu0
  %v495 = vadd.f32 %v455, %v494
  %v496 = vpop.f32.mrf.mxu0
  %v497 = vpop.f32.mrf.mxu0
  %v498 = vpop.f32.mrf.mxu0
  %499 = vdwg.mxu0
  %500 = vmatprep.subr.bf16.mxu0 0
  %501 = vmatpush1.bf16.msra.mxu0 %v363
  %502 = vmatprep.subr.bf16.mxu0 0
  %503 = vmatpush1.bf16.msra.mxu0 %v362
  %504 = vmatprep.subr.bf16.mxu0 0
  %505 = vmatpush1.bf16.msra.mxu0 %v361
  %506 = vmatprep.subr.bf16.mxu0 0
  %507 = vmatpush1.bf16.msra.mxu0 %v360
  %508 = vmatprep.subr.bf16.mxu0 0
  %509 = vmatpush1.bf16.msra.mxu0 %v359
  %510 = vmatprep.subr.bf16.mxu0 0
  %511 = vmatpush1.bf16.msra.mxu0 %v358
  %512 = vmatprep.subr.bf16.mxu0 0
  %513 = vmatpush1.bf16.msra.mxu0 %v357
  %514 = vmatprep.subr.bf16.mxu0 0
  %515 = vmatpush1.bf16.msra.mxu0 %v356
  %516 = vmatprep.subr.bf16.mxu0 0
  %517 = vmatpush2.bf16.msra.mxu0 %v371
  %518 = vmatprep.subr.bf16.mxu0 0
  %519 = vmatpush2.bf16.msra.mxu0 %v370
  %520 = vmatprep.subr.bf16.mxu0 0
  %521 = vmatpush2.bf16.msra.mxu0 %v369
  %522 = vmatprep.subr.bf16.mxu0 0
  %523 = vmatpush2.bf16.msra.mxu0 %v368
  %524 = vmatprep.subr.bf16.mxu0 0
  %525 = vmatpush2.bf16.msra.mxu0 %v367
  %526 = vmatprep.subr.bf16.mxu0 0
  %527 = vmatpush2.bf16.msra.mxu0 %v366
  %528 = vmatprep.subr.bf16.mxu0 0
  %529 = vmatpush2.bf16.msra.mxu0 %v365
  %530 = vmatprep.subr.bf16.mxu0 0
  %531 = vmatpush2.bf16.msra.mxu0 %v364
  %532 = vmatprep.mubr.bf16.mxu0 %v125
  %533 = vmatmul.mubr.bf16.gmra.mxu0 %v124
  %v534 = vpop.f32.mrf.mxu0
  %v535 = vadd.f32 %v495, %v534
  %v536 = vpop.f32.mrf.mxu0
  %v537 = vpop.f32.mrf.mxu0
  %v538 = vpop.f32.mrf.mxu0
  %539 = vdwg.mxu0
  %vm540 = vcmask 523264
  %541 = vst.msk [vmem:[%s2] sm:$0xff] %vm540, %v535
  // Predicated region
  $region10: #{_lambda_.31} parent=0 // pred_check
    _
  $region11: #{_lambda_.31} parent=0 // pred_check_branch
    %543 = sbr.rel (0) target = $region13
  $region12: #{_lambda_.31} parent=0 // pred_region
    _
  $region13: #{_lambda_.31} parent=0 // pred_fallthru
    _
  // Predicated region
  $region14: #{_lambda_.31} parent=0 // pred_check
    _
  $region15: #{_lambda_.31} parent=0 // pred_check_branch
    %545 = sbr.rel (0) target = $region17
  $region16: #{_lambda_.31} parent=0 // pred_region
    _
  $region17: #{_lambda_.31} parent=0 // pred_fallthru
    _

// kernel: _lambda_.34
$region0: #{_lambda_.34}
  #allocation0 [shape = 'u32[]', space=smem, size = 0x4, offset = 0x4, fixed_abs, tag = 'smem constant byte address 0x4 - core index']
  #allocation1 [shape = 'u32[144,128]{1,0:T(1,128)}', space=vmem, size = 0x12000, scoped, tag = 'internal scratch']
  %s0 = inlined_call_operand.vmem [shape: bf16[2,8,192], index: 0, kind: input, shape index: {}]
  %s1 = inlined_call_operand.vmem [shape: f32[1,1,8], index: 1, kind: input, shape index: {}]
  %s2 = inlined_call_operand.vmem [shape: bf16[2,8,64], index: 2, kind: output, shape index: {}]
  %s3 = sld [smem:[#allocation0]]
  $region41: #{_lambda_.34} parent=0
    _
  %s5 = ssub.s32 1, %s3
  %s6 = scalar_select 0, %s5, %s3
  loop: start=0, step=1, limit=4
  $region2: #{_lambda_.34} parent=0 // loop_pre_header
    _
  $region3: #{_lambda_.34} parent=0 // loop_header
    %s8 = sphi 0, %s12
    %p9 = scmp.ge.s32.totalorder %s8, 4
    %s18 = sphi 0, %s20
    %s21 = sphi 0, %s18
    %s22 = sphi 0, %s21
    %s38 = sphi 0, %s22
    %s42 = sphi 0, %s42
    %s44 = sphi 0, %s42
    %s45 = sphi 0, %s44
    %s59 = sphi 0, %s45
    %s65 = sphi 0, %s67
    %s68 = sphi 0, %s65
    %s69 = sphi 0, %s68
    %s85 = sphi 0, %s69
  $region4: #{_lambda_.34} parent=0 // loop_header_branch
    %11 = sbr.rel (%p9) target = $region8
  $region5: #{_lambda_.34} parent=0 // loop_body
    %s13 = ssub.s32 %s8, 1
    %s14 = ssub.s32 %s8, 2
    %s15 = sadd.s32 %s8, 1
    %s16 = ssub.s32 %s8, %s15
    %p17 = scmp.eq.s32.totalorder %s16, 0
    %s19 = sadd.s32 %s18, 1
    %s20 = scalar_select %p17, %s18, %s19
    %p23 = pneg %p17
    %p24 = scmp.eq.s32.totalorder %s8, 1
    %p25 = por %p23, %p24
    %p26 = scmp.ne.s32.totalorder %s18, %s21
    %p27 = scmp.eq.s32.totalorder %s8, 0
    %p28 = por %p26, %p27
    %p29 = scmp.ne.s32.totalorder %s18, %s21
    %p30 = scmp.eq.s32.totalorder %s13, 1
    %p31 = por %p29, %p30
    %p32 = scmp.ne.s32.totalorder %s21, %s22
    %p33 = scmp.eq.s32.totalorder %s13, 0
    %p34 = por %p32, %p33
    %p35 = scmp.ne.s32.totalorder %s21, %s22
    %p36 = scmp.eq.s32.totalorder %s14, 1
    %p37 = por %p35, %p36
    %p39 = scmp.ne.s32.totalorder %s22, %s38
    %p40 = scmp.eq.s32.totalorder %s14, 0
    %p41 = por %p39, %p40
    %s43 = sadd.s32 %s42, 1
    %p46 = scmp.eq.s32.totalorder %s8, 1
    %p47 = scmp.ne.s32.totalorder %s42, %s44
    %p48 = scmp.eq.s32.totalorder %s8, 0
    %p49 = por %p47, %p48
    %p50 = scmp.ne.s32.totalorder %s42, %s44
    %p51 = scmp.eq.s32.totalorder %s13, 1
    %p52 = por %p50, %p51
    %p53 = scmp.ne.s32.totalorder %s44, %s45
    %p54 = scmp.eq.s32.totalorder %s13, 0
    %p55 = por %p53, %p54
    %p56 = scmp.ne.s32.totalorder %s44, %s45
    %p57 = scmp.eq.s32.totalorder %s14, 1
    %p58 = por %p56, %p57
    %p60 = scmp.ne.s32.totalorder %s45, %s59
    %p61 = scmp.eq.s32.totalorder %s14, 0
    %p62 = por %p60, %p61
    %s63 = ssub.s32 %s8, %s15
    %p64 = scmp.eq.s32.totalorder %s63, 0
    %s66 = sadd.s32 %s65, 1
    %s67 = scalar_select %p64, %s65, %s66
    %p70 = pneg %p64
    %p71 = scmp.eq.s32.totalorder %s8, 1
    %p72 = por %p70, %p71
    %p73 = scmp.ne.s32.totalorder %s65, %s68
    %p74 = scmp.eq.s32.totalorder %s8, 0
    %p75 = por %p73, %p74
    %p76 = scmp.ne.s32.totalorder %s65, %s68
    %p77 = scmp.eq.s32.totalorder %s13, 1
    %p78 = por %p76, %p77
    %p79 = scmp.ne.s32.totalorder %s68, %s69
    %p80 = scmp.eq.s32.totalorder %s13, 0
    %p81 = por %p79, %p80
    %p82 = scmp.ne.s32.totalorder %s68, %s69
    %p83 = scmp.eq.s32.totalorder %s14, 1
    %p84 = por %p82, %p83
    %p86 = scmp.ne.s32.totalorder %s69, %s85
    %p87 = scmp.eq.s32.totalorder %s14, 0
    %p88 = por %p86, %p87
    %p89 = scmp.le.s32.totalorder 1, %s8
    %p90 = scmp.lt.s32.totalorder %s8, 3
    %p91 = pnand %p89, %p90
    %p92 = pneg %p91
    // Predicated region
    $region9: #{_lambda_.34} parent=5 // pred_check
      _
    $region10: #{_lambda_.34} parent=5 // pred_check_branch
      %94 = sbr.rel (%p91) target = $region12
    $region11: #{_lambda_.34} parent=5 // pred_region
      %s95 = ssub.s32 %s8, 1
      // Predicated region
      $region13: #{_lambda_.34} parent=11 // pred_check
        %p96 = pneg %p55
      $region14: #{_lambda_.34} parent=11 // pred_check_branch
        %98 = sbr.rel (%p96) target = $region16
      $region15: #{_lambda_.34} parent=11 // pred_region
        _
      $region16: #{_lambda_.34} parent=11 // pred_fallthru
        _
    $region12: #{_lambda_.34} parent=5 // pred_fallthru
      _
    %p99 = scmp.lt.s32.totalorder %s8, 2
    // Predicated region
    $region17: #{_lambda_.34} parent=5 // pred_check
      %p100 = pneg %p99
    $region18: #{_lambda_.34} parent=5 // pred_check_branch
      %102 = sbr.rel (%p100) target = $region20
    $region19: #{_lambda_.34} parent=5 // pred_region
      // Predicated region
      $region21: #{_lambda_.34} parent=19 // pred_check
        %p103 = pneg %p28
      $region22: #{_lambda_.34} parent=19 // pred_check_branch
        %105 = sbr.rel (%p103) target = $region24
      $region23: #{_lambda_.34} parent=19 // pred_region
        %p106 = scmp.lt.s32.totalorder %s8, 1
        %s107 = scalar_select %p106, %s8, 1
        %s108 = smul.addr %s107, 2
        %s109 = smul.addr %s108, 4
        %s110 = scalar_lea.vmem %s0, %s109
      $region24: #{_lambda_.34} parent=19 // pred_fallthru
        _
    $region20: #{_lambda_.34} parent=5 // pred_fallthru
      _
    %p111 = scmp.le.s32.totalorder 1, %s8
    %p112 = scmp.lt.s32.totalorder %s8, 3
    %p113 = pnand %p111, %p112
    %p114 = pneg %p113
    // Predicated region
    $region25: #{_lambda_.34} parent=5 // pred_check
      _
    $region26: #{_lambda_.34} parent=5 // pred_check_branch
      %116 = sbr.rel (%p113) target = $region28
    $region27: #{_lambda_.34} parent=5 // pred_region
      %s117 = ssub.s32 %s8, 1
      %p118 = scmp.lt.s32.totalorder %s13, 1
      %s119 = scalar_select %p118, %s13, 1
      %s120 = smul.addr %s119, 2
      %s121 = smul.addr %s120, 4
      %s122 = scalar_lea.vmem %s0, %s121
      %p123 = pneg %p34
      %p124 = pneg %p31
      %p125 = pneg %p55
      %p126 = pneg %p52
      %p127 = pneg %p81
      %p128 = pneg %p78
      %p129 = scmp.lt.s32.totalorder %s13, 1
      %s130 = scalar_select %p129, %s13, 1
      %s131 = smul.addr %s130, 4
      %s132 = scalar_lea.vmem %s2, %s131
      %p133 = scmp.lt.s32.totalorder %s13, 1
      %s134 = scalar_select %p133, %s13, 1
      %s135 = smul.addr %s134, 2
      %s136 = smul.addr %s135, 4
      %s137 = scalar_lea.vmem %s0, %s136
      %p138 = scmp.lt.s32.totalorder %s13, 1
      %s139 = scalar_select %p138, %s13, 1
      %s140 = smul.addr %s139, 4
      %s141 = scalar_lea.vmem %s2, %s140
      %v143 = vld [vmem:[%s1] sm:$0x1]
      %v144 = vld [vmem:[%s137] sm:$0xf]
      %v145 = vunpack.c.l.bf16 %v144
      %v146 = vmul.f32 %v145, 0.125
      %v147 = vpack.c.bf16 %v146, %v146
      %v148 = vld [vmem:[%s137 + $0x4] sm:$0xf]
      %v150 = vlaneseq
      %v151 = vshrl.u32 %v150, 7
      %v152 = vsub.s32 0, %v151
      %v153 = vrot.slane %v143, %v152
      %v156 = vunpack.c.l.b16 %v144
      %v157 = vpack.c.b16 %v156, %v156
      %158 = vrot.lane.b32.xlu0 %v157, 64
      %v159 = vpop.permute.xlu0 %158
      %vm160 = vcmask 523264
      %v162 = vsel %vm160, %v147, 0
      %v165 = vsel %vm160, %v159, 0
      %167 = vmatprep.subr.bf16.mxu0 0
      %168 = vmatpush1.bf16.xpose.msra.mxu0 0
      %169 = vmatprep.subr.bf16.mxu0 0
      %170 = vmatpush1.bf16.xpose.msra.mxu0 0
      %171 = vmatprep.subr.bf16.mxu0 0
      %172 = vmatpush1.bf16.xpose.msra.mxu0 0
      %173 = vmatprep.subr.bf16.mxu0 0
      %174 = vmatpush1.bf16.xpose.msra.mxu0 0
      %175 = vmatprep.subr.bf16.mxu0 0
      %176 = vmatpush1.bf16.xpose.msra.mxu0 0
      %177 = vmatprep.subr.bf16.mxu0 0
      %178 = vmatpush1.bf16.xpose.msra.mxu0 0
      %179 = vmatprep.subr.bf16.mxu0 0
      %180 = vmatpush1.bf16.xpose.msra.mxu0 0
      %181 = vmatprep.subr.bf16.mxu0 0
      %182 = vmatpush1.bf16.xpose.msra.mxu0 %v165
      %183 = vmatprep.subr.bf16.mxu0 0
      %184 = vmatpush2.bf16.xpose.msra.mxu0 0
      %185 = vmatprep.subr.bf16.mxu0 0
      %186 = vmatpush2.bf16.xpose.msra.mxu0 0
      %187 = vmatprep.subr.bf16.mxu0 0
      %188 = vmatpush2.bf16.xpose.msra.mxu0 0
      %189 = vmatprep.subr.bf16.mxu0 0
      %190 = vmatpush2.bf16.xpose.msra.mxu0 0
      %191 = vmatprep.subr.bf16.mxu0 0
      %192 = vmatpush2.bf16.xpose.msra.mxu0 0
      %193 = vmatprep.subr.bf16.mxu0 0
      %194 = vmatpush2.bf16.xpose.msra.mxu0 0
      %195 = vmatprep.subr.bf16.mxu0 0
      %196 = vmatpush2.bf16.xpose.msra.mxu0 0
      %197 = vmatprep.subr.bf16.mxu0 0
      %198 = vmatpush2.bf16.xpose.msra.mxu0 0
      %199 = vmatprep.mubr.bf16.mxu0 0
      %200 = vmatmul.mubr.bf16.gmra.mxu0 %v162
      %v201 = vpop.f32.mrf.mxu0
      %v202 = vadd.f32 %v153, %v201
      %v203 = vpop.f32.mrf.mxu0
      %v204 = vpop.f32.mrf.mxu0
      %v205 = vpop.f32.mrf.mxu0
      %206 = vdwg.mxu0
      %vm207 = vcmask 64512
      %v208 = vsel %vm207, %v202, -inf
      %209 = vmax.xlane.f32.xlu0 %v208
      %v210 = vpop.xlane.xlu0 %209
      %v211 = vsub.f32 %v202, %v210
      %v212 = vmul.f32 %v211, 1.442695
      %v213 = vpow.pop %v212
      %v214 = vsel %vm207, %v213, 0.0
      %215 = vadd.xlane.f32.xlu0 %v214
      %v216 = vpop.xlane.xlu0 %215
      %v217 = vpack.c.bf16 %v213, %v213
      %v219 = vsel %vm207, %v217, 0
      %vm221 = vcmask 1043456
      %v223 = vsel %vm221, %v148, 0
      %225 = vmatprep.subr.bf16.mxu0 0
      %226 = vmatpush1.bf16.msra.mxu0 0
      %227 = vmatprep.subr.bf16.mxu0 0
      %228 = vmatpush1.bf16.msra.mxu0 0
      %229 = vmatprep.subr.bf16.mxu0 0
      %230 = vmatpush1.bf16.msra.mxu0 0
      %231 = vmatprep.subr.bf16.mxu0 0
      %232 = vmatpush1.bf16.msra.mxu0 0
      %233 = vmatprep.subr.bf16.mxu0 0
      %234 = vmatpush1.bf16.msra.mxu0 0
      %235 = vmatprep.subr.bf16.mxu0 0
      %236 = vmatpush1.bf16.msra.mxu0 0
      %237 = vmatprep.subr.bf16.mxu0 0
      %238 = vmatpush1.bf16.msra.mxu0 0
      %239 = vmatprep.subr.bf16.mxu0 0
      %240 = vmatpush1.bf16.msra.mxu0 %v223
      %241 = vmatprep.subr.bf16.mxu0 0
      %242 = vmatpush2.bf16.msra.mxu0 0
      %243 = vmatprep.subr.bf16.mxu0 0
      %244 = vmatpush2.bf16.msra.mxu0 0
      %245 = vmatprep.subr.bf16.mxu0 0
      %246 = vmatpush2.bf16.msra.mxu0 0
      %247 = vmatprep.subr.bf16.mxu0 0
      %248 = vmatpush2.bf16.msra.mxu0 0
      %249 = vmatprep.subr.bf16.mxu0 0
      %250 = vmatpush2.bf16.msra.mxu0 0
      %251 = vmatprep.subr.bf16.mxu0 0
      %252 = vmatpush2.bf16.msra.mxu0 0
      %253 = vmatprep.subr.bf16.mxu0 0
      %254 = vmatpush2.bf16.msra.mxu0 0
      %255 = vmatprep.subr.bf16.mxu0 0
      %256 = vmatpush2.bf16.msra.mxu0 0
      %257 = vmatprep.mubr.bf16.mxu0 0
      %258 = vmatmul.mubr.bf16.gmra.mxu0 %v219
      %v259 = vpop.f32.mrf.mxu0
      %v260 = vadd.f32 0.0, %v259
      %v261 = vpop.f32.mrf.mxu0
      %v262 = vpop.f32.mrf.mxu0
      %v263 = vpop.f32.mrf.mxu0
      %264 = vdwg.mxu0
      %v265 = vrcp.pop %v216
      %v266 = vmul.f32 %v260, %v265
      %v267 = vpack.c.bf16 %v266, %v266
      %vm268 = vcmask 519168
      %269 = vst.msk [vmem:[%s141] sm:$0xf] %vm268, %v267
      %p270 = scmp.lt.s32.totalorder %s13, 1
      %s271 = scalar_select %p270, %s13, 1
      %s272 = smul.addr %s271, 4
      %s273 = scalar_lea.vmem %s2, %s272
      // Predicated region
      $region29: #{_lambda_.34} parent=27 // pred_check
        %p274 = pneg %p78
      $region30: #{_lambda_.34} parent=27 // pred_check_branch
        %276 = sbr.rel (%p274) target = $region32
      $region31: #{_lambda_.34} parent=27 // pred_region
        _
      $region32: #{_lambda_.34} parent=27 // pred_fallthru
        _
    $region28: #{_lambda_.34} parent=5 // pred_fallthru
      _
    %p277 = scmp.le.s32.totalorder 2, %s8
    // Predicated region
    $region33: #{_lambda_.34} parent=5 // pred_check
      %p278 = pneg %p277
    $region34: #{_lambda_.34} parent=5 // pred_check_branch
      %280 = sbr.rel (%p278) target = $region36
    $region35: #{_lambda_.34} parent=5 // pred_region
      %s281 = ssub.s32 %s8, 2
      // Predicated region
      $region37: #{_lambda_.34} parent=35 // pred_check
        %p282 = pneg %p84
      $region38: #{_lambda_.34} parent=35 // pred_check_branch
        %284 = sbr.rel (%p282) target = $region40
      $region39: #{_lambda_.34} parent=35 // pred_region
        %p285 = scmp.lt.s32.totalorder %s14, 1
        %s286 = scalar_select %p285, %s14, 1
        %s287 = smul.addr %s286, 4
        %s288 = scalar_lea.vmem %s2, %s287
      $region40: #{_lambda_.34} parent=35 // pred_fallthru
        _
    $region36: #{_lambda_.34} parent=5 // pred_fallthru
      _
  $region6: #{_lambda_.34} parent=0 // loop_footer
    %s12 = sadd.s32 1, %s8
  $region7: #{_lambda_.34} parent=0 // loop_footer_branch
    %7 = sbr.rel target = $region3
  $region8: #{_lambda_.34} parent=0 // loop_exit
    _

// kernel: _lambda_.35
$region0: #{_lambda_.35}
  #allocation0 [shape = 'u32[]', space=smem, size = 0x4, offset = 0x4, fixed_abs, tag = 'smem constant byte address 0x4 - core index']
  #allocation1 [shape = 'u32[144,128]{1,0:T(1,128)}', space=vmem, size = 0x12000, scoped, tag = 'internal scratch']
  %s0 = inlined_call_operand.vmem [shape: bf16[16,64], index: 0, kind: input, shape index: {}]
  %s1 = inlined_call_operand.vmem [shape: bf16[64,64], index: 1, kind: input, shape index: {}]
  %s2 = inlined_call_operand.vmem [shape: f32[1,64], index: 2, kind: input, shape index: {}]
  %s3 = inlined_call_operand.vmem [shape: bf16[16,64], index: 3, kind: input, shape index: {}]
  %s4 = inlined_call_operand.vmem [shape: bf16[16,64], index: 4, kind: output, shape index: {}]
  %s5 = sld [smem:[#allocation0]]
  $region26: #{_lambda_.35} parent=0
    _
  %s7 = ssub.s32 1, %s5
  %s8 = scalar_select 0, %s7, %s5
  // Predicated region
  $region2: #{_lambda_.35} parent=0 // pred_check
    _
  $region3: #{_lambda_.35} parent=0 // pred_check_branch
    %10 = sbr.rel (0) target = $region5
  $region4: #{_lambda_.35} parent=0 // pred_region
    _
  $region5: #{_lambda_.35} parent=0 // pred_fallthru
    _
  // Predicated region
  $region6: #{_lambda_.35} parent=0 // pred_check
    _
  $region7: #{_lambda_.35} parent=0 // pred_check_branch
    %12 = sbr.rel (0) target = $region9
  $region8: #{_lambda_.35} parent=0 // pred_region
    _
  $region9: #{_lambda_.35} parent=0 // pred_fallthru
    _
  // Predicated region
  $region10: #{_lambda_.35} parent=0 // pred_check
    _
  $region11: #{_lambda_.35} parent=0 // pred_check_branch
    %14 = sbr.rel (0) target = $region13
  $region12: #{_lambda_.35} parent=0 // pred_region
    _
  $region13: #{_lambda_.35} parent=0 // pred_fallthru
    _
  // Predicated region
  $region14: #{_lambda_.35} parent=0 // pred_check
    _
  $region15: #{_lambda_.35} parent=0 // pred_check_branch
    %16 = sbr.rel (0) target = $region17
  $region16: #{_lambda_.35} parent=0 // pred_region
    _
  $region17: #{_lambda_.35} parent=0 // pred_fallthru
    _
  %v18 = vld [vmem:[%s0] sm:$0xf]
  %v19 = vld [vmem:[%s0 + $0x4] sm:$0xf]
  %v20 = vld [vmem:[%s1] sm:$0xf]
  %v21 = vld [vmem:[%s1 + $0x4] sm:$0xf]
  %v22 = vld [vmem:[%s1 + $0x8] sm:$0xf]
  %v23 = vld [vmem:[%s1 + $0xc] sm:$0xf]
  %v24 = vld [vmem:[%s1 + $0x10] sm:$0xf]
  %v25 = vld [vmem:[%s1 + $0x14] sm:$0xf]
  %v26 = vld [vmem:[%s1 + $0x18] sm:$0xf]
  %v27 = vld [vmem:[%s1 + $0x1c] sm:$0xf]
  %v28 = vld [vmem:[%s2] sm:$0x1]
  %v30 = vlaneseq
  %v31 = vshrl.u32 %v30, 7
  %v32 = vsub.s32 0, %v31
  %v33 = vrot.slane %v28, %v32
  %v37 = vunpack.c.l.b16 %v18
  %v38 = vunpack.c.l.b16 %v19
  %v39 = vpack.c.b16 %v38, %v37
  %v48 = vunpack.c.l.b16 %v20
  %v49 = vunpack.c.l.b16 %v21
  %v50 = vunpack.c.l.b16 %v22
  %v51 = vunpack.c.l.b16 %v23
  %v52 = vunpack.c.l.b16 %v24
  %v53 = vunpack.c.l.b16 %v25
  %v54 = vunpack.c.l.b16 %v26
  %v55 = vunpack.c.l.b16 %v27
  %v56 = vpack.c.b16 %v49, %v48
  %v57 = vpack.c.b16 %v51, %v50
  %v58 = vpack.c.b16 %v53, %v52
  %v59 = vpack.c.b16 %v55, %v54
  %vm64 = vcmask 523264
  %v66 = vsel %vm64, %v39, 0
  %68 = vmatprep.subr.bf16.mxu0 0
  %69 = vmatpush1.bf16.msra.mxu0 0
  %70 = vmatprep.subr.bf16.mxu0 0
  %71 = vmatpush1.bf16.msra.mxu0 0
  %72 = vmatprep.subr.bf16.mxu0 0
  %73 = vmatpush1.bf16.msra.mxu0 0
  %74 = vmatprep.subr.bf16.mxu0 0
  %75 = vmatpush1.bf16.msra.mxu0 0
  %76 = vmatprep.subr.bf16.mxu0 0
  %77 = vmatpush1.bf16.msra.mxu0 %v59
  %78 = vmatprep.subr.bf16.mxu0 0
  %79 = vmatpush1.bf16.msra.mxu0 %v58
  %80 = vmatprep.subr.bf16.mxu0 0
  %81 = vmatpush1.bf16.msra.mxu0 %v57
  %82 = vmatprep.subr.bf16.mxu0 0
  %83 = vmatpush1.bf16.msra.mxu0 %v56
  %84 = vmatprep.subr.bf16.mxu0 0
  %85 = vmatpush2.bf16.msra.mxu0 0
  %86 = vmatprep.subr.bf16.mxu0 0
  %87 = vmatpush2.bf16.msra.mxu0 0
  %88 = vmatprep.subr.bf16.mxu0 0
  %89 = vmatpush2.bf16.msra.mxu0 0
  %90 = vmatprep.subr.bf16.mxu0 0
  %91 = vmatpush2.bf16.msra.mxu0 0
  %92 = vmatprep.subr.bf16.mxu0 0
  %93 = vmatpush2.bf16.msra.mxu0 0
  %94 = vmatprep.subr.bf16.mxu0 0
  %95 = vmatpush2.bf16.msra.mxu0 0
  %96 = vmatprep.subr.bf16.mxu0 0
  %97 = vmatpush2.bf16.msra.mxu0 0
  %98 = vmatprep.subr.bf16.mxu0 0
  %99 = vmatpush2.bf16.msra.mxu0 0
  %100 = vmatprep.mubr.bf16.mxu0 0
  %101 = vmatmul.mubr.bf16.gmra.mxu0 %v66
  %v102 = vpop.f32.mrf.mxu0
  %v103 = vadd.f32 %v33, %v102
  %v104 = vpop.f32.mrf.mxu0
  %v105 = vpop.f32.mrf.mxu0
  %v106 = vadd.f32 %v33, %v105
  %v107 = vpop.f32.mrf.mxu0
  %108 = vdwg.mxu0
  %v109 = vld [vmem:[%s3] sm:$0xf]
  %v110 = vld [vmem:[%s3 + $0x4] sm:$0xf]
  %v111 = vunpack.c.l.bf16 %v109
  %v112 = vunpack.c.l.bf16 %v110
  %v113 = vadd.f32 %v103, %v111
  %v114 = vadd.f32 %v106, %v112
  %v115 = vpack.c.bf16 %v114, %v113
  %v117 = vunpack.c.l.b16 %v115
  %v118 = vunpack.c.h.b16 %v115
  %v119 = vpack.c.b16 %v117, %v117
  %v120 = vpack.c.b16 %v118, %v118
  %vm123 = vcmask 519168
  %124 = vst.msk [vmem:[%s4] sm:$0xf] %vm123, %v119
  %125 = vst.msk [vmem:[%s4 + $0x4] sm:$0xf] %vm123, %v120
  // Predicated region
  $region18: #{_lambda_.35} parent=0 // pred_check
    _
  $region19: #{_lambda_.35} parent=0 // pred_check_branch
    %127 = sbr.rel (0) target = $region21
  $region20: #{_lambda_.35} parent=0 // pred_region
    _
  $region21: #{_lambda_.35} parent=0 // pred_fallthru
    _
  // Predicated region
  $region22: #{_lambda_.35} parent=0 // pred_check
    _
  $region23: #{_lambda_.35} parent=0 // pred_check_branch
    %129 = sbr.rel (0) target = $region25
  $region24: #{_lambda_.35} parent=0 // pred_region
    _
  $region25: #{_lambda_.35} parent=0 // pred_fallthru
    _

// kernel: _lambda_.36
$region0: #{_lambda_.36}
  #allocation0 [shape = 'u32[]', space=smem, size = 0x4, offset = 0x4, fixed_abs, tag = 'smem constant byte address 0x4 - core index']
  #allocation1 [shape = 'u32[144,128]{1,0:T(1,128)}', space=vmem, size = 0x12000, scoped, tag = 'internal scratch']
  %s0 = inlined_call_operand.vmem [shape: bf16[16,64], index: 0, kind: input, shape index: {}]
  %s1 = inlined_call_operand.vmem [shape: bf16[64,256], index: 1, kind: input, shape index: {}]
  %s2 = inlined_call_operand.vmem [shape: f32[1,64], index: 2, kind: input, shape index: {}]
  %s3 = inlined_call_operand.vmem [shape: f32[1,64], index: 3, kind: input, shape index: {}]
  %s4 = inlined_call_operand.vmem [shape: f32[1,256], index: 4, kind: input, shape index: {}]
  %s5 = inlined_call_operand.vmem [shape: bf16[16,256], index: 5, kind: output, shape index: {}]
  %s6 = sld [smem:[#allocation0]]
  $region30: #{_lambda_.36} parent=0
    _
  %s8 = ssub.s32 1, %s6
  %s9 = scalar_select 0, %s8, %s6
  // Predicated region
  $region2: #{_lambda_.36} parent=0 // pred_check
    _
  $region3: #{_lambda_.36} parent=0 // pred_check_branch
    %11 = sbr.rel (0) target = $region5
  $region4: #{_lambda_.36} parent=0 // pred_region
    _
  $region5: #{_lambda_.36} parent=0 // pred_fallthru
    _
  // Predicated region
  $region6: #{_lambda_.36} parent=0 // pred_check
    _
  $region7: #{_lambda_.36} parent=0 // pred_check_branch
    %13 = sbr.rel (0) target = $region9
  $region8: #{_lambda_.36} parent=0 // pred_region
    _
  $region9: #{_lambda_.36} parent=0 // pred_fallthru
    _
  // Predicated region
  $region10: #{_lambda_.36} parent=0 // pred_check
    _
  $region11: #{_lambda_.36} parent=0 // pred_check_branch
    %15 = sbr.rel (0) target = $region13
  $region12: #{_lambda_.36} parent=0 // pred_region
    _
  $region13: #{_lambda_.36} parent=0 // pred_fallthru
    _
  // Predicated region
  $region14: #{_lambda_.36} parent=0 // pred_check
    _
  $region15: #{_lambda_.36} parent=0 // pred_check_branch
    %17 = sbr.rel (0) target = $region17
  $region16: #{_lambda_.36} parent=0 // pred_region
    _
  $region17: #{_lambda_.36} parent=0 // pred_fallthru
    _
  // Predicated region
  $region18: #{_lambda_.36} parent=0 // pred_check
    _
  $region19: #{_lambda_.36} parent=0 // pred_check_branch
    %19 = sbr.rel (0) target = $region21
  $region20: #{_lambda_.36} parent=0 // pred_region
    _
  $region21: #{_lambda_.36} parent=0 // pred_fallthru
    _
  %v21 = vld [vmem:[%s0] sm:$0xf]
  %v22 = vld [vmem:[%s0 + $0x4] sm:$0xf]
  %v23 = vunpack.c.l.bf16 %v21
  %v24 = vunpack.c.l.bf16 %v22
  %vm25 = vcmask 523264
  %v26 = vsel %vm25, %v23, 0.0
  %27 = vadd.xlane.f32.xlu0 %v26
  %v28 = vpop.xlane.xlu0 %27
  %v29 = vsel %vm25, %v24, 0.0
  %30 = vadd.xlane.f32.xlu0 %v29
  %v31 = vpop.xlane.xlu0 %30
  %v32 = vrcp.pop 64.0
  %v33 = vmul.f32 %v28, %v32
  %v34 = vmul.f32 %v31, %v32
  %v35 = vsub.f32 %v23, %v33
  %v36 = vsub.f32 %v24, %v34
  %v37 = vmul.f32 %v35, %v35
  %v38 = vmul.f32 %v36, %v36
  %v39 = vsel %vm25, %v37, 0.0
  %40 = vadd.xlane.f32.xlu0 %v39
  %v41 = vpop.xlane.xlu0 %40
  %v42 = vsel %vm25, %v38, 0.0
  %43 = vadd.xlane.f32.xlu0 %v42
  %v44 = vpop.xlane.xlu0 %43
  %v45 = vmul.f32 %v41, %v32
  %v46 = vmul.f32 %v44, %v32
  %v47 = vadd.f32 %v45, 1e-05
  %v48 = vadd.f32 %v46, 1e-05
  %v49 = vrsqrt.pop %v47
  %v50 = vrsqrt.pop %v48
  %v51 = vmul.f32 %v35, %v49
  %v52 = vmul.f32 %v36, %v50
  %v53 = vld [vmem:[%s2] sm:$0x1]
  %v55 = vlaneseq
  %v56 = vshrl.u32 %v55, 7
  %v57 = vsub.s32 0, %v56
  %v58 = vrot.slane %v53, %v57
  %v60 = vmul.f32 %v51, %v58
  %v61 = vmul.f32 %v52, %v58
  %v62 = vld [vmem:[%s3] sm:$0x1]
  %v64 = vlaneseq
  %v65 = vshrl.u32 %v64, 7
  %v66 = vsub.s32 0, %v65
  %v67 = vrot.slane %v62, %v66
  %v69 = vadd.f32 %v60, %v67
  %v70 = vadd.f32 %v61, %v67
  %v71 = vpack.c.bf16 %v70, %v69
  %v72 = vld [vmem:[%s1] sm:$0xff]
  %v73 = vld [vmem:[%s1 + $0x8] sm:$0xff]
  %v74 = vld [vmem:[%s1 + $0x10] sm:$0xff]
  %v75 = vld [vmem:[%s1 + $0x18] sm:$0xff]
  %v76 = vld [vmem:[%s1 + $0x20] sm:$0xff]
  %v77 = vld [vmem:[%s1 + $0x28] sm:$0xff]
  %v78 = vld [vmem:[%s1 + $0x30] sm:$0xff]
  %v79 = vld [vmem:[%s1 + $0x38] sm:$0xff]
  %v80 = vld [vmem:[%s4] sm:$0x3]
  %v82 = vlaneseq
  %v83 = vshrl.u32 %v82, 7
  %v84 = vsub.s32 0, %v83
  %v85 = vrot.slane %v80, %v84
  %v86 = vlaneseq
  %v87 = vshrl.u32 %v86, 7
  %v88 = vsub.s32 1, %v87
  %v89 = vrot.slane %v80, %v88
  %v100 = vunpack.c.l.b16 %v72
  %v101 = vunpack.c.h.b16 %v72
  %v102 = vunpack.c.l.b16 %v73
  %v103 = vunpack.c.h.b16 %v73
  %v104 = vunpack.c.l.b16 %v74
  %v105 = vunpack.c.h.b16 %v74
  %v106 = vunpack.c.l.b16 %v75
  %v107 = vunpack.c.h.b16 %v75
  %v108 = vunpack.c.l.b16 %v76
  %v109 = vunpack.c.h.b16 %v76
  %v110 = vunpack.c.l.b16 %v77
  %v111 = vunpack.c.h.b16 %v77
  %v112 = vunpack.c.l.b16 %v78
  %v113 = vunpack.c.h.b16 %v78
  %v114 = vunpack.c.l.b16 %v79
  %v115 = vunpack.c.h.b16 %v79
  %v116 = vpack.c.b16 %v102, %v100
  %v117 = vpack.c.b16 %v103, %v101
  %v118 = vpack.c.b16 %v106, %v104
  %v119 = vpack.c.b16 %v107, %v105
  %v120 = vpack.c.b16 %v110, %v108
  %v121 = vpack.c.b16 %v111, %v109
  %v122 = vpack.c.b16 %v114, %v112
  %v123 = vpack.c.b16 %v115, %v113
  %v133 = vsel %vm25, %v71, 0
  %135 = vmatprep.subr.bf16.mxu0 0
  %136 = vmatpush1.bf16.msra.mxu0 0
  %137 = vmatprep.subr.bf16.mxu0 0
  %138 = vmatpush1.bf16.msra.mxu0 0
  %139 = vmatprep.subr.bf16.mxu0 0
  %140 = vmatpush1.bf16.msra.mxu0 0
  %141 = vmatprep.subr.bf16.mxu0 0
  %142 = vmatpush1.bf16.msra.mxu0 0
  %143 = vmatprep.subr.bf16.mxu0 %v123
  %144 = vmatpush1.bf16.msra.mxu0 %v122
  %145 = vmatprep.subr.bf16.mxu0 %v121
  %146 = vmatpush1.bf16.msra.mxu0 %v120
  %147 = vmatprep.subr.bf16.mxu0 %v119
  %148 = vmatpush1.bf16.msra.mxu0 %v118
  %149 = vmatprep.subr.bf16.mxu0 %v117
  %150 = vmatpush1.bf16.msra.mxu0 %v116
  %151 = vmatprep.subr.bf16.mxu0 0
  %152 = vmatpush2.bf16.msra.mxu0 0
  %153 = vmatprep.subr.bf16.mxu0 0
  %154 = vmatpush2.bf16.msra.mxu0 0
  %155 = vmatprep.subr.bf16.mxu0 0
  %156 = vmatpush2.bf16.msra.mxu0 0
  %157 = vmatprep.subr.bf16.mxu0 0
  %158 = vmatpush2.bf16.msra.mxu0 0
  %159 = vmatprep.subr.bf16.mxu0 0
  %160 = vmatpush2.bf16.msra.mxu0 0
  %161 = vmatprep.subr.bf16.mxu0 0
  %162 = vmatpush2.bf16.msra.mxu0 0
  %163 = vmatprep.subr.bf16.mxu0 0
  %164 = vmatpush2.bf16.msra.mxu0 0
  %165 = vmatprep.subr.bf16.mxu0 0
  %166 = vmatpush2.bf16.msra.mxu0 0
  %167 = vmatprep.mubr.bf16.mxu0 0
  %168 = vmatmul.mubr.bf16.gmra.mxu0 %v133
  %v169 = vpop.f32.mrf.mxu0
  %v170 = vadd.f32 %v85, %v169
  %v171 = vpop.f32.mrf.mxu0
  %v172 = vadd.f32 %v89, %v171
  %v173 = vpop.f32.mrf.mxu0
  %v174 = vadd.f32 %v85, %v173
  %v175 = vpop.f32.mrf.mxu0
  %v176 = vadd.f32 %v89, %v175
  %177 = vdwg.mxu0
  %v178 = vmul.f32 %v170, 1.702
  %v179 = vmul.f32 %v172, 1.702
  %v180 = vmul.f32 %v174, 1.702
  %v181 = vmul.f32 %v176, 1.702
  %v182 = vxor.u32 %v178, 2147483648
  %v183 = vxor.u32 %v179, 2147483648
  %v184 = vxor.u32 %v180, 2147483648
  %v185 = vxor.u32 %v181, 2147483648
  %v186 = vmul.f32 %v182, 1.442695
  %v187 = vpow.pop %v186
  %v188 = vmul.f32 %v183, 1.442695
  %v189 = vpow.pop %v188
  %v190 = vmul.f32 %v184, 1.442695
  %v191 = vpow.pop %v190
  %v192 = vmul.f32 %v185, 1.442695
  %v193 = vpow.pop %v192
  %v194 = vadd.f32 %v187, 1.0
  %v195 = vadd.f32 %v189, 1.0
  %v196 = vadd.f32 %v191, 1.0
  %v197 = vadd.f32 %v193, 1.0
  %v198 = vrcp.pop %v194
  %v199 = vmul.f32 1.0, %v198
  %v200 = vrcp.pop %v195
  %v201 = vmul.f32 1.0, %v200
  %v202 = vrcp.pop %v196
  %v203 = vmul.f32 1.0, %v202
  %v204 = vrcp.pop %v197
  %v205 = vmul.f32 1.0, %v204
  %v206 = vmul.f32 %v170, %v199
  %v207 = vmul.f32 %v172, %v201
  %v208 = vmul.f32 %v174, %v203
  %v209 = vmul.f32 %v176, %v205
  %v210 = vpack.c.bf16 %v208, %v206
  %v211 = vpack.c.bf16 %v209, %v207
  %v214 = vunpack.c.l.b16 %v210
  %v215 = vunpack.c.l.b16 %v211
  %v216 = vunpack.c.h.b16 %v210
  %v217 = vunpack.c.h.b16 %v211
  %v218 = vpack.c.b16 %v215, %v214
  %v219 = vpack.c.b16 %v217, %v216
  %222 = vst [vmem:[%s5] sm:$0xff] %v218
  %223 = vst [vmem:[%s5 + $0x8] sm:$0xff] %v219
  // Predicated region
  $region22: #{_lambda_.36} parent=0 // pred_check
    _
  $region23: #{_lambda_.36} parent=0 // pred_check_branch
    %225 = sbr.rel (0) target = $region25
  $region24: #{_lambda_.36} parent=0 // pred_region
    _
  $region25: #{_lambda_.36} parent=0 // pred_fallthru
    _
  // Predicated region
  $region26: #{_lambda_.36} parent=0 // pred_check
    _
  $region27: #{_lambda_.36} parent=0 // pred_check_branch
    %227 = sbr.rel (0) target = $region29
  $region28: #{_lambda_.36} parent=0 // pred_region
    _
  $region29: #{_lambda_.36} parent=0 // pred_fallthru
    _

// kernel: _lambda_.37
$region0: #{_lambda_.37}
  #allocation0 [shape = 'u32[]', space=smem, size = 0x4, offset = 0x4, fixed_abs, tag = 'smem constant byte address 0x4 - core index']
  #allocation1 [shape = 'u32[144,128]{1,0:T(1,128)}', space=vmem, size = 0x12000, scoped, tag = 'internal scratch']
  %s0 = inlined_call_operand.vmem [shape: bf16[16,256], index: 0, kind: input, shape index: {}]
  %s1 = inlined_call_operand.vmem [shape: bf16[256,64], index: 1, kind: input, shape index: {}]
  %s2 = inlined_call_operand.vmem [shape: f32[1,64], index: 2, kind: input, shape index: {}]
  %s3 = inlined_call_operand.vmem [shape: bf16[16,64], index: 3, kind: input, shape index: {}]
  %s4 = inlined_call_operand.vmem [shape: bf16[16,64], index: 4, kind: output, shape index: {}]
  %s5 = sld [smem:[#allocation0]]
  $region26: #{_lambda_.37} parent=0
    _
  %s7 = ssub.s32 1, %s5
  %s8 = scalar_select 0, %s7, %s5
  // Predicated region
  $region2: #{_lambda_.37} parent=0 // pred_check
    _
  $region3: #{_lambda_.37} parent=0 // pred_check_branch
    %10 = sbr.rel (0) target = $region5
  $region4: #{_lambda_.37} parent=0 // pred_region
    _
  $region5: #{_lambda_.37} parent=0 // pred_fallthru
    _
  // Predicated region
  $region6: #{_lambda_.37} parent=0 // pred_check
    _
  $region7: #{_lambda_.37} parent=0 // pred_check_branch
    %12 = sbr.rel (0) target = $region9
  $region8: #{_lambda_.37} parent=0 // pred_region
    _
  $region9: #{_lambda_.37} parent=0 // pred_fallthru
    _
  // Predicated region
  $region10: #{_lambda_.37} parent=0 // pred_check
    _
  $region11: #{_lambda_.37} parent=0 // pred_check_branch
    %14 = sbr.rel (0) target = $region13
  $region12: #{_lambda_.37} parent=0 // pred_region
    _
  $region13: #{_lambda_.37} parent=0 // pred_fallthru
    _
  // Predicated region
  $region14: #{_lambda_.37} parent=0 // pred_check
    _
  $region15: #{_lambda_.37} parent=0 // pred_check_branch
    %16 = sbr.rel (0) target = $region17
  $region16: #{_lambda_.37} parent=0 // pred_region
    _
  $region17: #{_lambda_.37} parent=0 // pred_fallthru
    _
  %v18 = vld [vmem:[%s0] sm:$0xff]
  %v19 = vld [vmem:[%s0 + $0x8] sm:$0xff]
  %v20 = vld [vmem:[%s1] sm:$0xf]
  %v21 = vld [vmem:[%s1 + $0x4] sm:$0xf]
  %v22 = vld [vmem:[%s1 + $0x8] sm:$0xf]
  %v23 = vld [vmem:[%s1 + $0xc] sm:$0xf]
  %v24 = vld [vmem:[%s1 + $0x10] sm:$0xf]
  %v25 = vld [vmem:[%s1 + $0x14] sm:$0xf]
  %v26 = vld [vmem:[%s1 + $0x18] sm:$0xf]
  %v27 = vld [vmem:[%s1 + $0x1c] sm:$0xf]
  %v28 = vld [vmem:[%s1 + $0x20] sm:$0xf]
  %v29 = vld [vmem:[%s1 + $0x24] sm:$0xf]
  %v30 = vld [vmem:[%s1 + $0x28] sm:$0xf]
  %v31 = vld [vmem:[%s1 + $0x2c] sm:$0xf]
  %v32 = vld [vmem:[%s1 + $0x30] sm:$0xf]
  %v33 = vld [vmem:[%s1 + $0x34] sm:$0xf]
  %v34 = vld [vmem:[%s1 + $0x38] sm:$0xf]
  %v35 = vld [vmem:[%s1 + $0x3c] sm:$0xf]
  %v36 = vld [vmem:[%s1 + $0x40] sm:$0xf]
  %v37 = vld [vmem:[%s1 + $0x44] sm:$0xf]
  %v38 = vld [vmem:[%s1 + $0x48] sm:$0xf]
  %v39 = vld [vmem:[%s1 + $0x4c] sm:$0xf]
  %v40 = vld [vmem:[%s1 + $0x50] sm:$0xf]
  %v41 = vld [vmem:[%s1 + $0x54] sm:$0xf]
  %v42 = vld [vmem:[%s1 + $0x58] sm:$0xf]
  %v43 = vld [vmem:[%s1 + $0x5c] sm:$0xf]
  %v44 = vld [vmem:[%s1 + $0x60] sm:$0xf]
  %v45 = vld [vmem:[%s1 + $0x64] sm:$0xf]
  %v46 = vld [vmem:[%s1 + $0x68] sm:$0xf]
  %v47 = vld [vmem:[%s1 + $0x6c] sm:$0xf]
  %v48 = vld [vmem:[%s1 + $0x70] sm:$0xf]
  %v49 = vld [vmem:[%s1 + $0x74] sm:$0xf]
  %v50 = vld [vmem:[%s1 + $0x78] sm:$0xf]
  %v51 = vld [vmem:[%s1 + $0x7c] sm:$0xf]
  %v52 = vld [vmem:[%s2] sm:$0x1]
  %v54 = vlaneseq
  %v55 = vshrl.u32 %v54, 7
  %v56 = vsub.s32 0, %v55
  %v57 = vrot.slane %v52, %v56
  %v61 = vunpack.c.l.b16 %v18
  %v62 = vunpack.c.h.b16 %v18
  %v63 = vunpack.c.l.b16 %v19
  %v64 = vunpack.c.h.b16 %v19
  %v65 = vpack.c.b16 %v63, %v61
  %v66 = vpack.c.b16 %v64, %v62
  %v101 = vunpack.c.l.b16 %v20
  %v102 = vunpack.c.l.b16 %v21
  %v103 = vunpack.c.l.b16 %v22
  %v104 = vunpack.c.l.b16 %v23
  %v105 = vunpack.c.l.b16 %v24
  %v106 = vunpack.c.l.b16 %v25
  %v107 = vunpack.c.l.b16 %v26
  %v108 = vunpack.c.l.b16 %v27
  %v109 = vunpack.c.l.b16 %v28
  %v110 = vunpack.c.l.b16 %v29
  %v111 = vunpack.c.l.b16 %v30
  %v112 = vunpack.c.l.b16 %v31
  %v113 = vunpack.c.l.b16 %v32
  %v114 = vunpack.c.l.b16 %v33
  %v115 = vunpack.c.l.b16 %v34
  %v116 = vunpack.c.l.b16 %v35
  %v117 = vunpack.c.l.b16 %v36
  %v118 = vunpack.c.l.b16 %v37
  %v119 = vunpack.c.l.b16 %v38
  %v120 = vunpack.c.l.b16 %v39
  %v121 = vunpack.c.l.b16 %v40
  %v122 = vunpack.c.l.b16 %v41
  %v123 = vunpack.c.l.b16 %v42
  %v124 = vunpack.c.l.b16 %v43
  %v125 = vunpack.c.l.b16 %v44
  %v126 = vunpack.c.l.b16 %v45
  %v127 = vunpack.c.l.b16 %v46
  %v128 = vunpack.c.l.b16 %v47
  %v129 = vunpack.c.l.b16 %v48
  %v130 = vunpack.c.l.b16 %v49
  %v131 = vunpack.c.l.b16 %v50
  %v132 = vunpack.c.l.b16 %v51
  %v133 = vpack.c.b16 %v102, %v101
  %v134 = vpack.c.b16 %v104, %v103
  %v135 = vpack.c.b16 %v106, %v105
  %v136 = vpack.c.b16 %v108, %v107
  %v137 = vpack.c.b16 %v110, %v109
  %v138 = vpack.c.b16 %v112, %v111
  %v139 = vpack.c.b16 %v114, %v113
  %v140 = vpack.c.b16 %v116, %v115
  %v141 = vpack.c.b16 %v118, %v117
  %v142 = vpack.c.b16 %v120, %v119
  %v143 = vpack.c.b16 %v122, %v121
  %v144 = vpack.c.b16 %v124, %v123
  %v145 = vpack.c.b16 %v126, %v125
  %v146 = vpack.c.b16 %v128, %v127
  %v147 = vpack.c.b16 %v130, %v129
  %v148 = vpack.c.b16 %v132, %v131
  %165 = vmatprep.subr.bf16.mxu0 0
  %166 = vmatpush1.bf16.msra.mxu0 %v140
  %167 = vmatprep.subr.bf16.mxu0 0
  %168 = vmatpush1.bf16.msra.mxu0 %v139
  %169 = vmatprep.subr.bf16.mxu0 0
  %170 = vmatpush1.bf16.msra.mxu0 %v138
  %171 = vmatprep.subr.bf16.mxu0 0
  %172 = vmatpush1.bf16.msra.mxu0 %v137
  %173 = vmatprep.subr.bf16.mxu0 0
  %174 = vmatpush1.bf16.msra.mxu0 %v136
  %175 = vmatprep.subr.bf16.mxu0 0
  %176 = vmatpush1.bf16.msra.mxu0 %v135
  %177 = vmatprep.subr.bf16.mxu0 0
  %178 = vmatpush1.bf16.msra.mxu0 %v134
  %179 = vmatprep.subr.bf16.mxu0 0
  %180 = vmatpush1.bf16.msra.mxu0 %v133
  %181 = vmatprep.subr.bf16.mxu0 0
  %182 = vmatpush2.bf16.msra.mxu0 %v148
  %183 = vmatprep.subr.bf16.mxu0 0
  %184 = vmatpush2.bf16.msra.mxu0 %v147
  %185 = vmatprep.subr.bf16.mxu0 0
  %186 = vmatpush2.bf16.msra.mxu0 %v146
  %187 = vmatprep.subr.bf16.mxu0 0
  %188 = vmatpush2.bf16.msra.mxu0 %v145
  %189 = vmatprep.subr.bf16.mxu0 0
  %190 = vmatpush2.bf16.msra.mxu0 %v144
  %191 = vmatprep.subr.bf16.mxu0 0
  %192 = vmatpush2.bf16.msra.mxu0 %v143
  %193 = vmatprep.subr.bf16.mxu0 0
  %194 = vmatpush2.bf16.msra.mxu0 %v142
  %195 = vmatprep.subr.bf16.mxu0 0
  %196 = vmatpush2.bf16.msra.mxu0 %v141
  %197 = vmatprep.mubr.bf16.mxu0 %v66
  %198 = vmatmul.mubr.bf16.gmra.mxu0 %v65
  %v199 = vpop.f32.mrf.mxu0
  %v200 = vadd.f32 %v57, %v199
  %v201 = vpop.f32.mrf.mxu0
  %v202 = vpop.f32.mrf.mxu0
  %v203 = vadd.f32 %v57, %v202
  %v204 = vpop.f32.mrf.mxu0
  %205 = vdwg.mxu0
  %v206 = vld [vmem:[%s3] sm:$0xf]
  %v207 = vld [vmem:[%s3 + $0x4] sm:$0xf]
  %v208 = vunpack.c.l.bf16 %v206
  %v209 = vunpack.c.l.bf16 %v207
  %v210 = vadd.f32 %v200, %v208
  %v211 = vadd.f32 %v203, %v209
  %v212 = vpack.c.bf16 %v211, %v210
  %v214 = vunpack.c.l.b16 %v212
  %v215 = vunpack.c.h.b16 %v212
  %v216 = vpack.c.b16 %v214, %v214
  %v217 = vpack.c.b16 %v215, %v215
  %vm220 = vcmask 519168
  %221 = vst.msk [vmem:[%s4] sm:$0xf] %vm220, %v216
  %222 = vst.msk [vmem:[%s4 + $0x4] sm:$0xf] %vm220, %v217
  // Predicated region
  $region18: #{_lambda_.37} parent=0 // pred_check
    _
  $region19: #{_lambda_.37} parent=0 // pred_check_branch
    %224 = sbr.rel (0) target = $region21
  $region20: #{_lambda_.37} parent=0 // pred_region
    _
  $region21: #{_lambda_.37} parent=0 // pred_fallthru
    _
  // Predicated region
  $region22: #{_lambda_.37} parent=0 // pred_check
    _
  $region23: #{_lambda_.37} parent=0 // pred_check_branch
    %226 = sbr.rel (0) target = $region25
  $region24: #{_lambda_.37} parent=0 // pred_region
    _
  $region25: #{_lambda_.37} parent=0 // pred_fallthru
    _

// kernel: _lambda_.43
$region0: #{_lambda_.43}
  #allocation0 [shape = 'u32[]', space=smem, size = 0x4, offset = 0x4, fixed_abs, tag = 'smem constant byte address 0x4 - core index']
  #allocation1 [shape = 'u32[144,128]{1,0:T(1,128)}', space=vmem, size = 0x12000, scoped, tag = 'internal scratch']
  %s0 = inlined_call_operand.vmem [shape: bf16[2,64], index: 0, kind: input, shape index: {}]
  %s1 = inlined_call_operand.vmem [shape: bf16[64,32], index: 1, kind: input, shape index: {}]
  %s2 = inlined_call_operand.vmem [shape: f32[1,64], index: 2, kind: input, shape index: {}]
  %s3 = inlined_call_operand.vmem [shape: f32[1,64], index: 3, kind: input, shape index: {}]
  %s4 = inlined_call_operand.vmem [shape: f32[2,32], index: 4, kind: output, shape index: {}]
  %s5 = sld [smem:[#allocation0]]
  $region26: #{_lambda_.43} parent=0
    _
  %s7 = ssub.s32 1, %s5
  %s8 = scalar_select 0, %s7, %s5
  // Predicated region
  $region2: #{_lambda_.43} parent=0 // pred_check
    _
  $region3: #{_lambda_.43} parent=0 // pred_check_branch
    %10 = sbr.rel (0) target = $region5
  $region4: #{_lambda_.43} parent=0 // pred_region
    _
  $region5: #{_lambda_.43} parent=0 // pred_fallthru
    _
  // Predicated region
  $region6: #{_lambda_.43} parent=0 // pred_check
    _
  $region7: #{_lambda_.43} parent=0 // pred_check_branch
    %12 = sbr.rel (0) target = $region9
  $region8: #{_lambda_.43} parent=0 // pred_region
    _
  $region9: #{_lambda_.43} parent=0 // pred_fallthru
    _
  // Predicated region
  $region10: #{_lambda_.43} parent=0 // pred_check
    _
  $region11: #{_lambda_.43} parent=0 // pred_check_branch
    %14 = sbr.rel (0) target = $region13
  $region12: #{_lambda_.43} parent=0 // pred_region
    _
  $region13: #{_lambda_.43} parent=0 // pred_fallthru
    _
  // Predicated region
  $region14: #{_lambda_.43} parent=0 // pred_check
    _
  $region15: #{_lambda_.43} parent=0 // pred_check_branch
    %16 = sbr.rel (0) target = $region17
  $region16: #{_lambda_.43} parent=0 // pred_region
    _
  $region17: #{_lambda_.43} parent=0 // pred_fallthru
    _
  %v18 = vld [vmem:[%s0] sm:$0x1]
  %v19 = vunpack.c.l.bf16 %v18
  %vm20 = vcmask 517120
  %v21 = vsel %vm20, %v19, 0.0
  %22 = vadd.xlane.f32.xlu0 %v21
  %v23 = vpop.xlane.xlu0 %22
  %v24 = vrcp.pop 64.0
  %v25 = vmul.f32 %v23, %v24
  %v26 = vsub.f32 %v19, %v25
  %v27 = vmul.f32 %v26, %v26
  %v28 = vsel %vm20, %v27, 0.0
  %29 = vadd.xlane.f32.xlu0 %v28
  %v30 = vpop.xlane.xlu0 %29
  %v31 = vmul.f32 %v30, %v24
  %v32 = vadd.f32 %v31, 1e-05
  %v33 = vrsqrt.pop %v32
  %v34 = vmul.f32 %v26, %v33
  %v35 = vld [vmem:[%s2] sm:$0x1]
  %v37 = vlaneseq
  %v38 = vshrl.u32 %v37, 7
  %v39 = vsub.s32 0, %v38
  %v40 = vrot.slane %v35, %v39
  %v42 = vmul.f32 %v34, %v40
  %v43 = vld [vmem:[%s3] sm:$0x1]
  %v45 = vlaneseq
  %v46 = vshrl.u32 %v45, 7
  %v47 = vsub.s32 0, %v46
  %v48 = vrot.slane %v43, %v47
  %v50 = vadd.f32 %v42, %v48
  %v51 = vpack.c.bf16 %v50, %v50
  %v52 = vld [vmem:[%s1] sm:$0xf]
  %v53 = vld [vmem:[%s1 + $0x4] sm:$0xf]
  %v54 = vld [vmem:[%s1 + $0x8] sm:$0xf]
  %v55 = vld [vmem:[%s1 + $0xc] sm:$0xf]
  %v56 = vld [vmem:[%s1 + $0x10] sm:$0xf]
  %v57 = vld [vmem:[%s1 + $0x14] sm:$0xf]
  %v58 = vld [vmem:[%s1 + $0x18] sm:$0xf]
  %v59 = vld [vmem:[%s1 + $0x1c] sm:$0xf]
  %v68 = vunpack.c.l.b16 %v52
  %v69 = vunpack.c.l.b16 %v53
  %v70 = vunpack.c.l.b16 %v54
  %v71 = vunpack.c.l.b16 %v55
  %v72 = vunpack.c.l.b16 %v56
  %v73 = vunpack.c.l.b16 %v57
  %v74 = vunpack.c.l.b16 %v58
  %v75 = vunpack.c.l.b16 %v59
  %v76 = vpack.c.b16 %v69, %v68
  %v77 = vpack.c.b16 %v71, %v70
  %v78 = vpack.c.b16 %v73, %v72
  %v79 = vpack.c.b16 %v75, %v74
  %vm84 = vcmask 523264
  %v86 = vsel %vm84, %v51, 0
  %88 = vmatprep.subr.bf16.mxu0 0
  %89 = vmatpush1.bf16.msra.mxu0 0
  %90 = vmatprep.subr.bf16.mxu0 0
  %91 = vmatpush1.bf16.msra.mxu0 0
  %92 = vmatprep.subr.bf16.mxu0 0
  %93 = vmatpush1.bf16.msra.mxu0 0
  %94 = vmatprep.subr.bf16.mxu0 0
  %95 = vmatpush1.bf16.msra.mxu0 0
  %96 = vmatprep.subr.bf16.mxu0 0
  %97 = vmatpush1.bf16.msra.mxu0 %v79
  %98 = vmatprep.subr.bf16.mxu0 0
  %99 = vmatpush1.bf16.msra.mxu0 %v78
  %100 = vmatprep.subr.bf16.mxu0 0
  %101 = vmatpush1.bf16.msra.mxu0 %v77
  %102 = vmatprep.subr.bf16.mxu0 0
  %103 = vmatpush1.bf16.msra.mxu0 %v76
  %104 = vmatprep.subr.bf16.mxu0 0
  %105 = vmatpush2.bf16.msra.mxu0 0
  %106 = vmatprep.subr.bf16.mxu0 0
  %107 = vmatpush2.bf16.msra.mxu0 0
  %108 = vmatprep.subr.bf16.mxu0 0
  %109 = vmatpush2.bf16.msra.mxu0 0
  %110 = vmatprep.subr.bf16.mxu0 0
  %111 = vmatpush2.bf16.msra.mxu0 0
  %112 = vmatprep.subr.bf16.mxu0 0
  %113 = vmatpush2.bf16.msra.mxu0 0
  %114 = vmatprep.subr.bf16.mxu0 0
  %115 = vmatpush2.bf16.msra.mxu0 0
  %116 = vmatprep.subr.bf16.mxu0 0
  %117 = vmatpush2.bf16.msra.mxu0 0
  %118 = vmatprep.subr.bf16.mxu0 0
  %119 = vmatpush2.bf16.msra.mxu0 0
  %120 = vmatprep.mubr.bf16.mxu0 0
  %121 = vmatmul.mubr.bf16.gmra.mxu0 %v86
  %v122 = vpop.f32.mrf.mxu0
  %v123 = vadd.f32 0.0, %v122
  %v124 = vpop.f32.mrf.mxu0
  %v125 = vpop.f32.mrf.mxu0
  %v126 = vpop.f32.mrf.mxu0
  %127 = vdwg.mxu0
  %vm128 = vcmask 254976
  %129 = vst.msk [vmem:[%s4] sm:$0x3] %vm128, %v123
  // Predicated region
  $region18: #{_lambda_.43} parent=0 // pred_check
    _
  $region19: #{_lambda_.43} parent=0 // pred_check_branch
    %131 = sbr.rel (0) target = $region21
  $region20: #{_lambda_.43} parent=0 // pred_region
    _
  $region21: #{_lambda_.43} parent=0 // pred_fallthru
    _
  // Predicated region
  $region22: #{_lambda_.43} parent=0 // pred_check
    _
  $region23: #{_lambda_.43} parent=0 // pred_check_branch
    %133 = sbr.rel (0) target = $region25
  $region24: #{_lambda_.43} parent=0 // pred_region
    _
  $region25: #{_lambda_.43} parent=0 // pred_fallthru
    _

// kernel: _lambda_.44
$region0: #{_lambda_.44}
  #allocation0 [shape = 'u32[]', space=smem, size = 0x4, offset = 0x4, fixed_abs, tag = 'smem constant byte address 0x4 - core index']
  #allocation1 [shape = 'u32[144,128]{1,0:T(1,128)}', space=vmem, size = 0x12000, scoped, tag = 'internal scratch']
  %s0 = inlined_call_operand.vmem [shape: bf16[16,32], index: 0, kind: input, shape index: {}]
  %s1 = inlined_call_operand.vmem [shape: f32[1,32], index: 1, kind: input, shape index: {}]
  %s2 = inlined_call_operand.vmem [shape: f32[1,32], index: 2, kind: input, shape index: {}]
  %s3 = inlined_call_operand.vmem [shape: bf16[16,32], index: 3, kind: output, shape index: {}]
  %s4 = sld [smem:[#allocation0]]
  $region22: #{_lambda_.44} parent=0
    _
  %s6 = ssub.s32 1, %s4
  %s7 = scalar_select 0, %s6, %s4
  // Predicated region
  $region2: #{_lambda_.44} parent=0 // pred_check
    _
  $region3: #{_lambda_.44} parent=0 // pred_check_branch
    %9 = sbr.rel (0) target = $region5
  $region4: #{_lambda_.44} parent=0 // pred_region
    _
  $region5: #{_lambda_.44} parent=0 // pred_fallthru
    _
  // Predicated region
  $region6: #{_lambda_.44} parent=0 // pred_check
    _
  $region7: #{_lambda_.44} parent=0 // pred_check_branch
    %11 = sbr.rel (0) target = $region9
  $region8: #{_lambda_.44} parent=0 // pred_region
    _
  $region9: #{_lambda_.44} parent=0 // pred_fallthru
    _
  // Predicated region
  $region10: #{_lambda_.44} parent=0 // pred_check
    _
  $region11: #{_lambda_.44} parent=0 // pred_check_branch
    %13 = sbr.rel (0) target = $region13
  $region12: #{_lambda_.44} parent=0 // pred_region
    _
  $region13: #{_lambda_.44} parent=0 // pred_fallthru
    _
  %v14 = vld [vmem:[%s0] sm:$0xf]
  %v15 = vld [vmem:[%s0 + $0x4] sm:$0xf]
  %v16 = vunpack.c.l.bf16 %v14
  %v17 = vunpack.c.l.bf16 %v15
  %vm18 = vcmask 261120
  %v19 = vsel %vm18, %v16, 0.0
  %20 = vadd.xlane.f32.xlu0 %v19
  %v21 = vpop.xlane.xlu0 %20
  %v22 = vsel %vm18, %v17, 0.0
  %23 = vadd.xlane.f32.xlu0 %v22
  %v24 = vpop.xlane.xlu0 %23
  %v25 = vrcp.pop 32.0
  %v26 = vmul.f32 %v21, %v25
  %v27 = vmul.f32 %v24, %v25
  %v28 = vsub.f32 %v16, %v26
  %v29 = vsub.f32 %v17, %v27
  %v30 = vmul.f32 %v28, %v28
  %v31 = vmul.f32 %v29, %v29
  %v32 = vsel %vm18, %v30, 0.0
  %33 = vadd.xlane.f32.xlu0 %v32
  %v34 = vpop.xlane.xlu0 %33
  %v35 = vsel %vm18, %v31, 0.0
  %36 = vadd.xlane.f32.xlu0 %v35
  %v37 = vpop.xlane.xlu0 %36
  %v38 = vmul.f32 %v34, %v25
  %v39 = vmul.f32 %v37, %v25
  %v40 = vadd.f32 %v38, 1e-12
  %v41 = vadd.f32 %v39, 1e-12
  %v42 = vrsqrt.pop %v40
  %v43 = vrsqrt.pop %v41
  %v44 = vmul.f32 %v28, %v42
  %v45 = vmul.f32 %v29, %v43
  %v46 = vld [vmem:[%s1] sm:$0x1]
  %v48 = vlaneseq
  %v49 = vshrl.u32 %v48, 7
  %v50 = vsub.s32 0, %v49
  %v51 = vrot.slane %v46, %v50
  %v53 = vmul.f32 %v44, %v51
  %v54 = vmul.f32 %v45, %v51
  %v55 = vld [vmem:[%s2] sm:$0x1]
  %v57 = vlaneseq
  %v58 = vshrl.u32 %v57, 7
  %v59 = vsub.s32 0, %v58
  %v60 = vrot.slane %v55, %v59
  %v62 = vadd.f32 %v53, %v60
  %v63 = vadd.f32 %v54, %v60
  %v64 = vpack.c.bf16 %v63, %v62
  %v66 = vunpack.c.l.b16 %v64
  %v67 = vunpack.c.h.b16 %v64
  %v68 = vpack.c.b16 %v66, %v66
  %v69 = vpack.c.b16 %v67, %v67
  %vm72 = vcmask 257024
  %73 = vst.msk [vmem:[%s3] sm:$0xf] %vm72, %v68
  %74 = vst.msk [vmem:[%s3 + $0x4] sm:$0xf] %vm72, %v69
  // Predicated region
  $region14: #{_lambda_.44} parent=0 // pred_check
    _
  $region15: #{_lambda_.44} parent=0 // pred_check_branch
    %76 = sbr.rel (0) target = $region17
  $region16: #{_lambda_.44} parent=0 // pred_region
    _
  $region17: #{_lambda_.44} parent=0 // pred_fallthru
    _
  // Predicated region
  $region18: #{_lambda_.44} parent=0 // pred_check
    _
  $region19: #{_lambda_.44} parent=0 // pred_check_branch
    %78 = sbr.rel (0) target = $region21
  $region20: #{_lambda_.44} parent=0 // pred_region
    _
  $region21: #{_lambda_.44} parent=0 // pred_fallthru
    _

// kernel: _lambda_.45
$region0: #{_lambda_.45}
  #allocation0 [shape = 'u32[]', space=smem, size = 0x4, offset = 0x4, fixed_abs, tag = 'smem constant byte address 0x4 - core index']
  #allocation1 [shape = 'u32[144,128]{1,0:T(1,128)}', space=vmem, size = 0x12000, scoped, tag = 'internal scratch']
  %s0 = inlined_call_operand.vmem [shape: bf16[16,32], index: 0, kind: input, shape index: {}]
  %s1 = inlined_call_operand.vmem [shape: bf16[32,96], index: 1, kind: input, shape index: {}]
  %s2 = inlined_call_operand.vmem [shape: f32[1,96], index: 2, kind: input, shape index: {}]
  %s3 = inlined_call_operand.vmem [shape: bf16[16,96], index: 3, kind: output, shape index: {}]
  %s4 = sld [smem:[#allocation0]]
  $region22: #{_lambda_.45} parent=0
    _
  %s6 = ssub.s32 1, %s4
  %s7 = scalar_select 0, %s6, %s4
  // Predicated region
  $region2: #{_lambda_.45} parent=0 // pred_check
    _
  $region3: #{_lambda_.45} parent=0 // pred_check_branch
    %9 = sbr.rel (0) target = $region5
  $region4: #{_lambda_.45} parent=0 // pred_region
    _
  $region5: #{_lambda_.45} parent=0 // pred_fallthru
    _
  // Predicated region
  $region6: #{_lambda_.45} parent=0 // pred_check
    _
  $region7: #{_lambda_.45} parent=0 // pred_check_branch
    %11 = sbr.rel (0) target = $region9
  $region8: #{_lambda_.45} parent=0 // pred_region
    _
  $region9: #{_lambda_.45} parent=0 // pred_fallthru
    _
  // Predicated region
  $region10: #{_lambda_.45} parent=0 // pred_check
    _
  $region11: #{_lambda_.45} parent=0 // pred_check_branch
    %13 = sbr.rel (0) target = $region13
  $region12: #{_lambda_.45} parent=0 // pred_region
    _
  $region13: #{_lambda_.45} parent=0 // pred_fallthru
    _
  %v15 = vld [vmem:[%s0] sm:$0xf]
  %v16 = vld [vmem:[%s0 + $0x4] sm:$0xf]
  %v17 = vld [vmem:[%s1] sm:$0xf]
  %v18 = vld [vmem:[%s1 + $0x4] sm:$0xf]
  %v19 = vld [vmem:[%s1 + $0x8] sm:$0xf]
  %v20 = vld [vmem:[%s1 + $0xc] sm:$0xf]
  %v21 = vld [vmem:[%s2] sm:$0x1]
  %v23 = vlaneseq
  %v24 = vshrl.u32 %v23, 7
  %v25 = vsub.s32 0, %v24
  %v26 = vrot.slane %v21, %v25
  %v30 = vunpack.c.l.b16 %v15
  %v31 = vunpack.c.l.b16 %v16
  %v32 = vpack.c.b16 %v31, %v30
  %v37 = vunpack.c.l.b16 %v17
  %v38 = vunpack.c.l.b16 %v18
  %v39 = vunpack.c.l.b16 %v19
  %v40 = vunpack.c.l.b16 %v20
  %v41 = vpack.c.b16 %v38, %v37
  %v42 = vpack.c.b16 %v40, %v39
  %vm45 = vcmask 261120
  %v47 = vsel %vm45, %v32, 0
  %49 = vmatprep.subr.bf16.mxu0 0
  %50 = vmatpush1.bf16.msra.mxu0 0
  %51 = vmatprep.subr.bf16.mxu0 0
  %52 = vmatpush1.bf16.msra.mxu0 0
  %53 = vmatprep.subr.bf16.mxu0 0
  %54 = vmatpush1.bf16.msra.mxu0 0
  %55 = vmatprep.subr.bf16.mxu0 0
  %56 = vmatpush1.bf16.msra.mxu0 0
  %57 = vmatprep.subr.bf16.mxu0 0
  %58 = vmatpush1.bf16.msra.mxu0 0
  %59 = vmatprep.subr.bf16.mxu0 0
  %60 = vmatpush1.bf16.msra.mxu0 0
  %61 = vmatprep.subr.bf16.mxu0 0
  %62 = vmatpush1.bf16.msra.mxu0 %v42
  %63 = vmatprep.subr.bf16.mxu0 0
  %64 = vmatpush1.bf16.msra.mxu0 %v41
  %65 = vmatprep.subr.bf16.mxu0 0
  %66 = vmatpush2.bf16.msra.mxu0 0
  %67 = vmatprep.subr.bf16.mxu0 0
  %68 = vmatpush2.bf16.msra.mxu0 0
  %69 = vmatprep.subr.bf16.mxu0 0
  %70 = vmatpush2.bf16.msra.mxu0 0
  %71 = vmatprep.subr.bf16.mxu0 0
  %72 = vmatpush2.bf16.msra.mxu0 0
  %73 = vmatprep.subr.bf16.mxu0 0
  %74 = vmatpush2.bf16.msra.mxu0 0
  %75 = vmatprep.subr.bf16.mxu0 0
  %76 = vmatpush2.bf16.msra.mxu0 0
  %77 = vmatprep.subr.bf16.mxu0 0
  %78 = vmatpush2.bf16.msra.mxu0 0
  %79 = vmatprep.subr.bf16.mxu0 0
  %80 = vmatpush2.bf16.msra.mxu0 0
  %81 = vmatprep.mubr.bf16.mxu0 0
  %82 = vmatmul.mubr.bf16.gmra.mxu0 %v47
  %v83 = vpop.f32.mrf.mxu0
  %v84 = vadd.f32 %v26, %v83
  %v85 = vpop.f32.mrf.mxu0
  %v86 = vpop.f32.mrf.mxu0
  %v87 = vadd.f32 %v26, %v86
  %v88 = vpop.f32.mrf.mxu0
  %89 = vdwg.mxu0
  %v90 = vpack.c.bf16 %v87, %v84
  %v92 = vunpack.c.l.b16 %v90
  %v93 = vunpack.c.h.b16 %v90
  %v94 = vpack.c.b16 %v92, %v92
  %v95 = vpack.c.b16 %v93, %v93
  %vm98 = vcmask 781312
  %99 = vst.msk [vmem:[%s3] sm:$0xf] %vm98, %v94
  %100 = vst.msk [vmem:[%s3 + $0x4] sm:$0xf] %vm98, %v95
  // Predicated region
  $region14: #{_lambda_.45} parent=0 // pred_check
    _
  $region15: #{_lambda_.45} parent=0 // pred_check_branch
    %102 = sbr.rel (0) target = $region17
  $region16: #{_lambda_.45} parent=0 // pred_region
    _
  $region17: #{_lambda_.45} parent=0 // pred_fallthru
    _
  // Predicated region
  $region18: #{_lambda_.45} parent=0 // pred_check
    _
  $region19: #{_lambda_.45} parent=0 // pred_check_branch
    %104 = sbr.rel (0) target = $region21
  $region20: #{_lambda_.45} parent=0 // pred_region
    _
  $region21: #{_lambda_.45} parent=0 // pred_fallthru
    _

// kernel: _lambda_.47
$region0: #{_lambda_.47}
  #allocation0 [shape = 'u32[]', space=smem, size = 0x4, offset = 0x4, fixed_abs, tag = 'smem constant byte address 0x4 - core index']
  #allocation1 [shape = 'u32[144,128]{1,0:T(1,128)}', space=vmem, size = 0x12000, scoped, tag = 'internal scratch']
  %s0 = inlined_call_operand.vmem [shape: bf16[16,32], index: 0, kind: input, shape index: {}]
  %s1 = inlined_call_operand.vmem [shape: bf16[32,32], index: 1, kind: input, shape index: {}]
  %s2 = inlined_call_operand.vmem [shape: f32[1,32], index: 2, kind: input, shape index: {}]
  %s3 = inlined_call_operand.vmem [shape: bf16[16,32], index: 3, kind: input, shape index: {}]
  %s4 = inlined_call_operand.vmem [shape: bf16[16,32], index: 4, kind: output, shape index: {}]
  %s5 = sld [smem:[#allocation0]]
  $region26: #{_lambda_.47} parent=0
    _
  %s7 = ssub.s32 1, %s5
  %s8 = scalar_select 0, %s7, %s5
  // Predicated region
  $region2: #{_lambda_.47} parent=0 // pred_check
    _
  $region3: #{_lambda_.47} parent=0 // pred_check_branch
    %10 = sbr.rel (0) target = $region5
  $region4: #{_lambda_.47} parent=0 // pred_region
    _
  $region5: #{_lambda_.47} parent=0 // pred_fallthru
    _
  // Predicated region
  $region6: #{_lambda_.47} parent=0 // pred_check
    _
  $region7: #{_lambda_.47} parent=0 // pred_check_branch
    %12 = sbr.rel (0) target = $region9
  $region8: #{_lambda_.47} parent=0 // pred_region
    _
  $region9: #{_lambda_.47} parent=0 // pred_fallthru
    _
  // Predicated region
  $region10: #{_lambda_.47} parent=0 // pred_check
    _
  $region11: #{_lambda_.47} parent=0 // pred_check_branch
    %14 = sbr.rel (0) target = $region13
  $region12: #{_lambda_.47} parent=0 // pred_region
    _
  $region13: #{_lambda_.47} parent=0 // pred_fallthru
    _
  // Predicated region
  $region14: #{_lambda_.47} parent=0 // pred_check
    _
  $region15: #{_lambda_.47} parent=0 // pred_check_branch
    %16 = sbr.rel (0) target = $region17
  $region16: #{_lambda_.47} parent=0 // pred_region
    _
  $region17: #{_lambda_.47} parent=0 // pred_fallthru
    _
  %v18 = vld [vmem:[%s0] sm:$0xf]
  %v19 = vld [vmem:[%s0 + $0x4] sm:$0xf]
  %v20 = vld [vmem:[%s1] sm:$0xf]
  %v21 = vld [vmem:[%s1 + $0x4] sm:$0xf]
  %v22 = vld [vmem:[%s1 + $0x8] sm:$0xf]
  %v23 = vld [vmem:[%s1 + $0xc] sm:$0xf]
  %v24 = vld [vmem:[%s2] sm:$0x1]
  %v26 = vlaneseq
  %v27 = vshrl.u32 %v26, 7
  %v28 = vsub.s32 0, %v27
  %v29 = vrot.slane %v24, %v28
  %v33 = vunpack.c.l.b16 %v18
  %v34 = vunpack.c.l.b16 %v19
  %v35 = vpack.c.b16 %v34, %v33
  %v40 = vunpack.c.l.b16 %v20
  %v41 = vunpack.c.l.b16 %v21
  %v42 = vunpack.c.l.b16 %v22
  %v43 = vunpack.c.l.b16 %v23
  %v44 = vpack.c.b16 %v41, %v40
  %v45 = vpack.c.b16 %v43, %v42
  %vm48 = vcmask 261120
  %v50 = vsel %vm48, %v35, 0
  %52 = vmatprep.subr.bf16.mxu0 0
  %53 = vmatpush1.bf16.msra.mxu0 0
  %54 = vmatprep.subr.bf16.mxu0 0
  %55 = vmatpush1.bf16.msra.mxu0 0
  %56 = vmatprep.subr.bf16.mxu0 0
  %57 = vmatpush1.bf16.msra.mxu0 0
  %58 = vmatprep.subr.bf16.mxu0 0
  %59 = vmatpush1.bf16.msra.mxu0 0
  %60 = vmatprep.subr.bf16.mxu0 0
  %61 = vmatpush1.bf16.msra.mxu0 0
  %62 = vmatprep.subr.bf16.mxu0 0
  %63 = vmatpush1.bf16.msra.mxu0 0
  %64 = vmatprep.subr.bf16.mxu0 0
  %65 = vmatpush1.bf16.msra.mxu0 %v45
  %66 = vmatprep.subr.bf16.mxu0 0
  %67 = vmatpush1.bf16.msra.mxu0 %v44
  %68 = vmatprep.subr.bf16.mxu0 0
  %69 = vmatpush2.bf16.msra.mxu0 0
  %70 = vmatprep.subr.bf16.mxu0 0
  %71 = vmatpush2.bf16.msra.mxu0 0
  %72 = vmatprep.subr.bf16.mxu0 0
  %73 = vmatpush2.bf16.msra.mxu0 0
  %74 = vmatprep.subr.bf16.mxu0 0
  %75 = vmatpush2.bf16.msra.mxu0 0
  %76 = vmatprep.subr.bf16.mxu0 0
  %77 = vmatpush2.bf16.msra.mxu0 0
  %78 = vmatprep.subr.bf16.mxu0 0
  %79 = vmatpush2.bf16.msra.mxu0 0
  %80 = vmatprep.subr.bf16.mxu0 0
  %81 = vmatpush2.bf16.msra.mxu0 0
  %82 = vmatprep.subr.bf16.mxu0 0
  %83 = vmatpush2.bf16.msra.mxu0 0
  %84 = vmatprep.mubr.bf16.mxu0 0
  %85 = vmatmul.mubr.bf16.gmra.mxu0 %v50
  %v86 = vpop.f32.mrf.mxu0
  %v87 = vadd.f32 %v29, %v86
  %v88 = vpop.f32.mrf.mxu0
  %v89 = vpop.f32.mrf.mxu0
  %v90 = vadd.f32 %v29, %v89
  %v91 = vpop.f32.mrf.mxu0
  %92 = vdwg.mxu0
  %v93 = vld [vmem:[%s3] sm:$0xf]
  %v94 = vld [vmem:[%s3 + $0x4] sm:$0xf]
  %v95 = vunpack.c.l.bf16 %v93
  %v96 = vunpack.c.l.bf16 %v94
  %v97 = vadd.f32 %v87, %v95
  %v98 = vadd.f32 %v90, %v96
  %v99 = vpack.c.bf16 %v98, %v97
  %v101 = vunpack.c.l.b16 %v99
  %v102 = vunpack.c.h.b16 %v99
  %v103 = vpack.c.b16 %v101, %v101
  %v104 = vpack.c.b16 %v102, %v102
  %vm107 = vcmask 257024
  %108 = vst.msk [vmem:[%s4] sm:$0xf] %vm107, %v103
  %109 = vst.msk [vmem:[%s4 + $0x4] sm:$0xf] %vm107, %v104
  // Predicated region
  $region18: #{_lambda_.47} parent=0 // pred_check
    _
  $region19: #{_lambda_.47} parent=0 // pred_check_branch
    %111 = sbr.rel (0) target = $region21
  $region20: #{_lambda_.47} parent=0 // pred_region
    _
  $region21: #{_lambda_.47} parent=0 // pred_fallthru
    _
  // Predicated region
  $region22: #{_lambda_.47} parent=0 // pred_check
    _
  $region23: #{_lambda_.47} parent=0 // pred_check_branch
    %113 = sbr.rel (0) target = $region25
  $region24: #{_lambda_.47} parent=0 // pred_region
    _
  $region25: #{_lambda_.47} parent=0 // pred_fallthru
    _

// kernel: _lambda_.46
$region0: #{_lambda_.46}
  #allocation0 [shape = 'u32[]', space=smem, size = 0x4, offset = 0x4, fixed_abs, tag = 'smem constant byte address 0x4 - core index']
  #allocation1 [shape = 'u32[144,128]{1,0:T(1,128)}', space=vmem, size = 0x12000, scoped, tag = 'internal scratch']
  %s0 = inlined_call_operand.vmem [shape: bf16[2,8,96], index: 0, kind: input, shape index: {}]
  %s1 = inlined_call_operand.vmem [shape: f32[2,1,8], index: 1, kind: input, shape index: {}]
  %s2 = inlined_call_operand.vmem [shape: bf16[2,8,32], index: 2, kind: output, shape index: {}]
  %s3 = sld [smem:[#allocation0]]
  $region41: #{_lambda_.46} parent=0
    _
  %s5 = ssub.s32 1, %s3
  %s6 = scalar_select 0, %s5, %s3
  loop: start=0, step=1, limit=4
  $region2: #{_lambda_.46} parent=0 // loop_pre_header
    _
  $region3: #{_lambda_.46} parent=0 // loop_header
    %s8 = sphi 0, %s12
    %p9 = scmp.ge.s32.totalorder %s8, 4
    %s18 = sphi 0, %s20
    %s21 = sphi 0, %s18
    %s22 = sphi 0, %s21
    %s38 = sphi 0, %s22
    %s44 = sphi 0, %s46
    %s47 = sphi 0, %s44
    %s48 = sphi 0, %s47
    %s64 = sphi 0, %s48
    %s70 = sphi 0, %s72
    %s73 = sphi 0, %s70
    %s74 = sphi 0, %s73
    %s90 = sphi 0, %s74
  $region4: #{_lambda_.46} parent=0 // loop_header_branch
    %11 = sbr.rel (%p9) target = $region8
  $region5: #{_lambda_.46} parent=0 // loop_body
    %s13 = ssub.s32 %s8, 1
    %s14 = ssub.s32 %s8, 2
    %s15 = sadd.s32 %s8, 1
    %s16 = ssub.s32 %s8, %s15
    %p17 = scmp.eq.s32.totalorder %s16, 0
    %s19 = sadd.s32 %s18, 1
    %s20 = scalar_select %p17, %s18, %s19
    %p23 = pneg %p17
    %p24 = scmp.eq.s32.totalorder %s8, 1
    %p25 = por %p23, %p24
    %p26 = scmp.ne.s32.totalorder %s18, %s21
    %p27 = scmp.eq.s32.totalorder %s8, 0
    %p28 = por %p26, %p27
    %p29 = scmp.ne.s32.totalorder %s18, %s21
    %p30 = scmp.eq.s32.totalorder %s13, 1
    %p31 = por %p29, %p30
    %p32 = scmp.ne.s32.totalorder %s21, %s22
    %p33 = scmp.eq.s32.totalorder %s13, 0
    %p34 = por %p32, %p33
    %p35 = scmp.ne.s32.totalorder %s21, %s22
    %p36 = scmp.eq.s32.totalorder %s14, 1
    %p37 = por %p35, %p36
    %p39 = scmp.ne.s32.totalorder %s22, %s38
    %p40 = scmp.eq.s32.totalorder %s14, 0
    %p41 = por %p39, %p40
    %s42 = ssub.s32 %s8, %s15
    %p43 = scmp.eq.s32.totalorder %s42, 0
    %s45 = sadd.s32 %s44, 1
    %s46 = scalar_select %p43, %s44, %s45
    %p49 = pneg %p43
    %p50 = scmp.eq.s32.totalorder %s8, 1
    %p51 = por %p49, %p50
    %p52 = scmp.ne.s32.totalorder %s44, %s47
    %p53 = scmp.eq.s32.totalorder %s8, 0
    %p54 = por %p52, %p53
    %p55 = scmp.ne.s32.totalorder %s44, %s47
    %p56 = scmp.eq.s32.totalorder %s13, 1
    %p57 = por %p55, %p56
    %p58 = scmp.ne.s32.totalorder %s47, %s48
    %p59 = scmp.eq.s32.totalorder %s13, 0
    %p60 = por %p58, %p59
    %p61 = scmp.ne.s32.totalorder %s47, %s48
    %p62 = scmp.eq.s32.totalorder %s14, 1
    %p63 = por %p61, %p62
    %p65 = scmp.ne.s32.totalorder %s48, %s64
    %p66 = scmp.eq.s32.totalorder %s14, 0
    %p67 = por %p65, %p66
    %s68 = ssub.s32 %s8, %s15
    %p69 = scmp.eq.s32.totalorder %s68, 0
    %s71 = sadd.s32 %s70, 1
    %s72 = scalar_select %p69, %s70, %s71
    %p75 = pneg %p69
    %p76 = scmp.eq.s32.totalorder %s8, 1
    %p77 = por %p75, %p76
    %p78 = scmp.ne.s32.totalorder %s70, %s73
    %p79 = scmp.eq.s32.totalorder %s8, 0
    %p80 = por %p78, %p79
    %p81 = scmp.ne.s32.totalorder %s70, %s73
    %p82 = scmp.eq.s32.totalorder %s13, 1
    %p83 = por %p81, %p82
    %p84 = scmp.ne.s32.totalorder %s73, %s74
    %p85 = scmp.eq.s32.totalorder %s13, 0
    %p86 = por %p84, %p85
    %p87 = scmp.ne.s32.totalorder %s73, %s74
    %p88 = scmp.eq.s32.totalorder %s14, 1
    %p89 = por %p87, %p88
    %p91 = scmp.ne.s32.totalorder %s74, %s90
    %p92 = scmp.eq.s32.totalorder %s14, 0
    %p93 = por %p91, %p92
    %p94 = scmp.le.s32.totalorder 1, %s8
    %p95 = scmp.lt.s32.totalorder %s8, 3
    %p96 = pnand %p94, %p95
    %p97 = pneg %p96
    // Predicated region
    $region9: #{_lambda_.46} parent=5 // pred_check
      _
    $region10: #{_lambda_.46} parent=5 // pred_check_branch
      %99 = sbr.rel (%p96) target = $region12
    $region11: #{_lambda_.46} parent=5 // pred_region
      %s100 = ssub.s32 %s8, 1
    $region12: #{_lambda_.46} parent=5 // pred_fallthru
      _
    %p101 = scmp.lt.s32.totalorder %s8, 2
    // Predicated region
    $region13: #{_lambda_.46} parent=5 // pred_check
      %p102 = pneg %p101
    $region14: #{_lambda_.46} parent=5 // pred_check_branch
      %104 = sbr.rel (%p102) target = $region16
    $region15: #{_lambda_.46} parent=5 // pred_region
      // Predicated region
      $region17: #{_lambda_.46} parent=15 // pred_check
        %p105 = pneg %p28
      $region18: #{_lambda_.46} parent=15 // pred_check_branch
        %107 = sbr.rel (%p105) target = $region20
      $region19: #{_lambda_.46} parent=15 // pred_region
        %p108 = scmp.lt.s32.totalorder %s8, 1
        %s109 = scalar_select %p108, %s8, 1
        %s110 = smul.addr %s109, 4
        %s111 = scalar_lea.vmem %s0, %s110
      $region20: #{_lambda_.46} parent=15 // pred_fallthru
        _
      // Predicated region
      $region21: #{_lambda_.46} parent=15 // pred_check
        %p112 = pneg %p54
      $region22: #{_lambda_.46} parent=15 // pred_check_branch
        %114 = sbr.rel (%p112) target = $region24
      $region23: #{_lambda_.46} parent=15 // pred_region
        %p115 = scmp.lt.s32.totalorder %s8, 1
        %s116 = scalar_select %p115, %s8, 1
        %s117 = scalar_lea.vmem %s1, %s116
      $region24: #{_lambda_.46} parent=15 // pred_fallthru
        _
    $region16: #{_lambda_.46} parent=5 // pred_fallthru
      _
    %p118 = scmp.le.s32.totalorder 1, %s8
    %p119 = scmp.lt.s32.totalorder %s8, 3
    %p120 = pnand %p118, %p119
    %p121 = pneg %p120
    // Predicated region
    $region25: #{_lambda_.46} parent=5 // pred_check
      _
    $region26: #{_lambda_.46} parent=5 // pred_check_branch
      %123 = sbr.rel (%p120) target = $region28
    $region27: #{_lambda_.46} parent=5 // pred_region
      %s124 = ssub.s32 %s8, 1
      %p125 = scmp.lt.s32.totalorder %s13, 1
      %s126 = scalar_select %p125, %s13, 1
      %s127 = smul.addr %s126, 4
      %s128 = scalar_lea.vmem %s0, %s127
      %p129 = pneg %p34
      %p130 = pneg %p31
      %p131 = scmp.lt.s32.totalorder %s13, 1
      %s132 = scalar_select %p131, %s13, 1
      %s133 = scalar_lea.vmem %s1, %s132
      %p134 = pneg %p60
      %p135 = pneg %p57
      %p136 = pneg %p86
      %p137 = pneg %p83
      %p138 = scmp.lt.s32.totalorder %s13, 1
      %s139 = scalar_select %p138, %s13, 1
      %s140 = smul.addr %s139, 4
      %s141 = scalar_lea.vmem %s2, %s140
      %p142 = scmp.lt.s32.totalorder %s13, 1
      %s143 = scalar_select %p142, %s13, 1
      %s144 = smul.addr %s143, 4
      %s145 = scalar_lea.vmem %s0, %s144
      %p146 = scmp.lt.s32.totalorder %s13, 1
      %s147 = scalar_select %p146, %s13, 1
      %s148 = scalar_lea.vmem %s1, %s147
      %p149 = scmp.lt.s32.totalorder %s13, 1
      %s150 = scalar_select %p149, %s13, 1
      %s151 = smul.addr %s150, 4
      %s152 = scalar_lea.vmem %s2, %s151
      %v154 = vld [vmem:[%s148] sm:$0x1]
      %v155 = vld [vmem:[%s145] sm:$0xf]
      %v156 = vunpack.c.l.bf16 %v155
      %v157 = vmul.f32 %v156, 0.25
      %v158 = vpack.c.bf16 %v157, %v157
      %v160 = vlaneseq
      %v161 = vshrl.u32 %v160, 7
      %v162 = vsub.s32 0, %v161
      %v163 = vrot.slane %v154, %v162
      %v166 = vunpack.c.l.b16 %v155
      %v167 = vpack.c.b16 %v166, %v166
      %168 = vrot.lane.b32.xlu0 %v167, 96
      %v169 = vpop.permute.xlu0 %168
      %vm170 = vcmask 130048
      %v172 = vsel %vm170, %v158, 0
      %v175 = vsel %vm170, %v169, 0
      %177 = vmatprep.subr.bf16.mxu0 0
      %178 = vmatpush1.bf16.xpose.msra.mxu0 0
      %179 = vmatprep.subr.bf16.mxu0 0
      %180 = vmatpush1.bf16.xpose.msra.mxu0 0
      %181 = vmatprep.subr.bf16.mxu0 0
      %182 = vmatpush1.bf16.xpose.msra.mxu0 0
      %183 = vmatprep.subr.bf16.mxu0 0
      %184 = vmatpush1.bf16.xpose.msra.mxu0 0
      %185 = vmatprep.subr.bf16.mxu0 0
      %186 = vmatpush1.bf16.xpose.msra.mxu0 0
      %187 = vmatprep.subr.bf16.mxu0 0
      %188 = vmatpush1.bf16.xpose.msra.mxu0 0
      %189 = vmatprep.subr.bf16.mxu0 0
      %190 = vmatpush1.bf16.xpose.msra.mxu0 0
      %191 = vmatprep.subr.bf16.mxu0 0
      %192 = vmatpush1.bf16.xpose.msra.mxu0 %v175
      %193 = vmatprep.subr.bf16.mxu0 0
      %194 = vmatpush2.bf16.xpose.msra.mxu0 0
      %195 = vmatprep.subr.bf16.mxu0 0
      %196 = vmatpush2.bf16.xpose.msra.mxu0 0
      %197 = vmatprep.subr.bf16.mxu0 0
      %198 = vmatpush2.bf16.xpose.msra.mxu0 0
      %199 = vmatprep.subr.bf16.mxu0 0
      %200 = vmatpush2.bf16.xpose.msra.mxu0 0
      %201 = vmatprep.subr.bf16.mxu0 0
      %202 = vmatpush2.bf16.xpose.msra.mxu0 0
      %203 = vmatprep.subr.bf16.mxu0 0
      %204 = vmatpush2.bf16.xpose.msra.mxu0 0
      %205 = vmatprep.subr.bf16.mxu0 0
      %206 = vmatpush2.bf16.xpose.msra.mxu0 0
      %207 = vmatprep.subr.bf16.mxu0 0
      %208 = vmatpush2.bf16.xpose.msra.mxu0 0
      %209 = vmatprep.mubr.bf16.mxu0 0
      %210 = vmatmul.mubr.bf16.gmra.mxu0 %v172
      %v211 = vpop.f32.mrf.mxu0
      %v212 = vadd.f32 %v163, %v211
      %v213 = vpop.f32.mrf.mxu0
      %v214 = vpop.f32.mrf.mxu0
      %v215 = vpop.f32.mrf.mxu0
      %216 = vdwg.mxu0
      %vm217 = vcmask 64512
      %v218 = vsel %vm217, %v212, -inf
      %219 = vmax.xlane.f32.xlu0 %v218
      %v220 = vpop.xlane.xlu0 %219
      %v221 = vsub.f32 %v212, %v220
      %v222 = vmul.f32 %v221, 1.442695
      %v223 = vpow.pop %v222
      %v224 = vsel %vm217, %v223, 0.0
      %225 = vadd.xlane.f32.xlu0 %v224
      %v226 = vpop.xlane.xlu0 %225
      %v227 = vpack.c.bf16 %v223, %v223
      %228 = vrot.lane.b32.xlu0 %v167, 64
      %v229 = vpop.permute.xlu0 %228
      %v231 = vsel %vm217, %v227, 0
      %vm233 = vcmask 1043456
      %v235 = vsel %vm233, %v229, 0
      %237 = vmatprep.subr.bf16.mxu0 0
      %238 = vmatpush1.bf16.msra.mxu0 0
      %239 = vmatprep.subr.bf16.mxu0 0
      %240 = vmatpush1.bf16.msra.mxu0 0
      %241 = vmatprep.subr.bf16.mxu0 0
      %242 = vmatpush1.bf16.msra.mxu0 0
      %243 = vmatprep.subr.bf16.mxu0 0
      %244 = vmatpush1.bf16.msra.mxu0 0
      %245 = vmatprep.subr.bf16.mxu0 0
      %246 = vmatpush1.bf16.msra.mxu0 0
      %247 = vmatprep.subr.bf16.mxu0 0
      %248 = vmatpush1.bf16.msra.mxu0 0
      %249 = vmatprep.subr.bf16.mxu0 0
      %250 = vmatpush1.bf16.msra.mxu0 0
      %251 = vmatprep.subr.bf16.mxu0 0
      %252 = vmatpush1.bf16.msra.mxu0 %v235
      %253 = vmatprep.subr.bf16.mxu0 0
      %254 = vmatpush2.bf16.msra.mxu0 0
      %255 = vmatprep.subr.bf16.mxu0 0
      %256 = vmatpush2.bf16.msra.mxu0 0
      %257 = vmatprep.subr.bf16.mxu0 0
      %258 = vmatpush2.bf16.msra.mxu0 0
      %259 = vmatprep.subr.bf16.mxu0 0
      %260 = vmatpush2.bf16.msra.mxu0 0
      %261 = vmatprep.subr.bf16.mxu0 0
      %262 = vmatpush2.bf16.msra.mxu0 0
      %263 = vmatprep.subr.bf16.mxu0 0
      %264 = vmatpush2.bf16.msra.mxu0 0
      %265 = vmatprep.subr.bf16.mxu0 0
      %266 = vmatpush2.bf16.msra.mxu0 0
      %267 = vmatprep.subr.bf16.mxu0 0
      %268 = vmatpush2.bf16.msra.mxu0 0
      %269 = vmatprep.mubr.bf16.mxu0 0
      %270 = vmatmul.mubr.bf16.gmra.mxu0 %v231
      %v271 = vpop.f32.mrf.mxu0
      %v272 = vadd.f32 0.0, %v271
      %v273 = vpop.f32.mrf.mxu0
      %v274 = vpop.f32.mrf.mxu0
      %v275 = vpop.f32.mrf.mxu0
      %276 = vdwg.mxu0
      %v277 = vrcp.pop %v226
      %v278 = vmul.f32 %v272, %v277
      %v279 = vpack.c.bf16 %v278, %v278
      %vm280 = vcmask 125952
      %281 = vst.msk [vmem:[%s152] sm:$0xf] %vm280, %v279
      %v282 = vld [vmem:[%s145] sm:$0xf]
      %v283 = vunpack.c.l.bf16 %v282
      %v284 = vmul.f32 %v283, 0.25
      %v285 = vpack.c.bf16 %v284, %v284
      %287 = vrot.lane.b32.xlu0 %v285, 112
      %v288 = vpop.permute.xlu0 %287
      %v290 = vunpack.c.l.b16 %v282
      %v291 = vpack.c.b16 %v290, %v290
      %292 = vrot.lane.b32.xlu0 %v291, 80
      %v293 = vpop.permute.xlu0 %292
      %v295 = vsel %vm170, %v288, 0
      %v298 = vsel %vm170, %v293, 0
      %300 = vmatprep.subr.bf16.mxu0 0
      %301 = vmatpush1.bf16.xpose.msra.mxu0 0
      %302 = vmatprep.subr.bf16.mxu0 0
      %303 = vmatpush1.bf16.xpose.msra.mxu0 0
      %304 = vmatprep.subr.bf16.mxu0 0
      %305 = vmatpush1.bf16.xpose.msra.mxu0 0
      %306 = vmatprep.subr.bf16.mxu0 0
      %307 = vmatpush1.bf16.xpose.msra.mxu0 0
      %308 = vmatprep.subr.bf16.mxu0 0
      %309 = vmatpush1.bf16.xpose.msra.mxu0 0
      %310 = vmatprep.subr.bf16.mxu0 0
      %311 = vmatpush1.bf16.xpose.msra.mxu0 0
      %312 = vmatprep.subr.bf16.mxu0 0
      %313 = vmatpush1.bf16.xpose.msra.mxu0 0
      %314 = vmatprep.subr.bf16.mxu0 0
      %315 = vmatpush1.bf16.xpose.msra.mxu0 %v298
      %316 = vmatprep.subr.bf16.mxu0 0
      %317 = vmatpush2.bf16.xpose.msra.mxu0 0
      %318 = vmatprep.subr.bf16.mxu0 0
      %319 = vmatpush2.bf16.xpose.msra.mxu0 0
      %320 = vmatprep.subr.bf16.mxu0 0
      %321 = vmatpush2.bf16.xpose.msra.mxu0 0
      %322 = vmatprep.subr.bf16.mxu0 0
      %323 = vmatpush2.bf16.xpose.msra.mxu0 0
      %324 = vmatprep.subr.bf16.mxu0 0
      %325 = vmatpush2.bf16.xpose.msra.mxu0 0
      %326 = vmatprep.subr.bf16.mxu0 0
      %327 = vmatpush2.bf16.xpose.msra.mxu0 0
      %328 = vmatprep.subr.bf16.mxu0 0
      %329 = vmatpush2.bf16.xpose.msra.mxu0 0
      %330 = vmatprep.subr.bf16.mxu0 0
      %331 = vmatpush2.bf16.xpose.msra.mxu0 0
      %332 = vmatprep.mubr.bf16.mxu0 0
      %333 = vmatmul.mubr.bf16.gmra.mxu0 %v295
      %v334 = vpop.f32.mrf.mxu0
      %v335 = vadd.f32 %v163, %v334
      %v336 = vpop.f32.mrf.mxu0
      %v337 = vpop.f32.mrf.mxu0
      %v338 = vpop.f32.mrf.mxu0
      %339 = vdwg.mxu0
      %v340 = vsel %vm217, %v335, -inf
      %341 = vmax.xlane.f32.xlu0 %v340
      %v342 = vpop.xlane.xlu0 %341
      %v343 = vsub.f32 %v335, %v342
      %v344 = vmul.f32 %v343, 1.442695
      %v345 = vpow.pop %v344
      %v346 = vsel %vm217, %v345, 0.0
      %347 = vadd.xlane.f32.xlu0 %v346
      %v348 = vpop.xlane.xlu0 %347
      %v349 = vpack.c.bf16 %v345, %v345
      %350 = vrot.lane.b32.xlu0 %v291, 48
      %v351 = vpop.permute.xlu0 %350
      %v353 = vsel %vm217, %v349, 0
      %v356 = vsel %vm233, %v351, 0
      %358 = vmatprep.subr.bf16.mxu0 0
      %359 = vmatpush1.bf16.msra.mxu0 0
      %360 = vmatprep.subr.bf16.mxu0 0
      %361 = vmatpush1.bf16.msra.mxu0 0
      %362 = vmatprep.subr.bf16.mxu0 0
      %363 = vmatpush1.bf16.msra.mxu0 0
      %364 = vmatprep.subr.bf16.mxu0 0
      %365 = vmatpush1.bf16.msra.mxu0 0
      %366 = vmatprep.subr.bf16.mxu0 0
      %367 = vmatpush1.bf16.msra.mxu0 0
      %368 = vmatprep.subr.bf16.mxu0 0
      %369 = vmatpush1.bf16.msra.mxu0 0
      %370 = vmatprep.subr.bf16.mxu0 0
      %371 = vmatpush1.bf16.msra.mxu0 0
      %372 = vmatprep.subr.bf16.mxu0 0
      %373 = vmatpush1.bf16.msra.mxu0 %v356
      %374 = vmatprep.subr.bf16.mxu0 0
      %375 = vmatpush2.bf16.msra.mxu0 0
      %376 = vmatprep.subr.bf16.mxu0 0
      %377 = vmatpush2.bf16.msra.mxu0 0
      %378 = vmatprep.subr.bf16.mxu0 0
      %379 = vmatpush2.bf16.msra.mxu0 0
      %380 = vmatprep.subr.bf16.mxu0 0
      %381 = vmatpush2.bf16.msra.mxu0 0
      %382 = vmatprep.subr.bf16.mxu0 0
      %383 = vmatpush2.bf16.msra.mxu0 0
      %384 = vmatprep.subr.bf16.mxu0 0
      %385 = vmatpush2.bf16.msra.mxu0 0
      %386 = vmatprep.subr.bf16.mxu0 0
      %387 = vmatpush2.bf16.msra.mxu0 0
      %388 = vmatprep.subr.bf16.mxu0 0
      %389 = vmatpush2.bf16.msra.mxu0 0
      %390 = vmatprep.mubr.bf16.mxu0 0
      %391 = vmatmul.mubr.bf16.gmra.mxu0 %v353
      %v392 = vpop.f32.mrf.mxu0
      %v393 = vadd.f32 0.0, %v392
      %v394 = vpop.f32.mrf.mxu0
      %v395 = vpop.f32.mrf.mxu0
      %v396 = vpop.f32.mrf.mxu0
      %397 = vdwg.mxu0
      %v398 = vrcp.pop %v348
      %v399 = vmul.f32 %v393, %v398
      %v400 = vpack.c.bf16 %v399, %v399
      %v402 = vunpack.c.l.b16 %v400
      %v403 = vpack.c.b16 %v402, %v402
      %404 = vrot.lane.b32.xlu0 %v403, 16
      %v405 = vpop.permute.xlu0 %404
      %vm407 = vcmask 257152
      %408 = vst.msk [vmem:[%s152] sm:$0xf] %vm407, %v405
      %p409 = scmp.lt.s32.totalorder %s13, 1
      %s410 = scalar_select %p409, %s13, 1
      %s411 = smul.addr %s410, 4
      %s412 = scalar_lea.vmem %s2, %s411
      // Predicated region
      $region29: #{_lambda_.46} parent=27 // pred_check
        %p413 = pneg %p83
      $region30: #{_lambda_.46} parent=27 // pred_check_branch
        %415 = sbr.rel (%p413) target = $region32
      $region31: #{_lambda_.46} parent=27 // pred_region
        _
      $region32: #{_lambda_.46} parent=27 // pred_fallthru
        _
    $region28: #{_lambda_.46} parent=5 // pred_fallthru
      _
    %p416 = scmp.le.s32.totalorder 2, %s8
    // Predicated region
    $region33: #{_lambda_.46} parent=5 // pred_check
      %p417 = pneg %p416
    $region34: #{_lambda_.46} parent=5 // pred_check_branch
      %419 = sbr.rel (%p417) target = $region36
    $region35: #{_lambda_.46} parent=5 // pred_region
      %s420 = ssub.s32 %s8, 2
      // Predicated region
      $region37: #{_lambda_.46} parent=35 // pred_check
        %p421 = pneg %p89
      $region38: #{_lambda_.46} parent=35 // pred_check_branch
        %423 = sbr.rel (%p421) target = $region40
      $region39: #{_lambda_.46} parent=35 // pred_region
        %p424 = scmp.lt.s32.totalorder %s14, 1
        %s425 = scalar_select %p424, %s14, 1
        %s426 = smul.addr %s425, 4
        %s427 = scalar_lea.vmem %s2, %s426
      $region40: #{_lambda_.46} parent=35 // pred_fallthru
        _
    $region36: #{_lambda_.46} parent=5 // pred_fallthru
      _
  $region6: #{_lambda_.46} parent=0 // loop_footer
    %s12 = sadd.s32 1, %s8
  $region7: #{_lambda_.46} parent=0 // loop_footer_branch
    %7 = sbr.rel target = $region3
  $region8: #{_lambda_.46} parent=0 // loop_exit
    _

// kernel: _lambda_.50
$region0: #{_lambda_.50}
  #allocation0 [shape = 'u32[]', space=smem, size = 0x4, offset = 0x4, fixed_abs, tag = 'smem constant byte address 0x4 - core index']
  #allocation1 [shape = 'u32[144,128]{1,0:T(1,128)}', space=vmem, size = 0x12000, scoped, tag = 'internal scratch']
  %s0 = inlined_call_operand.vmem [shape: bf16[16,64], index: 0, kind: input, shape index: {}]
  %s1 = inlined_call_operand.vmem [shape: bf16[64,32], index: 1, kind: input, shape index: {}]
  %s2 = inlined_call_operand.vmem [shape: f32[1,32], index: 2, kind: input, shape index: {}]
  %s3 = inlined_call_operand.vmem [shape: bf16[16,32], index: 3, kind: input, shape index: {}]
  %s4 = inlined_call_operand.vmem [shape: bf16[16,32], index: 4, kind: output, shape index: {}]
  %s5 = sld [smem:[#allocation0]]
  $region26: #{_lambda_.50} parent=0
    _
  %s7 = ssub.s32 1, %s5
  %s8 = scalar_select 0, %s7, %s5
  // Predicated region
  $region2: #{_lambda_.50} parent=0 // pred_check
    _
  $region3: #{_lambda_.50} parent=0 // pred_check_branch
    %10 = sbr.rel (0) target = $region5
  $region4: #{_lambda_.50} parent=0 // pred_region
    _
  $region5: #{_lambda_.50} parent=0 // pred_fallthru
    _
  // Predicated region
  $region6: #{_lambda_.50} parent=0 // pred_check
    _
  $region7: #{_lambda_.50} parent=0 // pred_check_branch
    %12 = sbr.rel (0) target = $region9
  $region8: #{_lambda_.50} parent=0 // pred_region
    _
  $region9: #{_lambda_.50} parent=0 // pred_fallthru
    _
  // Predicated region
  $region10: #{_lambda_.50} parent=0 // pred_check
    _
  $region11: #{_lambda_.50} parent=0 // pred_check_branch
    %14 = sbr.rel (0) target = $region13
  $region12: #{_lambda_.50} parent=0 // pred_region
    _
  $region13: #{_lambda_.50} parent=0 // pred_fallthru
    _
  // Predicated region
  $region14: #{_lambda_.50} parent=0 // pred_check
    _
  $region15: #{_lambda_.50} parent=0 // pred_check_branch
    %16 = sbr.rel (0) target = $region17
  $region16: #{_lambda_.50} parent=0 // pred_region
    _
  $region17: #{_lambda_.50} parent=0 // pred_fallthru
    _
  %v18 = vld [vmem:[%s0] sm:$0xf]
  %v19 = vld [vmem:[%s0 + $0x4] sm:$0xf]
  %v20 = vld [vmem:[%s1] sm:$0xf]
  %v21 = vld [vmem:[%s1 + $0x4] sm:$0xf]
  %v22 = vld [vmem:[%s1 + $0x8] sm:$0xf]
  %v23 = vld [vmem:[%s1 + $0xc] sm:$0xf]
  %v24 = vld [vmem:[%s1 + $0x10] sm:$0xf]
  %v25 = vld [vmem:[%s1 + $0x14] sm:$0xf]
  %v26 = vld [vmem:[%s1 + $0x18] sm:$0xf]
  %v27 = vld [vmem:[%s1 + $0x1c] sm:$0xf]
  %v28 = vld [vmem:[%s2] sm:$0x1]
  %v30 = vlaneseq
  %v31 = vshrl.u32 %v30, 7
  %v32 = vsub.s32 0, %v31
  %v33 = vrot.slane %v28, %v32
  %v37 = vunpack.c.l.b16 %v18
  %v38 = vunpack.c.l.b16 %v19
  %v39 = vpack.c.b16 %v38, %v37
  %v48 = vunpack.c.l.b16 %v20
  %v49 = vunpack.c.l.b16 %v21
  %v50 = vunpack.c.l.b16 %v22
  %v51 = vunpack.c.l.b16 %v23
  %v52 = vunpack.c.l.b16 %v24
  %v53 = vunpack.c.l.b16 %v25
  %v54 = vunpack.c.l.b16 %v26
  %v55 = vunpack.c.l.b16 %v27
  %v56 = vpack.c.b16 %v49, %v48
  %v57 = vpack.c.b16 %v51, %v50
  %v58 = vpack.c.b16 %v53, %v52
  %v59 = vpack.c.b16 %v55, %v54
  %vm64 = vcmask 523264
  %v66 = vsel %vm64, %v39, 0
  %68 = vmatprep.subr.bf16.mxu0 0
  %69 = vmatpush1.bf16.msra.mxu0 0
  %70 = vmatprep.subr.bf16.mxu0 0
  %71 = vmatpush1.bf16.msra.mxu0 0
  %72 = vmatprep.subr.bf16.mxu0 0
  %73 = vmatpush1.bf16.msra.mxu0 0
  %74 = vmatprep.subr.bf16.mxu0 0
  %75 = vmatpush1.bf16.msra.mxu0 0
  %76 = vmatprep.subr.bf16.mxu0 0
  %77 = vmatpush1.bf16.msra.mxu0 %v59
  %78 = vmatprep.subr.bf16.mxu0 0
  %79 = vmatpush1.bf16.msra.mxu0 %v58
  %80 = vmatprep.subr.bf16.mxu0 0
  %81 = vmatpush1.bf16.msra.mxu0 %v57
  %82 = vmatprep.subr.bf16.mxu0 0
  %83 = vmatpush1.bf16.msra.mxu0 %v56
  %84 = vmatprep.subr.bf16.mxu0 0
  %85 = vmatpush2.bf16.msra.mxu0 0
  %86 = vmatprep.subr.bf16.mxu0 0
  %87 = vmatpush2.bf16.msra.mxu0 0
  %88 = vmatprep.subr.bf16.mxu0 0
  %89 = vmatpush2.bf16.msra.mxu0 0
  %90 = vmatprep.subr.bf16.mxu0 0
  %91 = vmatpush2.bf16.msra.mxu0 0
  %92 = vmatprep.subr.bf16.mxu0 0
  %93 = vmatpush2.bf16.msra.mxu0 0
  %94 = vmatprep.subr.bf16.mxu0 0
  %95 = vmatpush2.bf16.msra.mxu0 0
  %96 = vmatprep.subr.bf16.mxu0 0
  %97 = vmatpush2.bf16.msra.mxu0 0
  %98 = vmatprep.subr.bf16.mxu0 0
  %99 = vmatpush2.bf16.msra.mxu0 0
  %100 = vmatprep.mubr.bf16.mxu0 0
  %101 = vmatmul.mubr.bf16.gmra.mxu0 %v66
  %v102 = vpop.f32.mrf.mxu0
  %v103 = vadd.f32 %v33, %v102
  %v104 = vpop.f32.mrf.mxu0
  %v105 = vpop.f32.mrf.mxu0
  %v106 = vadd.f32 %v33, %v105
  %v107 = vpop.f32.mrf.mxu0
  %108 = vdwg.mxu0
  %v109 = vld [vmem:[%s3] sm:$0xf]
  %v110 = vld [vmem:[%s3 + $0x4] sm:$0xf]
  %v111 = vunpack.c.l.bf16 %v109
  %v112 = vunpack.c.l.bf16 %v110
  %v113 = vadd.f32 %v103, %v111
  %v114 = vadd.f32 %v106, %v112
  %v115 = vpack.c.bf16 %v114, %v113
  %v117 = vunpack.c.l.b16 %v115
  %v118 = vunpack.c.h.b16 %v115
  %v119 = vpack.c.b16 %v117, %v117
  %v120 = vpack.c.b16 %v118, %v118
  %vm123 = vcmask 257024
  %124 = vst.msk [vmem:[%s4] sm:$0xf] %vm123, %v119
  %125 = vst.msk [vmem:[%s4 + $0x4] sm:$0xf] %vm123, %v120
  // Predicated region
  $region18: #{_lambda_.50} parent=0 // pred_check
    _
  $region19: #{_lambda_.50} parent=0 // pred_check_branch
    %127 = sbr.rel (0) target = $region21
  $region20: #{_lambda_.50} parent=0 // pred_region
    _
  $region21: #{_lambda_.50} parent=0 // pred_fallthru
    _
  // Predicated region
  $region22: #{_lambda_.50} parent=0 // pred_check
    _
  $region23: #{_lambda_.50} parent=0 // pred_check_branch
    %129 = sbr.rel (0) target = $region25
  $region24: #{_lambda_.50} parent=0 // pred_region
    _
  $region25: #{_lambda_.50} parent=0 // pred_fallthru
    _

// kernel: _lambda_.49
$region0: #{_lambda_.49}
  #allocation0 [shape = 'u32[]', space=smem, size = 0x4, offset = 0x4, fixed_abs, tag = 'smem constant byte address 0x4 - core index']
  #allocation1 [shape = 'u32[144,128]{1,0:T(1,128)}', space=vmem, size = 0x12000, scoped, tag = 'internal scratch']
  %s0 = inlined_call_operand.vmem [shape: bf16[16,32], index: 0, kind: input, shape index: {}]
  %s1 = inlined_call_operand.vmem [shape: bf16[32,64], index: 1, kind: input, shape index: {}]
  %s2 = inlined_call_operand.vmem [shape: f32[1,64], index: 2, kind: input, shape index: {}]
  %s3 = inlined_call_operand.vmem [shape: bf16[16,64], index: 3, kind: output, shape index: {}]
  %s4 = sld [smem:[#allocation0]]
  $region22: #{_lambda_.49} parent=0
    _
  %s6 = ssub.s32 1, %s4
  %s7 = scalar_select 0, %s6, %s4
  // Predicated region
  $region2: #{_lambda_.49} parent=0 // pred_check
    _
  $region3: #{_lambda_.49} parent=0 // pred_check_branch
    %9 = sbr.rel (0) target = $region5
  $region4: #{_lambda_.49} parent=0 // pred_region
    _
  $region5: #{_lambda_.49} parent=0 // pred_fallthru
    _
  // Predicated region
  $region6: #{_lambda_.49} parent=0 // pred_check
    _
  $region7: #{_lambda_.49} parent=0 // pred_check_branch
    %11 = sbr.rel (0) target = $region9
  $region8: #{_lambda_.49} parent=0 // pred_region
    _
  $region9: #{_lambda_.49} parent=0 // pred_fallthru
    _
  // Predicated region
  $region10: #{_lambda_.49} parent=0 // pred_check
    _
  $region11: #{_lambda_.49} parent=0 // pred_check_branch
    %13 = sbr.rel (0) target = $region13
  $region12: #{_lambda_.49} parent=0 // pred_region
    _
  $region13: #{_lambda_.49} parent=0 // pred_fallthru
    _
  %v15 = vld [vmem:[%s0] sm:$0xf]
  %v16 = vld [vmem:[%s0 + $0x4] sm:$0xf]
  %v17 = vld [vmem:[%s1] sm:$0xf]
  %v18 = vld [vmem:[%s1 + $0x4] sm:$0xf]
  %v19 = vld [vmem:[%s1 + $0x8] sm:$0xf]
  %v20 = vld [vmem:[%s1 + $0xc] sm:$0xf]
  %v21 = vld [vmem:[%s2] sm:$0x1]
  %v23 = vlaneseq
  %v24 = vshrl.u32 %v23, 7
  %v25 = vsub.s32 0, %v24
  %v26 = vrot.slane %v21, %v25
  %v30 = vunpack.c.l.b16 %v15
  %v31 = vunpack.c.l.b16 %v16
  %v32 = vpack.c.b16 %v31, %v30
  %v37 = vunpack.c.l.b16 %v17
  %v38 = vunpack.c.l.b16 %v18
  %v39 = vunpack.c.l.b16 %v19
  %v40 = vunpack.c.l.b16 %v20
  %v41 = vpack.c.b16 %v38, %v37
  %v42 = vpack.c.b16 %v40, %v39
  %vm45 = vcmask 261120
  %v47 = vsel %vm45, %v32, 0
  %49 = vmatprep.subr.bf16.mxu0 0
  %50 = vmatpush1.bf16.msra.mxu0 0
  %51 = vmatprep.subr.bf16.mxu0 0
  %52 = vmatpush1.bf16.msra.mxu0 0
  %53 = vmatprep.subr.bf16.mxu0 0
  %54 = vmatpush1.bf16.msra.mxu0 0
  %55 = vmatprep.subr.bf16.mxu0 0
  %56 = vmatpush1.bf16.msra.mxu0 0
  %57 = vmatprep.subr.bf16.mxu0 0
  %58 = vmatpush1.bf16.msra.mxu0 0
  %59 = vmatprep.subr.bf16.mxu0 0
  %60 = vmatpush1.bf16.msra.mxu0 0
  %61 = vmatprep.subr.bf16.mxu0 0
  %62 = vmatpush1.bf16.msra.mxu0 %v42
  %63 = vmatprep.subr.bf16.mxu0 0
  %64 = vmatpush1.bf16.msra.mxu0 %v41
  %65 = vmatprep.subr.bf16.mxu0 0
  %66 = vmatpush2.bf16.msra.mxu0 0
  %67 = vmatprep.subr.bf16.mxu0 0
  %68 = vmatpush2.bf16.msra.mxu0 0
  %69 = vmatprep.subr.bf16.mxu0 0
  %70 = vmatpush2.bf16.msra.mxu0 0
  %71 = vmatprep.subr.bf16.mxu0 0
  %72 = vmatpush2.bf16.msra.mxu0 0
  %73 = vmatprep.subr.bf16.mxu0 0
  %74 = vmatpush2.bf16.msra.mxu0 0
  %75 = vmatprep.subr.bf16.mxu0 0
  %76 = vmatpush2.bf16.msra.mxu0 0
  %77 = vmatprep.subr.bf16.mxu0 0
  %78 = vmatpush2.bf16.msra.mxu0 0
  %79 = vmatprep.subr.bf16.mxu0 0
  %80 = vmatpush2.bf16.msra.mxu0 0
  %81 = vmatprep.mubr.bf16.mxu0 0
  %82 = vmatmul.mubr.bf16.gmra.mxu0 %v47
  %v83 = vpop.f32.mrf.mxu0
  %v84 = vadd.f32 %v26, %v83
  %v85 = vpop.f32.mrf.mxu0
  %v86 = vpop.f32.mrf.mxu0
  %v87 = vadd.f32 %v26, %v86
  %v88 = vpop.f32.mrf.mxu0
  %89 = vdwg.mxu0
  %v90 = vmul.f32 %v84, 0.5
  %v91 = vmul.f32 %v87, 0.5
  %v92 = vmul.f32 %v84, 0.044715
  %v93 = vmul.f32 %v87, 0.044715
  %v94 = vmul.f32 %v92, %v84
  %v95 = vmul.f32 %v93, %v87
  %v96 = vmul.f32 %v94, %v84
  %v97 = vmul.f32 %v95, %v87
  %v98 = vadd.f32 %v84, %v96
  %v99 = vadd.f32 %v87, %v97
  %v100 = vmul.f32 %v98, 0.7978846
  %v101 = vmul.f32 %v99, 0.7978846
  %v102 = vtanh.pop %v100
  %v103 = vtanh.pop %v101
  %v104 = vadd.f32 %v102, 1.0
  %v105 = vadd.f32 %v103, 1.0
  %v106 = vmul.f32 %v90, %v104
  %v107 = vmul.f32 %v91, %v105
  %v108 = vpack.c.bf16 %v107, %v106
  %v110 = vunpack.c.l.b16 %v108
  %v111 = vunpack.c.h.b16 %v108
  %v112 = vpack.c.b16 %v110, %v110
  %v113 = vpack.c.b16 %v111, %v111
  %vm116 = vcmask 519168
  %117 = vst.msk [vmem:[%s3] sm:$0xf] %vm116, %v112
  %118 = vst.msk [vmem:[%s3 + $0x4] sm:$0xf] %vm116, %v113
  // Predicated region
  $region14: #{_lambda_.49} parent=0 // pred_check
    _
  $region15: #{_lambda_.49} parent=0 // pred_check_branch
    %120 = sbr.rel (0) target = $region17
  $region16: #{_lambda_.49} parent=0 // pred_region
    _
  $region17: #{_lambda_.49} parent=0 // pred_fallthru
    _
  // Predicated region
  $region18: #{_lambda_.49} parent=0 // pred_check
    _
  $region19: #{_lambda_.49} parent=0 // pred_check_branch
    %122 = sbr.rel (0) target = $region21
  $region20: #{_lambda_.49} parent=0 // pred_region
    _
  $region21: #{_lambda_.49} parent=0 // pred_fallthru
    _

// kernel: _lambda_.59
$region0: #{_lambda_.59}
  #allocation0 [shape = 'u32[]', space=smem, size = 0x4, offset = 0x4, fixed_abs, tag = 'smem constant byte address 0x4 - core index']
  #allocation1 [shape = 'u32[144,128]{1,0:T(1,128)}', space=vmem, size = 0x12000, scoped, tag = 'internal scratch']
  %s0 = inlined_call_operand.vmem [shape: bf16[2,32], index: 0, kind: input, shape index: {}]
  %s1 = inlined_call_operand.vmem [shape: bf16[32,32], index: 1, kind: input, shape index: {}]
  %s2 = inlined_call_operand.vmem [shape: f32[1,32], index: 2, kind: input, shape index: {}]
  %s3 = inlined_call_operand.vmem [shape: bf16[2,32], index: 3, kind: output, shape index: {}]
  %s4 = sld [smem:[#allocation0]]
  $region22: #{_lambda_.59} parent=0
    _
  %s6 = ssub.s32 1, %s4
  %s7 = scalar_select 0, %s6, %s4
  // Predicated region
  $region2: #{_lambda_.59} parent=0 // pred_check
    _
  $region3: #{_lambda_.59} parent=0 // pred_check_branch
    %9 = sbr.rel (0) target = $region5
  $region4: #{_lambda_.59} parent=0 // pred_region
    _
  $region5: #{_lambda_.59} parent=0 // pred_fallthru
    _
  // Predicated region
  $region6: #{_lambda_.59} parent=0 // pred_check
    _
  $region7: #{_lambda_.59} parent=0 // pred_check_branch
    %11 = sbr.rel (0) target = $region9
  $region8: #{_lambda_.59} parent=0 // pred_region
    _
  $region9: #{_lambda_.59} parent=0 // pred_fallthru
    _
  // Predicated region
  $region10: #{_lambda_.59} parent=0 // pred_check
    _
  $region11: #{_lambda_.59} parent=0 // pred_check_branch
    %13 = sbr.rel (0) target = $region13
  $region12: #{_lambda_.59} parent=0 // pred_region
    _
  $region13: #{_lambda_.59} parent=0 // pred_fallthru
    _
  %v15 = vld [vmem:[%s0] sm:$0x1]
  %v16 = vld [vmem:[%s1] sm:$0xf]
  %v17 = vld [vmem:[%s1 + $0x4] sm:$0xf]
  %v18 = vld [vmem:[%s1 + $0x8] sm:$0xf]
  %v19 = vld [vmem:[%s1 + $0xc] sm:$0xf]
  %v20 = vld [vmem:[%s2] sm:$0x1]
  %v22 = vlaneseq
  %v23 = vshrl.u32 %v22, 7
  %v24 = vsub.s32 0, %v23
  %v25 = vrot.slane %v20, %v24
  %v31 = vunpack.c.l.b16 %v16
  %v32 = vunpack.c.l.b16 %v17
  %v33 = vunpack.c.l.b16 %v18
  %v34 = vunpack.c.l.b16 %v19
  %v35 = vpack.c.b16 %v32, %v31
  %v36 = vpack.c.b16 %v34, %v33
  %vm39 = vcmask 261120
  %v41 = vsel %vm39, %v15, 0
  %43 = vmatprep.subr.bf16.mxu0 0
  %44 = vmatpush1.bf16.msra.mxu0 0
  %45 = vmatprep.subr.bf16.mxu0 0
  %46 = vmatpush1.bf16.msra.mxu0 0
  %47 = vmatprep.subr.bf16.mxu0 0
  %48 = vmatpush1.bf16.msra.mxu0 0
  %49 = vmatprep.subr.bf16.mxu0 0
  %50 = vmatpush1.bf16.msra.mxu0 0
  %51 = vmatprep.subr.bf16.mxu0 0
  %52 = vmatpush1.bf16.msra.mxu0 0
  %53 = vmatprep.subr.bf16.mxu0 0
  %54 = vmatpush1.bf16.msra.mxu0 0
  %55 = vmatprep.subr.bf16.mxu0 0
  %56 = vmatpush1.bf16.msra.mxu0 %v36
  %57 = vmatprep.subr.bf16.mxu0 0
  %58 = vmatpush1.bf16.msra.mxu0 %v35
  %59 = vmatprep.subr.bf16.mxu0 0
  %60 = vmatpush2.bf16.msra.mxu0 0
  %61 = vmatprep.subr.bf16.mxu0 0
  %62 = vmatpush2.bf16.msra.mxu0 0
  %63 = vmatprep.subr.bf16.mxu0 0
  %64 = vmatpush2.bf16.msra.mxu0 0
  %65 = vmatprep.subr.bf16.mxu0 0
  %66 = vmatpush2.bf16.msra.mxu0 0
  %67 = vmatprep.subr.bf16.mxu0 0
  %68 = vmatpush2.bf16.msra.mxu0 0
  %69 = vmatprep.subr.bf16.mxu0 0
  %70 = vmatpush2.bf16.msra.mxu0 0
  %71 = vmatprep.subr.bf16.mxu0 0
  %72 = vmatpush2.bf16.msra.mxu0 0
  %73 = vmatprep.subr.bf16.mxu0 0
  %74 = vmatpush2.bf16.msra.mxu0 0
  %75 = vmatprep.mubr.bf16.mxu0 0
  %76 = vmatmul.mubr.bf16.gmra.mxu0 %v41
  %v77 = vpop.f32.mrf.mxu0
  %v78 = vadd.f32 %v25, %v77
  %v79 = vpop.f32.mrf.mxu0
  %v80 = vpop.f32.mrf.mxu0
  %v81 = vpop.f32.mrf.mxu0
  %82 = vdwg.mxu0
  %v83 = vtanh.pop %v78
  %v84 = vpack.c.bf16 %v83, %v83
  %vm85 = vcmask 253952
  %86 = vst.msk [vmem:[%s3] sm:$0x1] %vm85, %v84
  // Predicated region
  $region14: #{_lambda_.59} parent=0 // pred_check
    _
  $region15: #{_lambda_.59} parent=0 // pred_check_branch
    %88 = sbr.rel (0) target = $region17
  $region16: #{_lambda_.59} parent=0 // pred_region
    _
  $region17: #{_lambda_.59} parent=0 // pred_fallthru
    _
  // Predicated region
  $region18: #{_lambda_.59} parent=0 // pred_check
    _
  $region19: #{_lambda_.59} parent=0 // pred_check_branch
    %90 = sbr.rel (0) target = $region21
  $region20: #{_lambda_.59} parent=0 // pred_region
    _
  $region21: #{_lambda_.59} parent=0 // pred_fallthru
    _

// kernel: _lambda_.60
$region0: #{_lambda_.60}
  #allocation0 [shape = 'u32[]', space=smem, size = 0x4, offset = 0x4, fixed_abs, tag = 'smem constant byte address 0x4 - core index']
  #allocation1 [shape = 'u32[144,128]{1,0:T(1,128)}', space=vmem, size = 0x12000, scoped, tag = 'internal scratch']
  %s0 = inlined_call_operand.vmem [shape: bf16[2,32], index: 0, kind: input, shape index: {}]
  %s1 = inlined_call_operand.vmem [shape: bf16[32,32], index: 1, kind: input, shape index: {}]
  %s2 = inlined_call_operand.vmem [shape: f32[1,32], index: 2, kind: input, shape index: {}]
  %s3 = inlined_call_operand.vmem [shape: f32[1,32], index: 3, kind: input, shape index: {}]
  %s4 = inlined_call_operand.vmem [shape: f32[2,32], index: 4, kind: output, shape index: {}]
  %s5 = sld [smem:[#allocation0]]
  $region26: #{_lambda_.60} parent=0
    _
  %s7 = ssub.s32 1, %s5
  %s8 = scalar_select 0, %s7, %s5
  // Predicated region
  $region2: #{_lambda_.60} parent=0 // pred_check
    _
  $region3: #{_lambda_.60} parent=0 // pred_check_branch
    %10 = sbr.rel (0) target = $region5
  $region4: #{_lambda_.60} parent=0 // pred_region
    _
  $region5: #{_lambda_.60} parent=0 // pred_fallthru
    _
  // Predicated region
  $region6: #{_lambda_.60} parent=0 // pred_check
    _
  $region7: #{_lambda_.60} parent=0 // pred_check_branch
    %12 = sbr.rel (0) target = $region9
  $region8: #{_lambda_.60} parent=0 // pred_region
    _
  $region9: #{_lambda_.60} parent=0 // pred_fallthru
    _
  // Predicated region
  $region10: #{_lambda_.60} parent=0 // pred_check
    _
  $region11: #{_lambda_.60} parent=0 // pred_check_branch
    %14 = sbr.rel (0) target = $region13
  $region12: #{_lambda_.60} parent=0 // pred_region
    _
  $region13: #{_lambda_.60} parent=0 // pred_fallthru
    _
  // Predicated region
  $region14: #{_lambda_.60} parent=0 // pred_check
    _
  $region15: #{_lambda_.60} parent=0 // pred_check_branch
    %16 = sbr.rel (0) target = $region17
  $region16: #{_lambda_.60} parent=0 // pred_region
    _
  $region17: #{_lambda_.60} parent=0 // pred_fallthru
    _
  %v18 = vld [vmem:[%s0] sm:$0x1]
  %v19 = vunpack.c.l.bf16 %v18
  %vm20 = vcmask 254976
  %v21 = vsel %vm20, %v19, 0.0
  %22 = vadd.xlane.f32.xlu0 %v21
  %v23 = vpop.xlane.xlu0 %22
  %v24 = vrcp.pop 32.0
  %v25 = vmul.f32 %v23, %v24
  %v26 = vsub.f32 %v19, %v25
  %v27 = vmul.f32 %v26, %v26
  %v28 = vsel %vm20, %v27, 0.0
  %29 = vadd.xlane.f32.xlu0 %v28
  %v30 = vpop.xlane.xlu0 %29
  %v31 = vmul.f32 %v30, %v24
  %v32 = vadd.f32 %v31, 1e-05
  %v33 = vrsqrt.pop %v32
  %v34 = vmul.f32 %v26, %v33
  %v35 = vld [vmem:[%s2] sm:$0x1]
  %v37 = vlaneseq
  %v38 = vshrl.u32 %v37, 7
  %v39 = vsub.s32 0, %v38
  %v40 = vrot.slane %v35, %v39
  %v42 = vmul.f32 %v34, %v40
  %v43 = vld [vmem:[%s3] sm:$0x1]
  %v45 = vlaneseq
  %v46 = vshrl.u32 %v45, 7
  %v47 = vsub.s32 0, %v46
  %v48 = vrot.slane %v43, %v47
  %v50 = vadd.f32 %v42, %v48
  %v51 = vpack.c.bf16 %v50, %v50
  %v52 = vld [vmem:[%s1] sm:$0xf]
  %v53 = vld [vmem:[%s1 + $0x4] sm:$0xf]
  %v54 = vld [vmem:[%s1 + $0x8] sm:$0xf]
  %v55 = vld [vmem:[%s1 + $0xc] sm:$0xf]
  %v60 = vunpack.c.l.b16 %v52
  %v61 = vunpack.c.l.b16 %v53
  %v62 = vunpack.c.l.b16 %v54
  %v63 = vunpack.c.l.b16 %v55
  %v64 = vpack.c.b16 %v61, %v60
  %v65 = vpack.c.b16 %v63, %v62
  %vm68 = vcmask 261120
  %v70 = vsel %vm68, %v51, 0
  %72 = vmatprep.subr.bf16.mxu0 0
  %73 = vmatpush1.bf16.msra.mxu0 0
  %74 = vmatprep.subr.bf16.mxu0 0
  %75 = vmatpush1.bf16.msra.mxu0 0
  %76 = vmatprep.subr.bf16.mxu0 0
  %77 = vmatpush1.bf16.msra.mxu0 0
  %78 = vmatprep.subr.bf16.mxu0 0
  %79 = vmatpush1.bf16.msra.mxu0 0
  %80 = vmatprep.subr.bf16.mxu0 0
  %81 = vmatpush1.bf16.msra.mxu0 0
  %82 = vmatprep.subr.bf16.mxu0 0
  %83 = vmatpush1.bf16.msra.mxu0 0
  %84 = vmatprep.subr.bf16.mxu0 0
  %85 = vmatpush1.bf16.msra.mxu0 %v65
  %86 = vmatprep.subr.bf16.mxu0 0
  %87 = vmatpush1.bf16.msra.mxu0 %v64
  %88 = vmatprep.subr.bf16.mxu0 0
  %89 = vmatpush2.bf16.msra.mxu0 0
  %90 = vmatprep.subr.bf16.mxu0 0
  %91 = vmatpush2.bf16.msra.mxu0 0
  %92 = vmatprep.subr.bf16.mxu0 0
  %93 = vmatpush2.bf16.msra.mxu0 0
  %94 = vmatprep.subr.bf16.mxu0 0
  %95 = vmatpush2.bf16.msra.mxu0 0
  %96 = vmatprep.subr.bf16.mxu0 0
  %97 = vmatpush2.bf16.msra.mxu0 0
  %98 = vmatprep.subr.bf16.mxu0 0
  %99 = vmatpush2.bf16.msra.mxu0 0
  %100 = vmatprep.subr.bf16.mxu0 0
  %101 = vmatpush2.bf16.msra.mxu0 0
  %102 = vmatprep.subr.bf16.mxu0 0
  %103 = vmatpush2.bf16.msra.mxu0 0
  %104 = vmatprep.mubr.bf16.mxu0 0
  %105 = vmatmul.mubr.bf16.gmra.mxu0 %v70
  %v106 = vpop.f32.mrf.mxu0
  %v107 = vadd.f32 0.0, %v106
  %v108 = vpop.f32.mrf.mxu0
  %v109 = vpop.f32.mrf.mxu0
  %v110 = vpop.f32.mrf.mxu0
  %111 = vdwg.mxu0
  %112 = vst.msk [vmem:[%s4] sm:$0x3] %vm20, %v107
  // Predicated region
  $region18: #{_lambda_.60} parent=0 // pred_check
    _
  $region19: #{_lambda_.60} parent=0 // pred_check_branch
    %114 = sbr.rel (0) target = $region21
  $region20: #{_lambda_.60} parent=0 // pred_region
    _
  $region21: #{_lambda_.60} parent=0 // pred_fallthru
    _
  // Predicated region
  $region22: #{_lambda_.60} parent=0 // pred_check
    _
  $region23: #{_lambda_.60} parent=0 // pred_check_branch
    %116 = sbr.rel (0) target = $region25
  $region24: #{_lambda_.60} parent=0 // pred_region
    _
  $region25: #{_lambda_.60} parent=0 // pred_fallthru
    _

// kernel: _lambda_.61
$region0: #{_lambda_.61}
  #allocation0 [shape = 'u32[]', space=smem, size = 0x4, offset = 0x4, fixed_abs, tag = 'smem constant byte address 0x4 - core index']
  #allocation1 [shape = 'u32[144,128]{1,0:T(1,128)}', space=vmem, size = 0x12000, scoped, tag = 'internal scratch']
  #allocation2 [shape = 'f32[1,1]{1,0:T(1,128)S(6)}', space=smem, size = 0x200, scoped, tag = 'scoped memory for _lambda_.61']
  %s0 = inlined_call_operand.vmem [shape: f32[2,32], index: 0, kind: input, shape index: {}]
  %s1 = inlined_call_operand.vmem [shape: f32[2,32], index: 1, kind: input, shape index: {}]
  %s2 = inlined_call_operand.<no memory space> [shape: f32[1,1], index: 2, kind: input, shape index: {}]
  %s3 = inlined_call_operand.vmem [shape: f32[2,2], index: 3, kind: output, shape index: {}]
  %s4 = sld [smem:[#allocation0]]
  $region22: #{_lambda_.61} parent=0
    _
  %s6 = ssub.s32 1, %s4
  %s7 = scalar_select 0, %s6, %s4
  %8 = sst [smem:[#allocation2]] %s2
  // Predicated region
  $region2: #{_lambda_.61} parent=0 // pred_check
    _
  $region3: #{_lambda_.61} parent=0 // pred_check_branch
    %10 = sbr.rel (0) target = $region5
  $region4: #{_lambda_.61} parent=0 // pred_region
    _
  $region5: #{_lambda_.61} parent=0 // pred_fallthru
    _
  // Predicated region
  $region6: #{_lambda_.61} parent=0 // pred_check
    _
  $region7: #{_lambda_.61} parent=0 // pred_check_branch
    %12 = sbr.rel (0) target = $region9
  $region8: #{_lambda_.61} parent=0 // pred_region
    _
  $region9: #{_lambda_.61} parent=0 // pred_fallthru
    _
  // Predicated region
  $region10: #{_lambda_.61} parent=0 // pred_check
    _
  $region11: #{_lambda_.61} parent=0 // pred_check_branch
    %14 = sbr.rel (0) target = $region13
  $region12: #{_lambda_.61} parent=0 // pred_region
    _
  $region13: #{_lambda_.61} parent=0 // pred_fallthru
    _
  %v15 = vld [vmem:[%s0] sm:$0x3]
  %v16 = vld [vmem:[%s1] sm:$0x3]
  %v17 = vmul.f32 %v15, %v15
  %vm18 = vcmask 254976
  %v19 = vsel %vm18, %v17, 0.0
  %20 = vadd.xlane.f32.xlu0 %v19
  %v21 = vpop.xlane.xlu0 %20
  %v22 = vrsqrt.pop %v21
  %v23 = vmul.f32 %v15, %v22
  %v24 = vmul.f32 %v16, %v16
  %v25 = vsel %vm18, %v24, 0.0
  %26 = vadd.xlane.f32.xlu0 %v25
  %v27 = vpop.xlane.xlu0 %26
  %v28 = vrsqrt.pop %v27
  %v29 = vmul.f32 %v16, %v28
  %s30 = sld [smem:[#allocation2]]
  %v31 = vstv %s30
  %v32 = vmul.f32 %v31, 1.442695
  %v33 = vpow.pop %v32
  %s34 = vtos %v33
  %vm35 = vcmask 261120
  %v37 = vsel %vm35, %v23, 0
  %v40 = vsel %vm35, %v29, 0
  %42 = vmatprep.subr.mxu0 0.0
  %43 = vmatpush1.xpose.msra.mxu0 0.0
  %44 = vmatprep.subr.mxu0 0.0
  %45 = vmatpush1.xpose.msra.mxu0 0.0
  %46 = vmatprep.subr.mxu0 0.0
  %47 = vmatpush1.xpose.msra.mxu0 0.0
  %48 = vmatprep.subr.mxu0 0.0
  %49 = vmatpush1.xpose.msra.mxu0 0.0
  %50 = vmatprep.subr.mxu0 0.0
  %51 = vmatpush1.xpose.msra.mxu0 0.0
  %52 = vmatprep.subr.mxu0 0.0
  %53 = vmatpush1.xpose.msra.mxu0 0.0
  %54 = vmatprep.subr.mxu0 0.0
  %55 = vmatpush1.xpose.msra.mxu0 0.0
  %56 = vmatprep.subr.mxu0 0.0
  %57 = vmatpush1.xpose.msra.mxu0 0.0
  %58 = vmatprep.subr.mxu0 0.0
  %59 = vmatpush1.xpose.msra.mxu0 0.0
  %60 = vmatprep.subr.mxu0 0.0
  %61 = vmatpush1.xpose.msra.mxu0 0.0
  %62 = vmatprep.subr.mxu0 0.0
  %63 = vmatpush1.xpose.msra.mxu0 0.0
  %64 = vmatprep.subr.mxu0 0.0
  %65 = vmatpush1.xpose.msra.mxu0 0.0
  %66 = vmatprep.subr.mxu0 0.0
  %67 = vmatpush1.xpose.msra.mxu0 0.0
  %68 = vmatprep.subr.mxu0 0.0
  %69 = vmatpush1.xpose.msra.mxu0 0.0
  %70 = vmatprep.subr.mxu0 0.0
  %71 = vmatpush1.xpose.msra.mxu0 0.0
  %72 = vmatprep.subr.mxu0 0.0
  %73 = vmatpush1.xpose.msra.mxu0 %v40
  %74 = vmatprep.subr.mxu0 0.0
  %75 = vmatpush2.xpose.msra.mxu0 0.0
  %76 = vmatprep.subr.mxu0 0.0
  %77 = vmatpush2.xpose.msra.mxu0 0.0
  %78 = vmatprep.subr.mxu0 0.0
  %79 = vmatpush2.xpose.msra.mxu0 0.0
  %80 = vmatprep.subr.mxu0 0.0
  %81 = vmatpush2.xpose.msra.mxu0 0.0
  %82 = vmatprep.subr.mxu0 0.0
  %83 = vmatpush2.xpose.msra.mxu0 0.0
  %84 = vmatprep.subr.mxu0 0.0
  %85 = vmatpush2.xpose.msra.mxu0 0.0
  %86 = vmatprep.subr.mxu0 0.0
  %87 = vmatpush2.xpose.msra.mxu0 0.0
  %88 = vmatprep.subr.mxu0 0.0
  %89 = vmatpush2.xpose.msra.mxu0 0.0
  %90 = vmatprep.subr.mxu0 0.0
  %91 = vmatpush2.xpose.msra.mxu0 0.0
  %92 = vmatprep.subr.mxu0 0.0
  %93 = vmatpush2.xpose.msra.mxu0 0.0
  %94 = vmatprep.subr.mxu0 0.0
  %95 = vmatpush2.xpose.msra.mxu0 0.0
  %96 = vmatprep.subr.mxu0 0.0
  %97 = vmatpush2.xpose.msra.mxu0 0.0
  %98 = vmatprep.subr.mxu0 0.0
  %99 = vmatpush2.xpose.msra.mxu0 0.0
  %100 = vmatprep.subr.mxu0 0.0
  %101 = vmatpush2.xpose.msra.mxu0 0.0
  %102 = vmatprep.subr.mxu0 0.0
  %103 = vmatpush2.xpose.msra.mxu0 0.0
  %104 = vmatprep.subr.mxu0 0.0
  %105 = vmatpush2.xpose.msra.mxu0 0.0
  %106 = vmatprep.mubr.f32.mxu0 0.0
  %107 = vmatmul.mubr.f32.gmra.mxu0 %v37
  %v108 = vpop.f32.mrf.mxu0
  %v109 = vadd.f32 0.0, %v108
  %v110 = vpop.f32.mrf.mxu0
  %111 = vdwg.mxu0
  %v112 = vstv %s34
  %v113 = vmul.f32 %v112, %v109
  %vm114 = vcmask 9216
  %115 = vst.msk [vmem:[%s3] sm:$0x3] %vm114, %v113
  // Predicated region
  $region14: #{_lambda_.61} parent=0 // pred_check
    _
  $region15: #{_lambda_.61} parent=0 // pred_check_branch
    %117 = sbr.rel (0) target = $region17
  $region16: #{_lambda_.61} parent=0 // pred_region
    _
  $region17: #{_lambda_.61} parent=0 // pred_fallthru
    _
  // Predicated region
  $region18: #{_lambda_.61} parent=0 // pred_check
    _
  $region19: #{_lambda_.61} parent=0 // pred_check_branch
    %119 = sbr.rel (0) target = $region21
  $region20: #{_lambda_.61} parent=0 // pred_region
    _
  $region21: #{_lambda_.61} parent=0 // pred_fallthru
    _

</llo_original>
